<compile_context>
chip_gen: v6e
topology: v6e:2x2x1
jax: 0.10.0
libtpu: 0.0.40
codegen_flags: <defaults>
</compile_context>

<pallas_src>
import functools

import jax
import jax.numpy as jnp
from jax.experimental import pallas as pl
from jax.experimental.pallas import tpu as pltpu


# ---------------------------------------------------------------------------
# Helpers
# ---------------------------------------------------------------------------

_TM = 512        # row-tile cap when M must be tiled
_TN = 256        # output-column tile cap when N must be tiled
_TK = 512        # contraction tile cap when K must be tiled
_FULL_N = 512    # keep full-N blocks up to this size
_FULL_K = 2048   # keep full-K blocks up to this size
_VMEM_LIMIT = 32 * 1024 * 1024   # explicit scoped-VMEM budget, safe on all gens


def _round_up(x, m):
    return (x + m - 1) // m * m


def _pick_tile(dim, cap, align):
    """Return (tile, padded_dim).  Full block if it fits; otherwise prefer an
    `align`-aligned divisor of dim (no padding); otherwise pad to the cap."""
    if dim <= cap:
        return dim, dim
    t = (cap // align) * align
    while t >= align:
        if dim % t == 0:
            return t, dim
        t -= align
    return cap, _round_up(dim, cap)


def _gelu_exact(x):
    # Exact (erf-based) GELU matching torch.nn.GELU.  erf via the Abramowitz &
    # Stegun 7.1.26 polynomial (|abs err| < 1.5e-7, far below bf16 resolution);
    # only exp/abs/where, exp runs on the EUP slot (free under the MXU).
    z = x * 0.7071067811865476
    az = jnp.abs(z)
    t = 1.0 / (1.0 + 0.3275911 * az)
    poly = ((((1.061405429 * t - 1.453152027) * t + 1.421413741) * t
             - 0.284496736) * t + 0.254829592) * t
    erf_abs = 1.0 - poly * jnp.exp(-az * az)
    erf_z = jnp.where(z >= 0.0, erf_abs, -erf_abs)
    return 0.5 * x * (1.0 + erf_z)


# ---------------------------------------------------------------------------
# Fused (LayerNorm?) -> matmul -> (+bias, GELU?, +residual?) Pallas kernel
# ---------------------------------------------------------------------------

def _fused_linear_kernel(*refs, ln, ln_eps, has_residual, activation, multi_k):
    x_ref, w_ref, b_ref = refs[0], refs[1], refs[2]
    idx = 3
    g_ref = beta_ref = r_ref = None
    if ln:
        g_ref, beta_ref = refs[idx], refs[idx + 1]
        idx += 2
    if has_residual:
        r_ref = refs[idx]
        idx += 1
    o_ref = refs[idx]
    idx += 1

    if ln:
        # LN prologue cached per row-tile: computed only at j == 0 and reused
        # for all output-column tiles (j axis is "arbitrary", so one core
        # walks every j for a given i).
        xn_ref = refs[idx]
        idx += 1

        @pl.when(pl.program_id(1) == 0)
        def _ln():
            xf = x_ref[...].astype(jnp.float32)
            mu = jnp.mean(xf, axis=-1, keepdims=True)
            xc = xf - mu
            var = jnp.mean(xc * xc, axis=-1, keepdims=True)
            xn = (xc * jax.lax.rsqrt(var + ln_eps)) * g_ref[...] + beta_ref[...]
            xn_ref[...] = xn.astype(jnp.bfloat16)

        x_in = xn_ref[...]
    else:
        x_in = x_ref[...]          # already bf16; feed the MXU directly

    def _epilogue(acc):
        y = acc + b_ref[...]
        if activation == "gelu":
            y = _gelu_exact(y)
        if has_residual:
            y = y + r_ref[...].astype(jnp.float32)
        o_ref[...] = y.astype(o_ref.dtype)

    if multi_k:
        acc_ref = refs[idx]
        k = pl.program_id(2)

        @pl.when(k == 0)
        def _init():
            acc_ref[...] = jnp.zeros_like(acc_ref)

        acc_ref[...] += jnp.dot(x_in, w_ref[...],
                                preferred_element_type=jnp.float32)

        @pl.when(k == pl.num_programs(2) - 1)
        def _fin():
            _epilogue(acc_ref[...])
    else:
        # Single K step: no accumulator scratch, write the epilogue directly.
        _epilogue(jnp.dot(x_in, w_ref[...],
                          preferred_element_type=jnp.float32))


def fused_linear(x, w, b, *, gamma=None, beta=None, residual=None,
                 activation=None, out_dtype=jnp.bfloat16, ln_eps=1e-6):
    """out = [residual +] act( LN?(x) @ w + b ), in a single pallas_call.

    x: (..., K)   w: (K, N)   b: (N,)   gamma/beta: (K,) enable the fused LN
    prologue.  residual: (..., N) added in the epilogue.  MXU operands are
    bf16; accumulation, LN statistics and the epilogue math are f32.
    """
    lead = x.shape[:-1]
    K = x.shape[-1]
    N = w.shape[-1]
    M = 1
    for s in lead:
        M *= s
    x2 = x.reshape(M, K).astype(jnp.bfloat16)
    ln = gamma is not None

    # --- tile selection: full blocks whenever they fit; aligned divisors
    # otherwise (no padding); pad only as a last resort.
    tm, Mp = _pick_tile(M, _TM, 8)
    if ln or K <= _FULL_K:
        tk, Kp = K, K                      # LN prologue needs the whole row
    else:
        tk, Kp = _pick_tile(K, _TK, 128)
    if N <= _FULL_N:
        tn, Np = N, N
    else:
        tn, Np = _pick_tile(N, _TN, 128)
    multi_k = Kp > tk

    if (Mp, Kp) != (M, K):
        x2 = jnp.pad(x2, ((0, Mp - M), (0, Kp - K)))
    wp = w.astype(jnp.bfloat16)
    if (Kp, Np) != (K, N):
        wp = jnp.pad(wp, ((0, Kp - K), (0, Np - N)))
    bp = b.reshape(1, N).astype(jnp.float32)
    if Np != N:
        bp = jnp.pad(bp, ((0, 0), (0, Np - N)))

    if multi_k:
        grid = (Mp // tm, Np // tn, Kp // tk)
        x_map = lambda i, j, k: (i, k)
        w_map = lambda i, j, k: (k, j)
        b_map = lambda i, j, k: (0, j)
        r_map = lambda i, j, k: (i, j)
        o_map = lambda i, j, k: (i, j)
        g_map = lambda i, j, k: (0, 0)
        sem = ("parallel", "parallel", "arbitrary")
    else:
        grid = (Mp // tm, Np // tn)
        x_map = lambda i, j: (i, 0)
        w_map = lambda i, j: (0, j)
        b_map = lambda i, j: (0, j)
        r_map = lambda i, j: (i, j)
        o_map = lambda i, j: (i, j)
        g_map = lambda i, j: (0, 0)
        # With the LN cache the j axis must stay on one core; otherwise both
        # output axes can be megacore-sharded.
        sem = ("parallel", "arbitrary") if ln else ("parallel", "parallel")

    in_specs = [
        pl.BlockSpec((tm, tk), x_map),
        pl.BlockSpec((tk, tn), w_map),
        pl.BlockSpec((1, tn), b_map),
    ]
    inputs = [x2, wp, bp]

    if ln:
        in_specs += [pl.BlockSpec((1, K), g_map), pl.BlockSpec((1, K), g_map)]
        inputs += [gamma.reshape(1, K).astype(jnp.float32),
                   beta.reshape(1, K).astype(jnp.float32)]

    if residual is not None:
        r2 = residual.reshape(M, N).astype(jnp.bfloat16)
        if (Mp, Np) != (M, N):
            r2 = jnp.pad(r2, ((0, Mp - M), (0, Np - N)))
        in_specs.append(pl.BlockSpec((tm, tn), r_map))
        inputs.append(r2)

    scratch = []
    if ln:
        scratch.append(pltpu.VMEM((tm, K), jnp.bfloat16))   # LN(x) row cache
    if multi_k:
        scratch.append(pltpu.VMEM((tm, tn), jnp.float32))   # f32 accumulator

    out = pl.pallas_call(
        functools.partial(_fused_linear_kernel, ln=ln, ln_eps=ln_eps,
                          has_residual=residual is not None,
                          activation=activation, multi_k=multi_k),
        out_shape=jax.ShapeDtypeStruct((Mp, Np), out_dtype),
        grid_spec=pltpu.PrefetchScalarGridSpec(
            num_scalar_prefetch=0,
            grid=grid,
            in_specs=in_specs,
            out_specs=pl.BlockSpec((tm, tn), o_map),
            scratch_shapes=scratch,
        ),
        compiler_params=pltpu.CompilerParams(
            dimension_semantics=sem, vmem_limit_bytes=_VMEM_LIMIT),
    )(*inputs)

    if (Mp, Np) != (M, N):
        out = out[:M, :N]
    return out.reshape(*lead, N)


# ---------------------------------------------------------------------------
# Attention kernel: one batch element per grid step, all heads inside.
# ---------------------------------------------------------------------------

def _attn_kernel(qkv_ref, o_ref, *, num_heads, scale):
    # qkv columns follow the timm ordering: [q(all heads), k(all heads),
    # v(all heads)], each head contiguous.  q/k/v stay bf16 for the MXU; the
    # softmax statistics are f32; probabilities are cast back to bf16 before
    # the PV matmul.  Each head's output is stored straight into its column
    # slice, so only one head is live at a time (no concatenate relayout).
    D3 = qkv_ref.shape[2]
    D = D3 // 3
    Dh = D // num_heads
    for h in range(num_heads):                   # static unroll over heads
        lo = h * Dh
        q = qkv_ref[0, :, lo:lo + Dh]
        k = qkv_ref[0, :, D + lo:D + lo + Dh]
        v = qkv_ref[0, :, 2 * D + lo:2 * D + lo + Dh]
        # q @ k^T as an NT dot_general (bf16 operands, f32 accumulation).
        s = jax.lax.dot_general(q, k, (((1,), (1,)), ((), ())),
                                preferred_element_type=jnp.float32)
        s = s * scale
        s = s - jnp.max(s, axis=-1, keepdims=True)
        p = jnp.exp(s)
        p = p * pl.reciprocal(jnp.sum(p, axis=-1, keepdims=True), approx=True)
        out_h = jax.lax.dot_general(p.astype(qkv_ref.dtype), v,
                                    (((1,), (0,)), ((), ())),
                                    preferred_element_type=jnp.float32)
        o_ref[0, :, lo:lo + Dh] = out_h.astype(o_ref.dtype)


def attention(qkv, num_heads, out_dtype=jnp.bfloat16):
    """qkv: (B, N, 3*D) -> (B, N, D).  Lane-dense (1, N, 3*D) blocks; heads are
    split inside the kernel (ref slices) instead of via host-side transposes."""
    # TODO(synk): for long sequences add a q-tile / kv-tile (flash-style) grid
    # axis so the per-batch block pipelines and both v7x TensorCores stay busy.
    B, N, D3 = qkv.shape
    D = D3 // 3
    scale = (D // num_heads) ** -0.5
    return pl.pallas_call(
        functools.partial(_attn_kernel, num_heads=num_heads, scale=scale),
        out_shape=jax.ShapeDtypeStruct((B, N, D), out_dtype),
        grid=(B,),
        in_specs=[pl.BlockSpec((1, N, D3), lambda b: (b, 0, 0))],
        out_specs=pl.BlockSpec((1, N, D), lambda b: (b, 0, 0)),
        compiler_params=pltpu.CompilerParams(
            dimension_semantics=("parallel",), vmem_limit_bytes=_VMEM_LIMIT),
    )(qkv)


# ---------------------------------------------------------------------------
# ViT block (timm-style pre-norm), fully fused into 4 pallas_calls + attention
# ---------------------------------------------------------------------------

def vit_block(x, p, num_heads):
    # Attention branch: LN fused into the QKV matmul; residual fused into proj.
    qkv = fused_linear(x, p["qkv_w"], p["qkv_b"],
                       gamma=p["ln1_g"], beta=p["ln1_b"])
    attn = attention(qkv, num_heads)
    x = fused_linear(attn, p["proj_w"], p["proj_b"], residual=x)
    # MLP branch: LN + fc1 + exact GELU in one kernel; fc2 + residual in one.
    h = fused_linear(x, p["fc1_w"], p["fc1_b"],
                     gamma=p["ln2_g"], beta=p["ln2_b"], activation="gelu")
    return fused_linear(h, p["fc2_w"], p["fc2_b"], residual=x)


# ---------------------------------------------------------------------------
# MAE pieces
# ---------------------------------------------------------------------------

def pos_encoding(n, d, k=10000.0):
    """Sine-cosine positional embedding matching MaskedAutoencoder.pos_encoding."""
    pos = jnp.arange(n, dtype=jnp.float32)[:, None]
    col = jnp.arange(d, dtype=jnp.float32)[None, :]
    angle = pos / jnp.power(k, col / float(d // 2))
    even = (jnp.arange(d) % 2 == 0)[None, :]
    return jnp.where(even, jnp.sin(angle), jnp.cos(angle))


def init_block(key, D, mlp_ratio=4):
    ks = jax.random.split(key, 4)
    H = int(D * mlp_ratio)
    wdt = jnp.bfloat16   # matmul operands in bf16 (f32 accumulation in-kernel)
    return dict(
        ln1_g=jnp.ones((D,), jnp.float32), ln1_b=jnp.zeros((D,), jnp.float32),
        qkv_w=(0.02 * jax.random.normal(ks[0], (D, 3 * D), jnp.float32)).astype(wdt),
        qkv_b=jnp.zeros((3 * D,), jnp.float32),
        proj_w=(0.02 * jax.random.normal(ks[1], (D, D), jnp.float32)).astype(wdt),
        proj_b=jnp.zeros((D,), jnp.float32),
        ln2_g=jnp.ones((D,), jnp.float32), ln2_b=jnp.zeros((D,), jnp.float32),
        fc1_w=(0.02 * jax.random.normal(ks[2], (D, H), jnp.float32)).astype(wdt),
        fc1_b=jnp.zeros((H,), jnp.float32),
        fc2_w=(0.02 * jax.random.normal(ks[3], (H, D), jnp.float32)).astype(wdt),
        fc2_b=jnp.zeros((D,), jnp.float32),
    )


def init_params(key, cfg):
    ew, dw, p, n = cfg["enc_width"], cfg["dec_width"], cfg["patch_size"], cfg["n"]
    patch_dim = 3 * p * p
    nk = 4 + cfg["enc_depth"] + cfg["dec_depth"]
    ks = jax.random.split(key, nk)
    params = {}
    # embed_conv weight (ew, 3, p, p) flattened -> matmul weight (3*p*p, ew)
    w_conv = 0.02 * jax.random.normal(ks[0], (ew, 3, p, p), jnp.float32)
    params["embed_w"] = w_conv.reshape(ew, patch_dim).T.astype(jnp.bfloat16)
    params["embed_b"] = jnp.zeros((ew,), jnp.float32)
    params["pos_encoder"] = pos_encoding(n, ew)
    params["pos_decoder"] = pos_encoding(n, dw)
    params["mask_token"] = jnp.zeros((1, 1, dw), jnp.float32)   # torch init: zeros
    params["enc_blocks"] = [init_block(ks[1 + i], ew) for i in range(cfg["enc_depth"])]
    params["enc_norm_g"] = jnp.ones((ew,), jnp.float32)
    params["enc_norm_b"] = jnp.zeros((ew,), jnp.float32)
    off = 1 + cfg["enc_depth"]
    params["proj_w"] = (0.02 * jax.random.normal(ks[off], (ew, dw), jnp.float32)).astype(jnp.bfloat16)
    params["proj_b"] = jnp.zeros((dw,), jnp.float32)
    params["dec_blocks"] = [init_block(ks[off + 1 + i], dw) for i in range(cfg["dec_depth"])]
    off2 = off + 1 + cfg["dec_depth"]
    params["pixel_w"] = (0.02 * jax.random.normal(ks[off2], (dw, patch_dim), jnp.float32)).astype(jnp.bfloat16)
    params["pixel_b"] = jnp.zeros((patch_dim,), jnp.float32)
    return params


def mae_forward(params, x_img, mask_key, cfg):
    """x_img: (B, 3, H, W) NCHW. Returns (B, n, 3*p*p) reconstructed patch pixels."""
    p = cfg["patch_size"]
    n = cfg["n"]
    B, C, H, W = x_img.shape

    # ---- patch embed: Conv2d(k=s=p) == patchify + matmul; the pos-encoding
    # add is fused as the residual epilogue of the embedding matmul.  Both the
    # patch tokens and the pos-encoding residual go in as bf16 (f32 accum).
    toks = x_img.reshape(B, C, H // p, p, W // p, p)
    toks = toks.transpose(0, 2, 4, 1, 3, 5).reshape(B, n, C * p * p)
    toks = toks.astype(jnp.bfloat16)
    pos_e = jnp.broadcast_to(
        params["pos_encoder"].astype(jnp.bfloat16)[None], (B, n, cfg["enc_width"]))
    x = fused_linear(toks, params["embed_w"], params["embed_b"], residual=pos_e)

    # ---- random masking (generate_mask_index / mask_input) ----
    # TODO(synk): freeze_mask stateful caching of self.idx is not represented;
    # a fresh mask is drawn per call (equivalent to freeze_mask=False).
    # TODO(synk): visible-token gather / unshuffle stay as XLA gathers instead
    # of a PrefetchScalarGridSpec + pl.Element row-gather fused into the
    # adjacent kernels.
    idx = jnp.argsort(jax.random.uniform(mask_key, (B, n)), axis=1)
    keep = int(cfg["keep"] * n)
    vis_idx = idx[:, :keep]
    x = jnp.take_along_axis(
        x, jnp.broadcast_to(vis_idx[:, :, None], (B, keep, x.shape[-1])), axis=1)

    # ---- encoder (ViTBlocks; end-LayerNorm fused into the enc->dec proj) ----
    for blk in params["enc_blocks"]:
        x = vit_block(x, blk, cfg["enc_heads"])
    x = fused_linear(x, params["proj_w"], params["proj_b"],
                     gamma=params["enc_norm_g"], beta=params["enc_norm_b"])

    # ---- append mask tokens, unshuffle, add decoder pos ----
    dw = cfg["dec_width"]
    mask_toks = jnp.broadcast_to(params["mask_token"], (B, n - keep, dw)).astype(x.dtype)
    x = jnp.concatenate([x, mask_toks], axis=1)                 # (B, n, dec_width)
    inv = jnp.argsort(idx, axis=1)
    x = jnp.take_along_axis(
        x, jnp.broadcast_to(inv[:, :, None], (B, n, dw)), axis=1)
    x = (x.astype(jnp.float32) + params["pos_decoder"][None]).astype(jnp.bfloat16)

    # ---- decoder (ViTBlocks, no end norm) + pixel projection ----
    for blk in params["dec_blocks"]:
        x = vit_block(x, blk, cfg["dec_heads"])
    x = fused_linear(x, params["pixel_w"], params["pixel_b"],
                     out_dtype=jnp.float32)                     # (B, n, 3*p*p)
    return x


# ---------------------------------------------------------------------------
# Demo
# ---------------------------------------------------------------------------

if __name__ == "__main__":
    # NOTE: widths here (32 / 8) are far below 128 lanes, so at this demo
    # config the kernels are launch-overhead / masked-store bound by design;
    # at real ViT widths (>=384) every block's last dim is lane-aligned.
    cfg = dict(
        image_size=(16, 16),
        patch_size=4,
        keep=0.25,
        enc_width=32,
        dec_width=int(0.25 * 32),   # dec_width=0.25 (fraction of enc_width)
        enc_depth=2,
        dec_depth=1,
        enc_heads=4,                # timm default is 12; scaled down for enc_width=32
        dec_heads=2,
    )
    cfg["n"] = (cfg["image_size"][0] // cfg["patch_size"]) * (cfg["image_size"][1] // cfg["patch_size"])

    key = jax.random.PRNGKey(0)
    k_data, k_param, k_mask = jax.random.split(key, 3)

    params = init_params(k_param, cfg)
    x = jax.random.normal(
        k_data, (2, 3, cfg["image_size"][0], cfg["image_size"][1]), jnp.float32)

    fwd = jax.jit(functools.partial(mae_forward, cfg=cfg))
    out = jax.block_until_ready(fwd(params, x, k_mask))

    expected = (2, cfg["n"], 3 * cfg["patch_size"] ** 2)
    assert out.shape == expected, (out.shape, expected)
    assert bool(jnp.all(jnp.isfinite(out)))
    print("KERNEL_OK")
</pallas_src>

<mosaic_0001>
module attributes {stable_mosaic.version = 11 : i64} {
  func.func @_fused_linear_kernel(%arg0: i32, %arg1: i32, %arg2: memref<32x48xbf16, #tpu.memory_space<vmem>>, %arg3: memref<48x32xbf16, #tpu.memory_space<vmem>>, %arg4: memref<1x32xf32, #tpu.memory_space<vmem>>, %arg5: memref<32x32xbf16, #tpu.memory_space<vmem>>, %arg6: memref<32x32xbf16, #tpu.memory_space<vmem>>) attributes {dimension_semantics = [#tpu.dimension_semantics<parallel>, #tpu.dimension_semantics<parallel>], iteration_bounds = array<i64: 1, 1>, scalar_prefetch = 0 : i64, scratch_operands = 0 : i64, tpu.core_type = #tpu.core_type<tc>, window_params = [{transform_indices = @transform_0, window_bounds = array<i64: 32, 48>}, {transform_indices = @transform_1, window_bounds = array<i64: 48, 32>}, {transform_indices = @transform_2, window_bounds = array<i64: 1, 32>}, {transform_indices = @transform_3, window_bounds = array<i64: 32, 32>}, {transform_indices = @transform_4, window_bounds = array<i64: 32, 32>}]} {
    %c0 = arith.constant 0 : index
    %c0_0 = arith.constant 0 : index
    %0 = vector.load %arg2[%c0, %c0_0] : memref<32x48xbf16, #tpu.memory_space<vmem>>, vector<32x48xbf16>
    %c0_1 = arith.constant 0 : index
    %c0_2 = arith.constant 0 : index
    %1 = vector.load %arg3[%c0_1, %c0_2] : memref<48x32xbf16, #tpu.memory_space<vmem>>, vector<48x32xbf16>
    %cst = arith.constant dense<0.000000e+00> : vector<32x32xf32>
    %2 = tpu.matmul %0, %1, %cst {dimension_numbers = #tpu.dot_dimension_numbers<[1], [0], [0], [1], [0, 0, 1, 1], [], []>} : vector<32x48xbf16>, vector<48x32xbf16>, vector<32x32xf32> -> vector<32x32xf32>
    %c0_3 = arith.constant 0 : index
    %c0_4 = arith.constant 0 : index
    %3 = vector.load %arg4[%c0_3, %c0_4] : memref<1x32xf32, #tpu.memory_space<vmem>>, vector<1x32xf32>
    %4 = vector.broadcast %3 : vector<1x32xf32> to vector<32x32xf32>
    %5 = arith.addf %2, %4 : vector<32x32xf32>
    %c0_5 = arith.constant 0 : index
    %c0_6 = arith.constant 0 : index
    %6 = vector.load %arg5[%c0_5, %c0_6] : memref<32x32xbf16, #tpu.memory_space<vmem>>, vector<32x32xbf16>
    %7 = arith.extf %6 : vector<32x32xbf16> to vector<32x32xf32>
    %8 = arith.addf %5, %7 : vector<32x32xf32>
    %9 = arith.truncf %8 : vector<32x32xf32> to vector<32x32xbf16>
    %c0_7 = arith.constant 0 : index
    %c0_8 = arith.constant 0 : index
    %10 = vector.load %arg6[%c0_7, %c0_8] : memref<32x32xbf16, #tpu.memory_space<vmem>>, vector<32x32xbf16>
    tpu.vector_store %arg6[%c0_7, %c0_8], %9 {strides = array<i32>} : memref<32x32xbf16, #tpu.memory_space<vmem>>, vector<32x32xbf16>,
    return
  }
  func.func @transform_0(%arg0: i32, %arg1: i32) -> (i32, i32) {
    %c0_i32 = arith.constant 0 : i32
    %c0_i32_0 = arith.constant 0 : i32
    return %arg0, %c0_i32 : i32, i32
  }
  func.func @transform_1(%arg0: i32, %arg1: i32) -> (i32, i32) {
    %c0_i32 = arith.constant 0 : i32
    %c0_i32_0 = arith.constant 0 : i32
    return %c0_i32, %arg1 : i32, i32
  }
  func.func @transform_2(%arg0: i32, %arg1: i32) -> (i32, i32) {
    %c0_i32 = arith.constant 0 : i32
    %c0_i32_0 = arith.constant 0 : i32
    return %c0_i32, %arg1 : i32, i32
  }
  func.func @transform_3(%arg0: i32, %arg1: i32) -> (i32, i32) {
    %c0_i32 = arith.constant 0 : i32
    return %arg0, %arg1 : i32, i32
  }
  func.func @transform_4(%arg0: i32, %arg1: i32) -> (i32, i32) {
    %c0_i32 = arith.constant 0 : i32
    return %arg0, %arg1 : i32, i32
  }
}

module attributes {stable_mosaic.version = 11 : i64} {
  func.func @_fused_linear_kernel(%arg0: i32, %arg1: i32, %arg2: memref<8x32xbf16, #tpu.memory_space<vmem>>, %arg3: memref<32x96xbf16, #tpu.memory_space<vmem>>, %arg4: memref<1x96xf32, #tpu.memory_space<vmem>>, %arg5: memref<1x32xf32, #tpu.memory_space<vmem>>, %arg6: memref<1x32xf32, #tpu.memory_space<vmem>>, %arg7: memref<8x96xbf16, #tpu.memory_space<vmem>>, %arg8: memref<8x32xbf16, #tpu.memory_space<vmem>>) attributes {dimension_semantics = [#tpu.dimension_semantics<parallel>, #tpu.dimension_semantics<arbitrary>], iteration_bounds = array<i64: 1, 1>, scalar_prefetch = 0 : i64, scratch_operands = 1 : i64, tpu.core_type = #tpu.core_type<tc>, window_params = [{transform_indices = @transform_0, window_bounds = array<i64: 8, 32>}, {transform_indices = @transform_1, window_bounds = array<i64: 32, 96>}, {transform_indices = @transform_2, window_bounds = array<i64: 1, 96>}, {pipeline_mode = #tpu.pipeline_mode<synchronous>, transform_indices = @transform_3, window_bounds = array<i64: 1, 32>}, {pipeline_mode = #tpu.pipeline_mode<synchronous>, transform_indices = @transform_4, window_bounds = array<i64: 1, 32>}, {transform_indices = @transform_5, window_bounds = array<i64: 8, 96>}]} {
    %c0_i32 = arith.constant 0 : i32
    %0 = arith.cmpi eq, %arg1, %c0_i32 : i32
    %1 = arith.extui %0 : i1 to i32
    %c0_i32_0 = arith.constant 0 : i32
    %2 = arith.cmpi ne, %1, %c0_i32_0 : i32
    scf.if %2 {
      %c0_8 = arith.constant 0 : index
      %c0_9 = arith.constant 0 : index
      %11 = vector.load %arg2[%c0_8, %c0_9] : memref<8x32xbf16, #tpu.memory_space<vmem>>, vector<8x32xbf16>
      %12 = arith.extf %11 : vector<8x32xbf16> to vector<8x32xf32>
      %cst_10 = arith.constant dense<0.000000e+00> : vector<8xf32>
      %13 = vector.multi_reduction <add>, %12, %cst_10 [1] : vector<8x32xf32> to vector<8xf32>
      %14 = vector.shape_cast %13 : vector<8xf32> to vector<8x1xf32>
      %cst_11 = arith.constant 3.200000e+01 : f32
      %15 = vector.broadcast %cst_11 : f32 to vector<8x1xf32>
      %16 = arith.divf %14, %15 : vector<8x1xf32>
      %17 = vector.broadcast %16 : vector<8x1xf32> to vector<8x32xf32>
      %18 = arith.subf %12, %17 : vector<8x32xf32>
      %19 = arith.mulf %18, %18 : vector<8x32xf32>
      %cst_12 = arith.constant dense<0.000000e+00> : vector<8xf32>
      %20 = vector.multi_reduction <add>, %19, %cst_12 [1] : vector<8x32xf32> to vector<8xf32>
      %21 = vector.shape_cast %20 : vector<8xf32> to vector<8x1xf32>
      %cst_13 = arith.constant 3.200000e+01 : f32
      %22 = vector.broadcast %cst_13 : f32 to vector<8x1xf32>
      %23 = arith.divf %21, %22 : vector<8x1xf32>
      %cst_14 = arith.constant 9.99999997E-7 : f32
      %24 = vector.broadcast %cst_14 : f32 to vector<8x1xf32>
      %25 = arith.addf %23, %24 : vector<8x1xf32>
      %26 = math.rsqrt %25 : vector<8x1xf32>
      %27 = vector.broadcast %26 : vector<8x1xf32> to vector<8x32xf32>
      %28 = arith.mulf %18, %27 : vector<8x32xf32>
      %c0_15 = arith.constant 0 : index
      %c0_16 = arith.constant 0 : index
      %29 = vector.load %arg5[%c0_15, %c0_16] : memref<1x32xf32, #tpu.memory_space<vmem>>, vector<1x32xf32>
      %30 = vector.broadcast %29 : vector<1x32xf32> to vector<8x32xf32>
      %31 = arith.mulf %28, %30 : vector<8x32xf32>
      %c0_17 = arith.constant 0 : index
      %c0_18 = arith.constant 0 : index
      %32 = vector.load %arg6[%c0_17, %c0_18] : memref<1x32xf32, #tpu.memory_space<vmem>>, vector<1x32xf32>
      %33 = vector.broadcast %32 : vector<1x32xf32> to vector<8x32xf32>
      %34 = arith.addf %31, %33 : vector<8x32xf32>
      %35 = arith.truncf %34 : vector<8x32xf32> to vector<8x32xbf16>
      %c0_19 = arith.constant 0 : index
      %c0_20 = arith.constant 0 : index
      %36 = vector.load %arg8[%c0_19, %c0_20] : memref<8x32xbf16, #tpu.memory_space<vmem>>, vector<8x32xbf16>
      tpu.vector_store %arg8[%c0_19, %c0_20], %35 {strides = array<i32>} : memref<8x32xbf16, #tpu.memory_space<vmem>>, vector<8x32xbf16>,
    } else {
    }
    %c0 = arith.constant 0 : index
    %c0_1 = arith.constant 0 : index
    %3 = vector.load %arg8[%c0, %c0_1] : memref<8x32xbf16, #tpu.memory_space<vmem>>, vector<8x32xbf16>
    %c0_2 = arith.constant 0 : index
    %c0_3 = arith.constant 0 : index
    %4 = vector.load %arg3[%c0_2, %c0_3] : memref<32x96xbf16, #tpu.memory_space<vmem>>, vector<32x96xbf16>
    %cst = arith.constant dense<0.000000e+00> : vector<8x96xf32>
    %5 = tpu.matmul %3, %4, %cst {dimension_numbers = #tpu.dot_dimension_numbers<[1], [0], [0], [1], [0, 0, 1, 1], [], []>} : vector<8x32xbf16>, vector<32x96xbf16>, vector<8x96xf32> -> vector<8x96xf32>
    %c0_4 = arith.constant 0 : index
    %c0_5 = arith.constant 0 : index
    %6 = vector.load %arg4[%c0_4, %c0_5] : memref<1x96xf32, #tpu.memory_space<vmem>>, vector<1x96xf32>
    %7 = vector.broadcast %6 : vector<1x96xf32> to vector<8x96xf32>
    %8 = arith.addf %5, %7 : vector<8x96xf32>
    %9 = arith.truncf %8 : vector<8x96xf32> to vector<8x96xbf16>
    %c0_6 = arith.constant 0 : index
    %c0_7 = arith.constant 0 : index
    %10 = vector.load %arg7[%c0_6, %c0_7] : memref<8x96xbf16, #tpu.memory_space<vmem>>, vector<8x96xbf16>
    tpu.vector_store %arg7[%c0_6, %c0_7], %9 {strides = array<i32>} : memref<8x96xbf16, #tpu.memory_space<vmem>>, vector<8x96xbf16>,
    return
  }
  func.func @transform_0(%arg0: i32, %arg1: i32) -> (i32, i32) {
    %c0_i32 = arith.constant 0 : i32
    %c0_i32_0 = arith.constant 0 : i32
    return %arg0, %c0_i32 : i32, i32
  }
  func.func @transform_1(%arg0: i32, %arg1: i32) -> (i32, i32) {
    %c0_i32 = arith.constant 0 : i32
    %c0_i32_0 = arith.constant 0 : i32
    return %c0_i32, %arg1 : i32, i32
  }
  func.func @transform_2(%arg0: i32, %arg1: i32) -> (i32, i32) {
    %c0_i32 = arith.constant 0 : i32
    %c0_i32_0 = arith.constant 0 : i32
    return %c0_i32, %arg1 : i32, i32
  }
  func.func @transform_3(%arg0: i32, %arg1: i32) -> (i32, i32) {
    %c0_i32 = arith.constant 0 : i32
    %c0_i32_0 = arith.constant 0 : i32
    %c0_i32_1 = arith.constant 0 : i32
    return %c0_i32, %c0_i32_0 : i32, i32
  }
  func.func @transform_4(%arg0: i32, %arg1: i32) -> (i32, i32) {
    %c0_i32 = arith.constant 0 : i32
    %c0_i32_0 = arith.constant 0 : i32
    %c0_i32_1 = arith.constant 0 : i32
    return %c0_i32, %c0_i32_0 : i32, i32
  }
  func.func @transform_5(%arg0: i32, %arg1: i32) -> (i32, i32) {
    %c0_i32 = arith.constant 0 : i32
    return %arg0, %arg1 : i32, i32
  }
}

module attributes {stable_mosaic.version = 11 : i64} {
  func.func @_attn_kernel(%arg0: i32, %arg1: memref<1x4x96xbf16, #tpu.memory_space<vmem>>, %arg2: memref<1x4x32xbf16, #tpu.memory_space<vmem>>) attributes {dimension_semantics = [#tpu.dimension_semantics<parallel>], iteration_bounds = array<i64: 2>, scalar_prefetch = 0 : i64, scratch_operands = 0 : i64, tpu.core_type = #tpu.core_type<tc>, window_params = [{transform_indices = @transform_0, window_bounds = array<i64: 1, 4, 96>}, {transform_indices = @transform_1, window_bounds = array<i64: 1, 4, 32>}]} {
    %c0 = arith.constant 0 : index
    %c0_0 = arith.constant 0 : index
    %c0_1 = arith.constant 0 : index
    %0 = vector.load %arg1[%c0, %c0_0, %c0_1] : memref<1x4x96xbf16, #tpu.memory_space<vmem>>, vector<1x4x8xbf16>
    %1 = vector.shape_cast %0 : vector<1x4x8xbf16> to vector<4x8xbf16>
    %c0_2 = arith.constant 0 : index
    %c0_3 = arith.constant 0 : index
    %c32 = arith.constant 32 : index
    %2 = vector.load %arg1[%c0_2, %c0_3, %c32] : memref<1x4x96xbf16, #tpu.memory_space<vmem>>, vector<1x4x8xbf16>
    %3 = vector.shape_cast %2 : vector<1x4x8xbf16> to vector<4x8xbf16>
    %c0_4 = arith.constant 0 : index
    %c0_5 = arith.constant 0 : index
    %c64 = arith.constant 64 : index
    %4 = vector.load %arg1[%c0_4, %c0_5, %c64] : memref<1x4x96xbf16, #tpu.memory_space<vmem>>, vector<1x4x8xbf16>
    %5 = vector.shape_cast %4 : vector<1x4x8xbf16> to vector<4x8xbf16>
    %cst = arith.constant dense<0.000000e+00> : vector<4x4xf32>
    %6 = tpu.matmul %1, %3, %cst {dimension_numbers = #tpu.dot_dimension_numbers<[1], [1], [0], [0], [0, 0, 1, 0], [], []>} : vector<4x8xbf16>, vector<4x8xbf16>, vector<4x4xf32> -> vector<4x4xf32>
    %cst_6 = arith.constant 0.353553385 : f32
    %7 = vector.broadcast %cst_6 : f32 to vector<4x4xf32>
    %8 = arith.mulf %6, %7 : vector<4x4xf32>
    %cst_7 = arith.constant dense<0xFF800000> : vector<4xf32>
    %9 = vector.multi_reduction <maximumf>, %8, %cst_7 [1] : vector<4x4xf32> to vector<4xf32>
    %10 = vector.shape_cast %9 : vector<4xf32> to vector<4x1xf32>
    %11 = vector.broadcast %10 : vector<4x1xf32> to vector<4x4xf32>
    %12 = arith.subf %8, %11 : vector<4x4xf32>
    %13 = math.exp %12 : vector<4x4xf32>
    %cst_8 = arith.constant dense<0.000000e+00> : vector<4xf32>
    %14 = vector.multi_reduction <add>, %13, %cst_8 [1] : vector<4x4xf32> to vector<4xf32>
    %15 = vector.shape_cast %14 : vector<4xf32> to vector<4x1xf32>
    %16 = tpu.reciprocal %15 {approx = true} : vector<4x1xf32> -> vector<4x1xf32>
    %17 = vector.broadcast %16 : vector<4x1xf32> to vector<4x4xf32>
    %18 = arith.mulf %13, %17 : vector<4x4xf32>
    %19 = arith.truncf %18 : vector<4x4xf32> to vector<4x4xbf16>
    %cst_9 = arith.constant dense<0.000000e+00> : vector<4x8xf32>
    %20 = tpu.matmul %19, %5, %cst_9 {dimension_numbers = #tpu.dot_dimension_numbers<[1], [0], [0], [1], [0, 0, 1, 1], [], []>} : vector<4x4xbf16>, vector<4x8xbf16>, vector<4x8xf32> -> vector<4x8xf32>
    %21 = arith.truncf %20 : vector<4x8xf32> to vector<4x8xbf16>
    %c0_10 = arith.constant 0 : index
    %c0_11 = arith.constant 0 : index
    %c0_12 = arith.constant 0 : index
    %22 = vector.load %arg2[%c0_10, %c0_11, %c0_12] : memref<1x4x32xbf16, #tpu.memory_space<vmem>>, vector<1x4x8xbf16>
    %23 = vector.shape_cast %22 : vector<1x4x8xbf16> to vector<4x8xbf16>
    %24 = vector.shape_cast %21 : vector<4x8xbf16> to vector<1x4x8xbf16>
    tpu.vector_store %arg2[%c0_10, %c0_11, %c0_12], %24 {strides = array<i32>} : memref<1x4x32xbf16, #tpu.memory_space<vmem>>, vector<1x4x8xbf16>,
    %c0_13 = arith.constant 0 : index
    %c0_14 = arith.constant 0 : index
    %c8 = arith.constant 8 : index
    %25 = vector.load %arg1[%c0_13, %c0_14, %c8] : memref<1x4x96xbf16, #tpu.memory_space<vmem>>, vector<1x4x8xbf16>
    %26 = vector.shape_cast %25 : vector<1x4x8xbf16> to vector<4x8xbf16>
    %c0_15 = arith.constant 0 : index
    %c0_16 = arith.constant 0 : index
    %c40 = arith.constant 40 : index
    %27 = vector.load %arg1[%c0_15, %c0_16, %c40] : memref<1x4x96xbf16, #tpu.memory_space<vmem>>, vector<1x4x8xbf16>
    %28 = vector.shape_cast %27 : vector<1x4x8xbf16> to vector<4x8xbf16>
    %c0_17 = arith.constant 0 : index
    %c0_18 = arith.constant 0 : index
    %c72 = arith.constant 72 : index
    %29 = vector.load %arg1[%c0_17, %c0_18, %c72] : memref<1x4x96xbf16, #tpu.memory_space<vmem>>, vector<1x4x8xbf16>
    %30 = vector.shape_cast %29 : vector<1x4x8xbf16> to vector<4x8xbf16>
    %cst_19 = arith.constant dense<0.000000e+00> : vector<4x4xf32>
    %31 = tpu.matmul %26, %28, %cst_19 {dimension_numbers = #tpu.dot_dimension_numbers<[1], [1], [0], [0], [0, 0, 1, 0], [], []>} : vector<4x8xbf16>, vector<4x8xbf16>, vector<4x4xf32> -> vector<4x4xf32>
    %cst_20 = arith.constant 0.353553385 : f32
    %32 = vector.broadcast %cst_20 : f32 to vector<4x4xf32>
    %33 = arith.mulf %31, %32 : vector<4x4xf32>
    %cst_21 = arith.constant dense<0xFF800000> : vector<4xf32>
    %34 = vector.multi_reduction <maximumf>, %33, %cst_21 [1] : vector<4x4xf32> to vector<4xf32>
    %35 = vector.shape_cast %34 : vector<4xf32> to vector<4x1xf32>
    %36 = vector.broadcast %35 : vector<4x1xf32> to vector<4x4xf32>
    %37 = arith.subf %33, %36 : vector<4x4xf32>
    %38 = math.exp %37 : vector<4x4xf32>
    %cst_22 = arith.constant dense<0.000000e+00> : vector<4xf32>
    %39 = vector.multi_reduction <add>, %38, %cst_22 [1] : vector<4x4xf32> to vector<4xf32>
    %40 = vector.shape_cast %39 : vector<4xf32> to vector<4x1xf32>
    %41 = tpu.reciprocal %40 {approx = true} : vector<4x1xf32> -> vector<4x1xf32>
    %42 = vector.broadcast %41 : vector<4x1xf32> to vector<4x4xf32>
    %43 = arith.mulf %38, %42 : vector<4x4xf32>
    %44 = arith.truncf %43 : vector<4x4xf32> to vector<4x4xbf16>
    %cst_23 = arith.constant dense<0.000000e+00> : vector<4x8xf32>
    %45 = tpu.matmul %44, %30, %cst_23 {dimension_numbers = #tpu.dot_dimension_numbers<[1], [0], [0], [1], [0, 0, 1, 1], [], []>} : vector<4x4xbf16>, vector<4x8xbf16>, vector<4x8xf32> -> vector<4x8xf32>
    %46 = arith.truncf %45 : vector<4x8xf32> to vector<4x8xbf16>
    %c0_24 = arith.constant 0 : index
    %c0_25 = arith.constant 0 : index
    %c8_26 = arith.constant 8 : index
    %47 = vector.load %arg2[%c0_24, %c0_25, %c8_26] : memref<1x4x32xbf16, #tpu.memory_space<vmem>>, vector<1x4x8xbf16>
    %48 = vector.shape_cast %47 : vector<1x4x8xbf16> to vector<4x8xbf16>
    %49 = vector.shape_cast %46 : vector<4x8xbf16> to vector<1x4x8xbf16>
    tpu.vector_store %arg2[%c0_24, %c0_25, %c8_26], %49 {strides = array<i32>} : memref<1x4x32xbf16, #tpu.memory_space<vmem>>, vector<1x4x8xbf16>,
    %c0_27 = arith.constant 0 : index
    %c0_28 = arith.constant 0 : index
    %c16 = arith.constant 16 : index
    %50 = vector.load %arg1[%c0_27, %c0_28, %c16] : memref<1x4x96xbf16, #tpu.memory_space<vmem>>, vector<1x4x8xbf16>
    %51 = vector.shape_cast %50 : vector<1x4x8xbf16> to vector<4x8xbf16>
    %c0_29 = arith.constant 0 : index
    %c0_30 = arith.constant 0 : index
    %c48 = arith.constant 48 : index
    %52 = vector.load %arg1[%c0_29, %c0_30, %c48] : memref<1x4x96xbf16, #tpu.memory_space<vmem>>, vector<1x4x8xbf16>
    %53 = vector.shape_cast %52 : vector<1x4x8xbf16> to vector<4x8xbf16>
    %c0_31 = arith.constant 0 : index
    %c0_32 = arith.constant 0 : index
    %c80 = arith.constant 80 : index
    %54 = vector.load %arg1[%c0_31, %c0_32, %c80] : memref<1x4x96xbf16, #tpu.memory_space<vmem>>, vector<1x4x8xbf16>
    %55 = vector.shape_cast %54 : vector<1x4x8xbf16> to vector<4x8xbf16>
    %cst_33 = arith.constant dense<0.000000e+00> : vector<4x4xf32>
    %56 = tpu.matmul %51, %53, %cst_33 {dimension_numbers = #tpu.dot_dimension_numbers<[1], [1], [0], [0], [0, 0, 1, 0], [], []>} : vector<4x8xbf16>, vector<4x8xbf16>, vector<4x4xf32> -> vector<4x4xf32>
    %cst_34 = arith.constant 0.353553385 : f32
    %57 = vector.broadcast %cst_34 : f32 to vector<4x4xf32>
    %58 = arith.mulf %56, %57 : vector<4x4xf32>
    %cst_35 = arith.constant dense<0xFF800000> : vector<4xf32>
    %59 = vector.multi_reduction <maximumf>, %58, %cst_35 [1] : vector<4x4xf32> to vector<4xf32>
    %60 = vector.shape_cast %59 : vector<4xf32> to vector<4x1xf32>
    %61 = vector.broadcast %60 : vector<4x1xf32> to vector<4x4xf32>
    %62 = arith.subf %58, %61 : vector<4x4xf32>
    %63 = math.exp %62 : vector<4x4xf32>
    %cst_36 = arith.constant dense<0.000000e+00> : vector<4xf32>
    %64 = vector.multi_reduction <add>, %63, %cst_36 [1] : vector<4x4xf32> to vector<4xf32>
    %65 = vector.shape_cast %64 : vector<4xf32> to vector<4x1xf32>
    %66 = tpu.reciprocal %65 {approx = true} : vector<4x1xf32> -> vector<4x1xf32>
    %67 = vector.broadcast %66 : vector<4x1xf32> to vector<4x4xf32>
    %68 = arith.mulf %63, %67 : vector<4x4xf32>
    %69 = arith.truncf %68 : vector<4x4xf32> to vector<4x4xbf16>
    %cst_37 = arith.constant dense<0.000000e+00> : vector<4x8xf32>
    %70 = tpu.matmul %69, %55, %cst_37 {dimension_numbers = #tpu.dot_dimension_numbers<[1], [0], [0], [1], [0, 0, 1, 1], [], []>} : vector<4x4xbf16>, vector<4x8xbf16>, vector<4x8xf32> -> vector<4x8xf32>
    %71 = arith.truncf %70 : vector<4x8xf32> to vector<4x8xbf16>
    %c0_38 = arith.constant 0 : index
    %c0_39 = arith.constant 0 : index
    %c16_40 = arith.constant 16 : index
    %72 = vector.load %arg2[%c0_38, %c0_39, %c16_40] : memref<1x4x32xbf16, #tpu.memory_space<vmem>>, vector<1x4x8xbf16>
    %73 = vector.shape_cast %72 : vector<1x4x8xbf16> to vector<4x8xbf16>
    %74 = vector.shape_cast %71 : vector<4x8xbf16> to vector<1x4x8xbf16>
    tpu.vector_store %arg2[%c0_38, %c0_39, %c16_40], %74 {strides = array<i32>} : memref<1x4x32xbf16, #tpu.memory_space<vmem>>, vector<1x4x8xbf16>,
    %c0_41 = arith.constant 0 : index
    %c0_42 = arith.constant 0 : index
    %c24 = arith.constant 24 : index
    %75 = vector.load %arg1[%c0_41, %c0_42, %c24] : memref<1x4x96xbf16, #tpu.memory_space<vmem>>, vector<1x4x8xbf16>
    %76 = vector.shape_cast %75 : vector<1x4x8xbf16> to vector<4x8xbf16>
    %c0_43 = arith.constant 0 : index
    %c0_44 = arith.constant 0 : index
    %c56 = arith.constant 56 : index
    %77 = vector.load %arg1[%c0_43, %c0_44, %c56] : memref<1x4x96xbf16, #tpu.memory_space<vmem>>, vector<1x4x8xbf16>
    %78 = vector.shape_cast %77 : vector<1x4x8xbf16> to vector<4x8xbf16>
    %c0_45 = arith.constant 0 : index
    %c0_46 = arith.constant 0 : index
    %c88 = arith.constant 88 : index
    %79 = vector.load %arg1[%c0_45, %c0_46, %c88] : memref<1x4x96xbf16, #tpu.memory_space<vmem>>, vector<1x4x8xbf16>
    %80 = vector.shape_cast %79 : vector<1x4x8xbf16> to vector<4x8xbf16>
    %cst_47 = arith.constant dense<0.000000e+00> : vector<4x4xf32>
    %81 = tpu.matmul %76, %78, %cst_47 {dimension_numbers = #tpu.dot_dimension_numbers<[1], [1], [0], [0], [0, 0, 1, 0], [], []>} : vector<4x8xbf16>, vector<4x8xbf16>, vector<4x4xf32> -> vector<4x4xf32>
    %cst_48 = arith.constant 0.353553385 : f32
    %82 = vector.broadcast %cst_48 : f32 to vector<4x4xf32>
    %83 = arith.mulf %81, %82 : vector<4x4xf32>
    %cst_49 = arith.constant dense<0xFF800000> : vector<4xf32>
    %84 = vector.multi_reduction <maximumf>, %83, %cst_49 [1] : vector<4x4xf32> to vector<4xf32>
    %85 = vector.shape_cast %84 : vector<4xf32> to vector<4x1xf32>
    %86 = vector.broadcast %85 : vector<4x1xf32> to vector<4x4xf32>
    %87 = arith.subf %83, %86 : vector<4x4xf32>
    %88 = math.exp %87 : vector<4x4xf32>
    %cst_50 = arith.constant dense<0.000000e+00> : vector<4xf32>
    %89 = vector.multi_reduction <add>, %88, %cst_50 [1] : vector<4x4xf32> to vector<4xf32>
    %90 = vector.shape_cast %89 : vector<4xf32> to vector<4x1xf32>
    %91 = tpu.reciprocal %90 {approx = true} : vector<4x1xf32> -> vector<4x1xf32>
    %92 = vector.broadcast %91 : vector<4x1xf32> to vector<4x4xf32>
    %93 = arith.mulf %88, %92 : vector<4x4xf32>
    %94 = arith.truncf %93 : vector<4x4xf32> to vector<4x4xbf16>
    %cst_51 = arith.constant dense<0.000000e+00> : vector<4x8xf32>
    %95 = tpu.matmul %94, %80, %cst_51 {dimension_numbers = #tpu.dot_dimension_numbers<[1], [0], [0], [1], [0, 0, 1, 1], [], []>} : vector<4x4xbf16>, vector<4x8xbf16>, vector<4x8xf32> -> vector<4x8xf32>
    %96 = arith.truncf %95 : vector<4x8xf32> to vector<4x8xbf16>
    %c0_52 = arith.constant 0 : index
    %c0_53 = arith.constant 0 : index
    %c24_54 = arith.constant 24 : index
    %97 = vector.load %arg2[%c0_52, %c0_53, %c24_54] : memref<1x4x32xbf16, #tpu.memory_space<vmem>>, vector<1x4x8xbf16>
    %98 = vector.shape_cast %97 : vector<1x4x8xbf16> to vector<4x8xbf16>
    %99 = vector.shape_cast %96 : vector<4x8xbf16> to vector<1x4x8xbf16>
    tpu.vector_store %arg2[%c0_52, %c0_53, %c24_54], %99 {strides = array<i32>} : memref<1x4x32xbf16, #tpu.memory_space<vmem>>, vector<1x4x8xbf16>,
    return
  }
  func.func @transform_0(%arg0: i32) -> (i32, i32, i32) {
    %c0_i32 = arith.constant 0 : i32
    %c0_i32_0 = arith.constant 0 : i32
    %c0_i32_1 = arith.constant 0 : i32
    return %arg0, %c0_i32, %c0_i32_0 : i32, i32, i32
  }
  func.func @transform_1(%arg0: i32) -> (i32, i32, i32) {
    %c0_i32 = arith.constant 0 : i32
    %c0_i32_0 = arith.constant 0 : i32
    %c0_i32_1 = arith.constant 0 : i32
    return %arg0, %c0_i32, %c0_i32_0 : i32, i32, i32
  }
}

module attributes {stable_mosaic.version = 11 : i64} {
  func.func @_fused_linear_kernel(%arg0: i32, %arg1: i32, %arg2: memref<8x32xbf16, #tpu.memory_space<vmem>>, %arg3: memref<32x128xbf16, #tpu.memory_space<vmem>>, %arg4: memref<1x128xf32, #tpu.memory_space<vmem>>, %arg5: memref<1x32xf32, #tpu.memory_space<vmem>>, %arg6: memref<1x32xf32, #tpu.memory_space<vmem>>, %arg7: memref<8x128xbf16, #tpu.memory_space<vmem>>, %arg8: memref<8x32xbf16, #tpu.memory_space<vmem>>) attributes {dimension_semantics = [#tpu.dimension_semantics<parallel>, #tpu.dimension_semantics<arbitrary>], iteration_bounds = array<i64: 1, 1>, scalar_prefetch = 0 : i64, scratch_operands = 1 : i64, tpu.core_type = #tpu.core_type<tc>, window_params = [{transform_indices = @transform_0, window_bounds = array<i64: 8, 32>}, {transform_indices = @transform_1, window_bounds = array<i64: 32, 128>}, {transform_indices = @transform_2, window_bounds = array<i64: 1, 128>}, {pipeline_mode = #tpu.pipeline_mode<synchronous>, transform_indices = @transform_3, window_bounds = array<i64: 1, 32>}, {pipeline_mode = #tpu.pipeline_mode<synchronous>, transform_indices = @transform_4, window_bounds = array<i64: 1, 32>}, {transform_indices = @transform_5, window_bounds = array<i64: 8, 128>}]} {
    %c0_i32 = arith.constant 0 : i32
    %0 = arith.cmpi eq, %arg1, %c0_i32 : i32
    %1 = arith.extui %0 : i1 to i32
    %c0_i32_0 = arith.constant 0 : i32
    %2 = arith.cmpi ne, %1, %c0_i32_0 : i32
    scf.if %2 {
      %c0_23 = arith.constant 0 : index
      %c0_24 = arith.constant 0 : index
      %51 = vector.load %arg2[%c0_23, %c0_24] : memref<8x32xbf16, #tpu.memory_space<vmem>>, vector<8x32xbf16>
      %52 = arith.extf %51 : vector<8x32xbf16> to vector<8x32xf32>
      %cst_25 = arith.constant dense<0.000000e+00> : vector<8xf32>
      %53 = vector.multi_reduction <add>, %52, %cst_25 [1] : vector<8x32xf32> to vector<8xf32>
      %54 = vector.shape_cast %53 : vector<8xf32> to vector<8x1xf32>
      %cst_26 = arith.constant 3.200000e+01 : f32
      %55 = vector.broadcast %cst_26 : f32 to vector<8x1xf32>
      %56 = arith.divf %54, %55 : vector<8x1xf32>
      %57 = vector.broadcast %56 : vector<8x1xf32> to vector<8x32xf32>
      %58 = arith.subf %52, %57 : vector<8x32xf32>
      %59 = arith.mulf %58, %58 : vector<8x32xf32>
      %cst_27 = arith.constant dense<0.000000e+00> : vector<8xf32>
      %60 = vector.multi_reduction <add>, %59, %cst_27 [1] : vector<8x32xf32> to vector<8xf32>
      %61 = vector.shape_cast %60 : vector<8xf32> to vector<8x1xf32>
      %cst_28 = arith.constant 3.200000e+01 : f32
      %62 = vector.broadcast %cst_28 : f32 to vector<8x1xf32>
      %63 = arith.divf %61, %62 : vector<8x1xf32>
      %cst_29 = arith.constant 9.99999997E-7 : f32
      %64 = vector.broadcast %cst_29 : f32 to vector<8x1xf32>
      %65 = arith.addf %63, %64 : vector<8x1xf32>
      %66 = math.rsqrt %65 : vector<8x1xf32>
      %67 = vector.broadcast %66 : vector<8x1xf32> to vector<8x32xf32>
      %68 = arith.mulf %58, %67 : vector<8x32xf32>
      %c0_30 = arith.constant 0 : index
      %c0_31 = arith.constant 0 : index
      %69 = vector.load %arg5[%c0_30, %c0_31] : memref<1x32xf32, #tpu.memory_space<vmem>>, vector<1x32xf32>
      %70 = vector.broadcast %69 : vector<1x32xf32> to vector<8x32xf32>
      %71 = arith.mulf %68, %70 : vector<8x32xf32>
      %c0_32 = arith.constant 0 : index
      %c0_33 = arith.constant 0 : index
      %72 = vector.load %arg6[%c0_32, %c0_33] : memref<1x32xf32, #tpu.memory_space<vmem>>, vector<1x32xf32>
      %73 = vector.broadcast %72 : vector<1x32xf32> to vector<8x32xf32>
      %74 = arith.addf %71, %73 : vector<8x32xf32>
      %75 = arith.truncf %74 : vector<8x32xf32> to vector<8x32xbf16>
      %c0_34 = arith.constant 0 : index
      %c0_35 = arith.constant 0 : index
      %76 = vector.load %arg8[%c0_34, %c0_35] : memref<8x32xbf16, #tpu.memory_space<vmem>>, vector<8x32xbf16>
      tpu.vector_store %arg8[%c0_34, %c0_35], %75 {strides = array<i32>} : memref<8x32xbf16, #tpu.memory_space<vmem>>, vector<8x32xbf16>,
    } else {
    }
    %c0 = arith.constant 0 : index
    %c0_1 = arith.constant 0 : index
    %3 = vector.load %arg8[%c0, %c0_1] : memref<8x32xbf16, #tpu.memory_space<vmem>>, vector<8x32xbf16>
    %c0_2 = arith.constant 0 : index
    %c0_3 = arith.constant 0 : index
    %4 = vector.load %arg3[%c0_2, %c0_3] : memref<32x128xbf16, #tpu.memory_space<vmem>>, vector<32x128xbf16>
    %cst = arith.constant dense<0.000000e+00> : vector<8x128xf32>
    %5 = tpu.matmul %3, %4, %cst {dimension_numbers = #tpu.dot_dimension_numbers<[1], [0], [0], [1], [0, 0, 1, 1], [], []>} : vector<8x32xbf16>, vector<32x128xbf16>, vector<8x128xf32> -> vector<8x128xf32>
    %c0_4 = arith.constant 0 : index
    %c0_5 = arith.constant 0 : index
    %6 = vector.load %arg4[%c0_4, %c0_5] : memref<1x128xf32, #tpu.memory_space<vmem>>, vector<1x128xf32>
    %7 = vector.broadcast %6 : vector<1x128xf32> to vector<8x128xf32>
    %8 = arith.addf %5, %7 : vector<8x128xf32>
    %cst_6 = arith.constant 0.707106769 : f32
    %9 = vector.broadcast %cst_6 : f32 to vector<8x128xf32>
    %10 = arith.mulf %8, %9 : vector<8x128xf32>
    %11 = math.absf %10 : vector<8x128xf32>
    %cst_7 = arith.constant 0.327591091 : f32
    %12 = vector.broadcast %cst_7 : f32 to vector<8x128xf32>
    %13 = arith.mulf %12, %11 : vector<8x128xf32>
    %cst_8 = arith.constant 1.000000e+00 : f32
    %14 = vector.broadcast %cst_8 : f32 to vector<8x128xf32>
    %15 = arith.addf %14, %13 : vector<8x128xf32>
    %cst_9 = arith.constant 1.000000e+00 : f32
    %16 = vector.broadcast %cst_9 : f32 to vector<8x128xf32>
    %17 = arith.divf %16, %15 : vector<8x128xf32>
    %cst_10 = arith.constant 1.06140542 : f32
    %18 = vector.broadcast %cst_10 : f32 to vector<8x128xf32>
    %19 = arith.mulf %18, %17 : vector<8x128xf32>
    %cst_11 = arith.constant 1.45315206 : f32
    %20 = vector.broadcast %cst_11 : f32 to vector<8x128xf32>
    %21 = arith.subf %19, %20 : vector<8x128xf32>
    %22 = arith.mulf %21, %17 : vector<8x128xf32>
    %cst_12 = arith.constant 1.42141378 : f32
    %23 = vector.broadcast %cst_12 : f32 to vector<8x128xf32>
    %24 = arith.addf %22, %23 : vector<8x128xf32>
    %25 = arith.mulf %24, %17 : vector<8x128xf32>
    %cst_13 = arith.constant 0.284496725 : f32
    %26 = vector.broadcast %cst_13 : f32 to vector<8x128xf32>
    %27 = arith.subf %25, %26 : vector<8x128xf32>
    %28 = arith.mulf %27, %17 : vector<8x128xf32>
    %cst_14 = arith.constant 0.254829586 : f32
    %29 = vector.broadcast %cst_14 : f32 to vector<8x128xf32>
    %30 = arith.addf %28, %29 : vector<8x128xf32>
    %31 = arith.mulf %30, %17 : vector<8x128xf32>
    %cst_15 = arith.constant 0.000000e+00 : f32
    %32 = vector.broadcast %cst_15 : f32 to vector<8x128xf32>
    %33 = arith.subf %32, %11 : vector<8x128xf32>
    %34 = arith.mulf %33, %11 : vector<8x128xf32>
    %35 = math.exp %34 : vector<8x128xf32>
    %36 = arith.mulf %31, %35 : vector<8x128xf32>
    %cst_16 = arith.constant 1.000000e+00 : f32
    %37 = vector.broadcast %cst_16 : f32 to vector<8x128xf32>
    %38 = arith.subf %37, %36 : vector<8x128xf32>
    %cst_17 = arith.constant 0.000000e+00 : f32
    %39 = vector.broadcast %cst_17 : f32 to vector<8x128xf32>
    %40 = arith.cmpf oge, %10, %39 : vector<8x128xf32>
    %cst_18 = arith.constant 0.000000e+00 : f32
    %41 = vector.broadcast %cst_18 : f32 to vector<8x128xf32>
    %42 = arith.subf %41, %38 : vector<8x128xf32>
    %43 = arith.select %40, %38, %42 : vector<8x128xi1>, vector<8x128xf32>
    %cst_19 = arith.constant 5.000000e-01 : f32
    %44 = vector.broadcast %cst_19 : f32 to vector<8x128xf32>
    %45 = arith.mulf %44, %8 : vector<8x128xf32>
    %cst_20 = arith.constant 1.000000e+00 : f32
    %46 = vector.broadcast %cst_20 : f32 to vector<8x128xf32>
    %47 = arith.addf %46, %43 : vector<8x128xf32>
    %48 = arith.mulf %45, %47 : vector<8x128xf32>
    %49 = arith.truncf %48 : vector<8x128xf32> to vector<8x128xbf16>
    %c0_21 = arith.constant 0 : index
    %c0_22 = arith.constant 0 : index
    %50 = vector.load %arg7[%c0_21, %c0_22] : memref<8x128xbf16, #tpu.memory_space<vmem>>, vector<8x128xbf16>
    tpu.vector_store %arg7[%c0_21, %c0_22], %49 {strides = array<i32>} : memref<8x128xbf16, #tpu.memory_space<vmem>>, vector<8x128xbf16>,
    return
  }
  func.func @transform_0(%arg0: i32, %arg1: i32) -> (i32, i32) {
    %c0_i32 = arith.constant 0 : i32
    %c0_i32_0 = arith.constant 0 : i32
    return %arg0, %c0_i32 : i32, i32
  }
  func.func @transform_1(%arg0: i32, %arg1: i32) -> (i32, i32) {
    %c0_i32 = arith.constant 0 : i32
    %c0_i32_0 = arith.constant 0 : i32
    return %c0_i32, %arg1 : i32, i32
  }
  func.func @transform_2(%arg0: i32, %arg1: i32) -> (i32, i32) {
    %c0_i32 = arith.constant 0 : i32
    %c0_i32_0 = arith.constant 0 : i32
    return %c0_i32, %arg1 : i32, i32
  }
  func.func @transform_3(%arg0: i32, %arg1: i32) -> (i32, i32) {
    %c0_i32 = arith.constant 0 : i32
    %c0_i32_0 = arith.constant 0 : i32
    %c0_i32_1 = arith.constant 0 : i32
    return %c0_i32, %c0_i32_0 : i32, i32
  }
  func.func @transform_4(%arg0: i32, %arg1: i32) -> (i32, i32) {
    %c0_i32 = arith.constant 0 : i32
    %c0_i32_0 = arith.constant 0 : i32
    %c0_i32_1 = arith.constant 0 : i32
    return %c0_i32, %c0_i32_0 : i32, i32
  }
  func.func @transform_5(%arg0: i32, %arg1: i32) -> (i32, i32) {
    %c0_i32 = arith.constant 0 : i32
    return %arg0, %arg1 : i32, i32
  }
}

module attributes {stable_mosaic.version = 11 : i64} {
  func.func @_fused_linear_kernel(%arg0: i32, %arg1: i32, %arg2: memref<8x32xbf16, #tpu.memory_space<vmem>>, %arg3: memref<32x32xbf16, #tpu.memory_space<vmem>>, %arg4: memref<1x32xf32, #tpu.memory_space<vmem>>, %arg5: memref<8x32xbf16, #tpu.memory_space<vmem>>, %arg6: memref<8x32xbf16, #tpu.memory_space<vmem>>) attributes {dimension_semantics = [#tpu.dimension_semantics<parallel>, #tpu.dimension_semantics<parallel>], iteration_bounds = array<i64: 1, 1>, scalar_prefetch = 0 : i64, scratch_operands = 0 : i64, tpu.core_type = #tpu.core_type<tc>, window_params = [{transform_indices = @transform_0, window_bounds = array<i64: 8, 32>}, {transform_indices = @transform_1, window_bounds = array<i64: 32, 32>}, {transform_indices = @transform_2, window_bounds = array<i64: 1, 32>}, {transform_indices = @transform_3, window_bounds = array<i64: 8, 32>}, {transform_indices = @transform_4, window_bounds = array<i64: 8, 32>}]} {
    %c0 = arith.constant 0 : index
    %c0_0 = arith.constant 0 : index
    %0 = vector.load %arg2[%c0, %c0_0] : memref<8x32xbf16, #tpu.memory_space<vmem>>, vector<8x32xbf16>
    %c0_1 = arith.constant 0 : index
    %c0_2 = arith.constant 0 : index
    %1 = vector.load %arg3[%c0_1, %c0_2] : memref<32x32xbf16, #tpu.memory_space<vmem>>, vector<32x32xbf16>
    %cst = arith.constant dense<0.000000e+00> : vector<8x32xf32>
    %2 = tpu.matmul %0, %1, %cst {dimension_numbers = #tpu.dot_dimension_numbers<[1], [0], [0], [1], [0, 0, 1, 1], [], []>} : vector<8x32xbf16>, vector<32x32xbf16>, vector<8x32xf32> -> vector<8x32xf32>
    %c0_3 = arith.constant 0 : index
    %c0_4 = arith.constant 0 : index
    %3 = vector.load %arg4[%c0_3, %c0_4] : memref<1x32xf32, #tpu.memory_space<vmem>>, vector<1x32xf32>
    %4 = vector.broadcast %3 : vector<1x32xf32> to vector<8x32xf32>
    %5 = arith.addf %2, %4 : vector<8x32xf32>
    %c0_5 = arith.constant 0 : index
    %c0_6 = arith.constant 0 : index
    %6 = vector.load %arg5[%c0_5, %c0_6] : memref<8x32xbf16, #tpu.memory_space<vmem>>, vector<8x32xbf16>
    %7 = arith.extf %6 : vector<8x32xbf16> to vector<8x32xf32>
    %8 = arith.addf %5, %7 : vector<8x32xf32>
    %9 = arith.truncf %8 : vector<8x32xf32> to vector<8x32xbf16>
    %c0_7 = arith.constant 0 : index
    %c0_8 = arith.constant 0 : index
    %10 = vector.load %arg6[%c0_7, %c0_8] : memref<8x32xbf16, #tpu.memory_space<vmem>>, vector<8x32xbf16>
    tpu.vector_store %arg6[%c0_7, %c0_8], %9 {strides = array<i32>} : memref<8x32xbf16, #tpu.memory_space<vmem>>, vector<8x32xbf16>,
    return
  }
  func.func @transform_0(%arg0: i32, %arg1: i32) -> (i32, i32) {
    %c0_i32 = arith.constant 0 : i32
    %c0_i32_0 = arith.constant 0 : i32
    return %arg0, %c0_i32 : i32, i32
  }
  func.func @transform_1(%arg0: i32, %arg1: i32) -> (i32, i32) {
    %c0_i32 = arith.constant 0 : i32
    %c0_i32_0 = arith.constant 0 : i32
    return %c0_i32, %arg1 : i32, i32
  }
  func.func @transform_2(%arg0: i32, %arg1: i32) -> (i32, i32) {
    %c0_i32 = arith.constant 0 : i32
    %c0_i32_0 = arith.constant 0 : i32
    return %c0_i32, %arg1 : i32, i32
  }
  func.func @transform_3(%arg0: i32, %arg1: i32) -> (i32, i32) {
    %c0_i32 = arith.constant 0 : i32
    return %arg0, %arg1 : i32, i32
  }
  func.func @transform_4(%arg0: i32, %arg1: i32) -> (i32, i32) {
    %c0_i32 = arith.constant 0 : i32
    return %arg0, %arg1 : i32, i32
  }
}

module attributes {stable_mosaic.version = 11 : i64} {
  func.func @_fused_linear_kernel(%arg0: i32, %arg1: i32, %arg2: memref<8x128xbf16, #tpu.memory_space<vmem>>, %arg3: memref<128x32xbf16, #tpu.memory_space<vmem>>, %arg4: memref<1x32xf32, #tpu.memory_space<vmem>>, %arg5: memref<8x32xbf16, #tpu.memory_space<vmem>>, %arg6: memref<8x32xbf16, #tpu.memory_space<vmem>>) attributes {dimension_semantics = [#tpu.dimension_semantics<parallel>, #tpu.dimension_semantics<parallel>], iteration_bounds = array<i64: 1, 1>, scalar_prefetch = 0 : i64, scratch_operands = 0 : i64, tpu.core_type = #tpu.core_type<tc>, window_params = [{transform_indices = @transform_0, window_bounds = array<i64: 8, 128>}, {transform_indices = @transform_1, window_bounds = array<i64: 128, 32>}, {transform_indices = @transform_2, window_bounds = array<i64: 1, 32>}, {transform_indices = @transform_3, window_bounds = array<i64: 8, 32>}, {transform_indices = @transform_4, window_bounds = array<i64: 8, 32>}]} {
    %c0 = arith.constant 0 : index
    %c0_0 = arith.constant 0 : index
    %0 = vector.load %arg2[%c0, %c0_0] : memref<8x128xbf16, #tpu.memory_space<vmem>>, vector<8x128xbf16>
    %c0_1 = arith.constant 0 : index
    %c0_2 = arith.constant 0 : index
    %1 = vector.load %arg3[%c0_1, %c0_2] : memref<128x32xbf16, #tpu.memory_space<vmem>>, vector<128x32xbf16>
    %cst = arith.constant dense<0.000000e+00> : vector<8x32xf32>
    %2 = tpu.matmul %0, %1, %cst {dimension_numbers = #tpu.dot_dimension_numbers<[1], [0], [0], [1], [0, 0, 1, 1], [], []>} : vector<8x128xbf16>, vector<128x32xbf16>, vector<8x32xf32> -> vector<8x32xf32>
    %c0_3 = arith.constant 0 : index
    %c0_4 = arith.constant 0 : index
    %3 = vector.load %arg4[%c0_3, %c0_4] : memref<1x32xf32, #tpu.memory_space<vmem>>, vector<1x32xf32>
    %4 = vector.broadcast %3 : vector<1x32xf32> to vector<8x32xf32>
    %5 = arith.addf %2, %4 : vector<8x32xf32>
    %c0_5 = arith.constant 0 : index
    %c0_6 = arith.constant 0 : index
    %6 = vector.load %arg5[%c0_5, %c0_6] : memref<8x32xbf16, #tpu.memory_space<vmem>>, vector<8x32xbf16>
    %7 = arith.extf %6 : vector<8x32xbf16> to vector<8x32xf32>
    %8 = arith.addf %5, %7 : vector<8x32xf32>
    %9 = arith.truncf %8 : vector<8x32xf32> to vector<8x32xbf16>
    %c0_7 = arith.constant 0 : index
    %c0_8 = arith.constant 0 : index
    %10 = vector.load %arg6[%c0_7, %c0_8] : memref<8x32xbf16, #tpu.memory_space<vmem>>, vector<8x32xbf16>
    tpu.vector_store %arg6[%c0_7, %c0_8], %9 {strides = array<i32>} : memref<8x32xbf16, #tpu.memory_space<vmem>>, vector<8x32xbf16>,
    return
  }
  func.func @transform_0(%arg0: i32, %arg1: i32) -> (i32, i32) {
    %c0_i32 = arith.constant 0 : i32
    %c0_i32_0 = arith.constant 0 : i32
    return %arg0, %c0_i32 : i32, i32
  }
  func.func @transform_1(%arg0: i32, %arg1: i32) -> (i32, i32) {
    %c0_i32 = arith.constant 0 : i32
    %c0_i32_0 = arith.constant 0 : i32
    return %c0_i32, %arg1 : i32, i32
  }
  func.func @transform_2(%arg0: i32, %arg1: i32) -> (i32, i32) {
    %c0_i32 = arith.constant 0 : i32
    %c0_i32_0 = arith.constant 0 : i32
    return %c0_i32, %arg1 : i32, i32
  }
  func.func @transform_3(%arg0: i32, %arg1: i32) -> (i32, i32) {
    %c0_i32 = arith.constant 0 : i32
    return %arg0, %arg1 : i32, i32
  }
  func.func @transform_4(%arg0: i32, %arg1: i32) -> (i32, i32) {
    %c0_i32 = arith.constant 0 : i32
    return %arg0, %arg1 : i32, i32
  }
}

module attributes {stable_mosaic.version = 11 : i64} {
  func.func @_fused_linear_kernel(%arg0: i32, %arg1: i32, %arg2: memref<8x32xbf16, #tpu.memory_space<vmem>>, %arg3: memref<32x8xbf16, #tpu.memory_space<vmem>>, %arg4: memref<1x8xf32, #tpu.memory_space<vmem>>, %arg5: memref<1x32xf32, #tpu.memory_space<vmem>>, %arg6: memref<1x32xf32, #tpu.memory_space<vmem>>, %arg7: memref<8x8xbf16, #tpu.memory_space<vmem>>, %arg8: memref<8x32xbf16, #tpu.memory_space<vmem>>) attributes {dimension_semantics = [#tpu.dimension_semantics<parallel>, #tpu.dimension_semantics<arbitrary>], iteration_bounds = array<i64: 1, 1>, scalar_prefetch = 0 : i64, scratch_operands = 1 : i64, tpu.core_type = #tpu.core_type<tc>, window_params = [{transform_indices = @transform_0, window_bounds = array<i64: 8, 32>}, {transform_indices = @transform_1, window_bounds = array<i64: 32, 8>}, {transform_indices = @transform_2, window_bounds = array<i64: 1, 8>}, {pipeline_mode = #tpu.pipeline_mode<synchronous>, transform_indices = @transform_3, window_bounds = array<i64: 1, 32>}, {pipeline_mode = #tpu.pipeline_mode<synchronous>, transform_indices = @transform_4, window_bounds = array<i64: 1, 32>}, {transform_indices = @transform_5, window_bounds = array<i64: 8, 8>}]} {
    %c0_i32 = arith.constant 0 : i32
    %0 = arith.cmpi eq, %arg1, %c0_i32 : i32
    %1 = arith.extui %0 : i1 to i32
    %c0_i32_0 = arith.constant 0 : i32
    %2 = arith.cmpi ne, %1, %c0_i32_0 : i32
    scf.if %2 {
      %c0_8 = arith.constant 0 : index
      %c0_9 = arith.constant 0 : index
      %11 = vector.load %arg2[%c0_8, %c0_9] : memref<8x32xbf16, #tpu.memory_space<vmem>>, vector<8x32xbf16>
      %12 = arith.extf %11 : vector<8x32xbf16> to vector<8x32xf32>
      %cst_10 = arith.constant dense<0.000000e+00> : vector<8xf32>
      %13 = vector.multi_reduction <add>, %12, %cst_10 [1] : vector<8x32xf32> to vector<8xf32>
      %14 = vector.shape_cast %13 : vector<8xf32> to vector<8x1xf32>
      %cst_11 = arith.constant 3.200000e+01 : f32
      %15 = vector.broadcast %cst_11 : f32 to vector<8x1xf32>
      %16 = arith.divf %14, %15 : vector<8x1xf32>
      %17 = vector.broadcast %16 : vector<8x1xf32> to vector<8x32xf32>
      %18 = arith.subf %12, %17 : vector<8x32xf32>
      %19 = arith.mulf %18, %18 : vector<8x32xf32>
      %cst_12 = arith.constant dense<0.000000e+00> : vector<8xf32>
      %20 = vector.multi_reduction <add>, %19, %cst_12 [1] : vector<8x32xf32> to vector<8xf32>
      %21 = vector.shape_cast %20 : vector<8xf32> to vector<8x1xf32>
      %cst_13 = arith.constant 3.200000e+01 : f32
      %22 = vector.broadcast %cst_13 : f32 to vector<8x1xf32>
      %23 = arith.divf %21, %22 : vector<8x1xf32>
      %cst_14 = arith.constant 9.99999997E-7 : f32
      %24 = vector.broadcast %cst_14 : f32 to vector<8x1xf32>
      %25 = arith.addf %23, %24 : vector<8x1xf32>
      %26 = math.rsqrt %25 : vector<8x1xf32>
      %27 = vector.broadcast %26 : vector<8x1xf32> to vector<8x32xf32>
      %28 = arith.mulf %18, %27 : vector<8x32xf32>
      %c0_15 = arith.constant 0 : index
      %c0_16 = arith.constant 0 : index
      %29 = vector.load %arg5[%c0_15, %c0_16] : memref<1x32xf32, #tpu.memory_space<vmem>>, vector<1x32xf32>
      %30 = vector.broadcast %29 : vector<1x32xf32> to vector<8x32xf32>
      %31 = arith.mulf %28, %30 : vector<8x32xf32>
      %c0_17 = arith.constant 0 : index
      %c0_18 = arith.constant 0 : index
      %32 = vector.load %arg6[%c0_17, %c0_18] : memref<1x32xf32, #tpu.memory_space<vmem>>, vector<1x32xf32>
      %33 = vector.broadcast %32 : vector<1x32xf32> to vector<8x32xf32>
      %34 = arith.addf %31, %33 : vector<8x32xf32>
      %35 = arith.truncf %34 : vector<8x32xf32> to vector<8x32xbf16>
      %c0_19 = arith.constant 0 : index
      %c0_20 = arith.constant 0 : index
      %36 = vector.load %arg8[%c0_19, %c0_20] : memref<8x32xbf16, #tpu.memory_space<vmem>>, vector<8x32xbf16>
      tpu.vector_store %arg8[%c0_19, %c0_20], %35 {strides = array<i32>} : memref<8x32xbf16, #tpu.memory_space<vmem>>, vector<8x32xbf16>,
    } else {
    }
    %c0 = arith.constant 0 : index
    %c0_1 = arith.constant 0 : index
    %3 = vector.load %arg8[%c0, %c0_1] : memref<8x32xbf16, #tpu.memory_space<vmem>>, vector<8x32xbf16>
    %c0_2 = arith.constant 0 : index
    %c0_3 = arith.constant 0 : index
    %4 = vector.load %arg3[%c0_2, %c0_3] : memref<32x8xbf16, #tpu.memory_space<vmem>>, vector<32x8xbf16>
    %cst = arith.constant dense<0.000000e+00> : vector<8x8xf32>
    %5 = tpu.matmul %3, %4, %cst {dimension_numbers = #tpu.dot_dimension_numbers<[1], [0], [0], [1], [0, 0, 1, 1], [], []>} : vector<8x32xbf16>, vector<32x8xbf16>, vector<8x8xf32> -> vector<8x8xf32>
    %c0_4 = arith.constant 0 : index
    %c0_5 = arith.constant 0 : index
    %6 = vector.load %arg4[%c0_4, %c0_5] : memref<1x8xf32, #tpu.memory_space<vmem>>, vector<1x8xf32>
    %7 = vector.broadcast %6 : vector<1x8xf32> to vector<8x8xf32>
    %8 = arith.addf %5, %7 : vector<8x8xf32>
    %9 = arith.truncf %8 : vector<8x8xf32> to vector<8x8xbf16>
    %c0_6 = arith.constant 0 : index
    %c0_7 = arith.constant 0 : index
    %10 = vector.load %arg7[%c0_6, %c0_7] : memref<8x8xbf16, #tpu.memory_space<vmem>>, vector<8x8xbf16>
    tpu.vector_store %arg7[%c0_6, %c0_7], %9 {strides = array<i32>} : memref<8x8xbf16, #tpu.memory_space<vmem>>, vector<8x8xbf16>,
    return
  }
  func.func @transform_0(%arg0: i32, %arg1: i32) -> (i32, i32) {
    %c0_i32 = arith.constant 0 : i32
    %c0_i32_0 = arith.constant 0 : i32
    return %arg0, %c0_i32 : i32, i32
  }
  func.func @transform_1(%arg0: i32, %arg1: i32) -> (i32, i32) {
    %c0_i32 = arith.constant 0 : i32
    %c0_i32_0 = arith.constant 0 : i32
    return %c0_i32, %arg1 : i32, i32
  }
  func.func @transform_2(%arg0: i32, %arg1: i32) -> (i32, i32) {
    %c0_i32 = arith.constant 0 : i32
    %c0_i32_0 = arith.constant 0 : i32
    return %c0_i32, %arg1 : i32, i32
  }
  func.func @transform_3(%arg0: i32, %arg1: i32) -> (i32, i32) {
    %c0_i32 = arith.constant 0 : i32
    %c0_i32_0 = arith.constant 0 : i32
    %c0_i32_1 = arith.constant 0 : i32
    return %c0_i32, %c0_i32_0 : i32, i32
  }
  func.func @transform_4(%arg0: i32, %arg1: i32) -> (i32, i32) {
    %c0_i32 = arith.constant 0 : i32
    %c0_i32_0 = arith.constant 0 : i32
    %c0_i32_1 = arith.constant 0 : i32
    return %c0_i32, %c0_i32_0 : i32, i32
  }
  func.func @transform_5(%arg0: i32, %arg1: i32) -> (i32, i32) {
    %c0_i32 = arith.constant 0 : i32
    return %arg0, %arg1 : i32, i32
  }
}

module attributes {stable_mosaic.version = 11 : i64} {
  func.func @_attn_kernel(%arg0: i32, %arg1: memref<1x16x24xbf16, #tpu.memory_space<vmem>>, %arg2: memref<1x16x8xbf16, #tpu.memory_space<vmem>>) attributes {dimension_semantics = [#tpu.dimension_semantics<parallel>], iteration_bounds = array<i64: 2>, scalar_prefetch = 0 : i64, scratch_operands = 0 : i64, tpu.core_type = #tpu.core_type<tc>, window_params = [{transform_indices = @transform_0, window_bounds = array<i64: 1, 16, 24>}, {transform_indices = @transform_1, window_bounds = array<i64: 1, 16, 8>}]} {
    %c0 = arith.constant 0 : index
    %c0_0 = arith.constant 0 : index
    %c0_1 = arith.constant 0 : index
    %0 = vector.load %arg1[%c0, %c0_0, %c0_1] : memref<1x16x24xbf16, #tpu.memory_space<vmem>>, vector<1x16x4xbf16>
    %1 = vector.shape_cast %0 : vector<1x16x4xbf16> to vector<16x4xbf16>
    %c0_2 = arith.constant 0 : index
    %c0_3 = arith.constant 0 : index
    %c8 = arith.constant 8 : index
    %2 = vector.load %arg1[%c0_2, %c0_3, %c8] : memref<1x16x24xbf16, #tpu.memory_space<vmem>>, vector<1x16x4xbf16>
    %3 = vector.shape_cast %2 : vector<1x16x4xbf16> to vector<16x4xbf16>
    %c0_4 = arith.constant 0 : index
    %c0_5 = arith.constant 0 : index
    %c16 = arith.constant 16 : index
    %4 = vector.load %arg1[%c0_4, %c0_5, %c16] : memref<1x16x24xbf16, #tpu.memory_space<vmem>>, vector<1x16x4xbf16>
    %5 = vector.shape_cast %4 : vector<1x16x4xbf16> to vector<16x4xbf16>
    %cst = arith.constant dense<0.000000e+00> : vector<16x16xf32>
    %6 = tpu.matmul %1, %3, %cst {dimension_numbers = #tpu.dot_dimension_numbers<[1], [1], [0], [0], [0, 0, 1, 0], [], []>} : vector<16x4xbf16>, vector<16x4xbf16>, vector<16x16xf32> -> vector<16x16xf32>
    %cst_6 = arith.constant 5.000000e-01 : f32
    %7 = vector.broadcast %cst_6 : f32 to vector<16x16xf32>
    %8 = arith.mulf %6, %7 : vector<16x16xf32>
    %cst_7 = arith.constant dense<0xFF800000> : vector<16xf32>
    %9 = vector.multi_reduction <maximumf>, %8, %cst_7 [1] : vector<16x16xf32> to vector<16xf32>
    %10 = vector.shape_cast %9 : vector<16xf32> to vector<16x1xf32>
    %11 = vector.broadcast %10 : vector<16x1xf32> to vector<16x16xf32>
    %12 = arith.subf %8, %11 : vector<16x16xf32>
    %13 = math.exp %12 : vector<16x16xf32>
    %cst_8 = arith.constant dense<0.000000e+00> : vector<16xf32>
    %14 = vector.multi_reduction <add>, %13, %cst_8 [1] : vector<16x16xf32> to vector<16xf32>
    %15 = vector.shape_cast %14 : vector<16xf32> to vector<16x1xf32>
    %16 = tpu.reciprocal %15 {approx = true} : vector<16x1xf32> -> vector<16x1xf32>
    %17 = vector.broadcast %16 : vector<16x1xf32> to vector<16x16xf32>
    %18 = arith.mulf %13, %17 : vector<16x16xf32>
    %19 = arith.truncf %18 : vector<16x16xf32> to vector<16x16xbf16>
    %cst_9 = arith.constant dense<0.000000e+00> : vector<16x4xf32>
    %20 = tpu.matmul %19, %5, %cst_9 {dimension_numbers = #tpu.dot_dimension_numbers<[1], [0], [0], [1], [0, 0, 1, 1], [], []>} : vector<16x16xbf16>, vector<16x4xbf16>, vector<16x4xf32> -> vector<16x4xf32>
    %21 = arith.truncf %20 : vector<16x4xf32> to vector<16x4xbf16>
    %c0_10 = arith.constant 0 : index
    %c0_11 = arith.constant 0 : index
    %c0_12 = arith.constant 0 : index
    %22 = vector.load %arg2[%c0_10, %c0_11, %c0_12] : memref<1x16x8xbf16, #tpu.memory_space<vmem>>, vector<1x16x4xbf16>
    %23 = vector.shape_cast %22 : vector<1x16x4xbf16> to vector<16x4xbf16>
    %24 = vector.shape_cast %21 : vector<16x4xbf16> to vector<1x16x4xbf16>
    tpu.vector_store %arg2[%c0_10, %c0_11, %c0_12], %24 {strides = array<i32>} : memref<1x16x8xbf16, #tpu.memory_space<vmem>>, vector<1x16x4xbf16>,
    %c0_13 = arith.constant 0 : index
    %c0_14 = arith.constant 0 : index
    %c4 = arith.constant 4 : index
    %25 = vector.load %arg1[%c0_13, %c0_14, %c4] : memref<1x16x24xbf16, #tpu.memory_space<vmem>>, vector<1x16x4xbf16>
    %26 = vector.shape_cast %25 : vector<1x16x4xbf16> to vector<16x4xbf16>
    %c0_15 = arith.constant 0 : index
    %c0_16 = arith.constant 0 : index
    %c12 = arith.constant 12 : index
    %27 = vector.load %arg1[%c0_15, %c0_16, %c12] : memref<1x16x24xbf16, #tpu.memory_space<vmem>>, vector<1x16x4xbf16>
    %28 = vector.shape_cast %27 : vector<1x16x4xbf16> to vector<16x4xbf16>
    %c0_17 = arith.constant 0 : index
    %c0_18 = arith.constant 0 : index
    %c20 = arith.constant 20 : index
    %29 = vector.load %arg1[%c0_17, %c0_18, %c20] : memref<1x16x24xbf16, #tpu.memory_space<vmem>>, vector<1x16x4xbf16>
    %30 = vector.shape_cast %29 : vector<1x16x4xbf16> to vector<16x4xbf16>
    %cst_19 = arith.constant dense<0.000000e+00> : vector<16x16xf32>
    %31 = tpu.matmul %26, %28, %cst_19 {dimension_numbers = #tpu.dot_dimension_numbers<[1], [1], [0], [0], [0, 0, 1, 0], [], []>} : vector<16x4xbf16>, vector<16x4xbf16>, vector<16x16xf32> -> vector<16x16xf32>
    %cst_20 = arith.constant 5.000000e-01 : f32
    %32 = vector.broadcast %cst_20 : f32 to vector<16x16xf32>
    %33 = arith.mulf %31, %32 : vector<16x16xf32>
    %cst_21 = arith.constant dense<0xFF800000> : vector<16xf32>
    %34 = vector.multi_reduction <maximumf>, %33, %cst_21 [1] : vector<16x16xf32> to vector<16xf32>
    %35 = vector.shape_cast %34 : vector<16xf32> to vector<16x1xf32>
    %36 = vector.broadcast %35 : vector<16x1xf32> to vector<16x16xf32>
    %37 = arith.subf %33, %36 : vector<16x16xf32>
    %38 = math.exp %37 : vector<16x16xf32>
    %cst_22 = arith.constant dense<0.000000e+00> : vector<16xf32>
    %39 = vector.multi_reduction <add>, %38, %cst_22 [1] : vector<16x16xf32> to vector<16xf32>
    %40 = vector.shape_cast %39 : vector<16xf32> to vector<16x1xf32>
    %41 = tpu.reciprocal %40 {approx = true} : vector<16x1xf32> -> vector<16x1xf32>
    %42 = vector.broadcast %41 : vector<16x1xf32> to vector<16x16xf32>
    %43 = arith.mulf %38, %42 : vector<16x16xf32>
    %44 = arith.truncf %43 : vector<16x16xf32> to vector<16x16xbf16>
    %cst_23 = arith.constant dense<0.000000e+00> : vector<16x4xf32>
    %45 = tpu.matmul %44, %30, %cst_23 {dimension_numbers = #tpu.dot_dimension_numbers<[1], [0], [0], [1], [0, 0, 1, 1], [], []>} : vector<16x16xbf16>, vector<16x4xbf16>, vector<16x4xf32> -> vector<16x4xf32>
    %46 = arith.truncf %45 : vector<16x4xf32> to vector<16x4xbf16>
    %c0_24 = arith.constant 0 : index
    %c0_25 = arith.constant 0 : index
    %c4_26 = arith.constant 4 : index
    %47 = vector.load %arg2[%c0_24, %c0_25, %c4_26] : memref<1x16x8xbf16, #tpu.memory_space<vmem>>, vector<1x16x4xbf16>
    %48 = vector.shape_cast %47 : vector<1x16x4xbf16> to vector<16x4xbf16>
    %49 = vector.shape_cast %46 : vector<16x4xbf16> to vector<1x16x4xbf16>
    tpu.vector_store %arg2[%c0_24, %c0_25, %c4_26], %49 {strides = array<i32>} : memref<1x16x8xbf16, #tpu.memory_space<vmem>>, vector<1x16x4xbf16>,
    return
  }
  func.func @transform_0(%arg0: i32) -> (i32, i32, i32) {
    %c0_i32 = arith.constant 0 : i32
    %c0_i32_0 = arith.constant 0 : i32
    %c0_i32_1 = arith.constant 0 : i32
    return %arg0, %c0_i32, %c0_i32_0 : i32, i32, i32
  }
  func.func @transform_1(%arg0: i32) -> (i32, i32, i32) {
    %c0_i32 = arith.constant 0 : i32
    %c0_i32_0 = arith.constant 0 : i32
    %c0_i32_1 = arith.constant 0 : i32
    return %arg0, %c0_i32, %c0_i32_0 : i32, i32, i32
  }
}

module attributes {stable_mosaic.version = 11 : i64} {
  func.func @_fused_linear_kernel(%arg0: i32, %arg1: i32, %arg2: memref<32x8xbf16, #tpu.memory_space<vmem>>, %arg3: memref<8x8xbf16, #tpu.memory_space<vmem>>, %arg4: memref<1x8xf32, #tpu.memory_space<vmem>>, %arg5: memref<32x8xbf16, #tpu.memory_space<vmem>>, %arg6: memref<32x8xbf16, #tpu.memory_space<vmem>>) attributes {dimension_semantics = [#tpu.dimension_semantics<parallel>, #tpu.dimension_semantics<parallel>], iteration_bounds = array<i64: 1, 1>, scalar_prefetch = 0 : i64, scratch_operands = 0 : i64, tpu.core_type = #tpu.core_type<tc>, window_params = [{transform_indices = @transform_0, window_bounds = array<i64: 32, 8>}, {transform_indices = @transform_1, window_bounds = array<i64: 8, 8>}, {transform_indices = @transform_2, window_bounds = array<i64: 1, 8>}, {transform_indices = @transform_3, window_bounds = array<i64: 32, 8>}, {transform_indices = @transform_4, window_bounds = array<i64: 32, 8>}]} {
    %c0 = arith.constant 0 : index
    %c0_0 = arith.constant 0 : index
    %0 = vector.load %arg2[%c0, %c0_0] : memref<32x8xbf16, #tpu.memory_space<vmem>>, vector<32x8xbf16>
    %c0_1 = arith.constant 0 : index
    %c0_2 = arith.constant 0 : index
    %1 = vector.load %arg3[%c0_1, %c0_2] : memref<8x8xbf16, #tpu.memory_space<vmem>>, vector<8x8xbf16>
    %cst = arith.constant dense<0.000000e+00> : vector<32x8xf32>
    %2 = tpu.matmul %0, %1, %cst {dimension_numbers = #tpu.dot_dimension_numbers<[1], [0], [0], [1], [0, 0, 1, 1], [], []>} : vector<32x8xbf16>, vector<8x8xbf16>, vector<32x8xf32> -> vector<32x8xf32>
    %c0_3 = arith.constant 0 : index
    %c0_4 = arith.constant 0 : index
    %3 = vector.load %arg4[%c0_3, %c0_4] : memref<1x8xf32, #tpu.memory_space<vmem>>, vector<1x8xf32>
    %4 = vector.broadcast %3 : vector<1x8xf32> to vector<32x8xf32>
    %5 = arith.addf %2, %4 : vector<32x8xf32>
    %c0_5 = arith.constant 0 : index
    %c0_6 = arith.constant 0 : index
    %6 = vector.load %arg5[%c0_5, %c0_6] : memref<32x8xbf16, #tpu.memory_space<vmem>>, vector<32x8xbf16>
    %7 = arith.extf %6 : vector<32x8xbf16> to vector<32x8xf32>
    %8 = arith.addf %5, %7 : vector<32x8xf32>
    %9 = arith.truncf %8 : vector<32x8xf32> to vector<32x8xbf16>
    %c0_7 = arith.constant 0 : index
    %c0_8 = arith.constant 0 : index
    %10 = vector.load %arg6[%c0_7, %c0_8] : memref<32x8xbf16, #tpu.memory_space<vmem>>, vector<32x8xbf16>
    tpu.vector_store %arg6[%c0_7, %c0_8], %9 {strides = array<i32>} : memref<32x8xbf16, #tpu.memory_space<vmem>>, vector<32x8xbf16>,
    return
  }
  func.func @transform_0(%arg0: i32, %arg1: i32) -> (i32, i32) {
    %c0_i32 = arith.constant 0 : i32
    %c0_i32_0 = arith.constant 0 : i32
    return %arg0, %c0_i32 : i32, i32
  }
  func.func @transform_1(%arg0: i32, %arg1: i32) -> (i32, i32) {
    %c0_i32 = arith.constant 0 : i32
    %c0_i32_0 = arith.constant 0 : i32
    return %c0_i32, %arg1 : i32, i32
  }
  func.func @transform_2(%arg0: i32, %arg1: i32) -> (i32, i32) {
    %c0_i32 = arith.constant 0 : i32
    %c0_i32_0 = arith.constant 0 : i32
    return %c0_i32, %arg1 : i32, i32
  }
  func.func @transform_3(%arg0: i32, %arg1: i32) -> (i32, i32) {
    %c0_i32 = arith.constant 0 : i32
    return %arg0, %arg1 : i32, i32
  }
  func.func @transform_4(%arg0: i32, %arg1: i32) -> (i32, i32) {
    %c0_i32 = arith.constant 0 : i32
    return %arg0, %arg1 : i32, i32
  }
}

module attributes {stable_mosaic.version = 11 : i64} {
  func.func @_fused_linear_kernel(%arg0: i32, %arg1: i32, %arg2: memref<32x8xbf16, #tpu.memory_space<vmem>>, %arg3: memref<8x24xbf16, #tpu.memory_space<vmem>>, %arg4: memref<1x24xf32, #tpu.memory_space<vmem>>, %arg5: memref<1x8xf32, #tpu.memory_space<vmem>>, %arg6: memref<1x8xf32, #tpu.memory_space<vmem>>, %arg7: memref<32x24xbf16, #tpu.memory_space<vmem>>, %arg8: memref<32x8xbf16, #tpu.memory_space<vmem>>) attributes {dimension_semantics = [#tpu.dimension_semantics<parallel>, #tpu.dimension_semantics<arbitrary>], iteration_bounds = array<i64: 1, 1>, scalar_prefetch = 0 : i64, scratch_operands = 1 : i64, tpu.core_type = #tpu.core_type<tc>, window_params = [{transform_indices = @transform_0, window_bounds = array<i64: 32, 8>}, {transform_indices = @transform_1, window_bounds = array<i64: 8, 24>}, {transform_indices = @transform_2, window_bounds = array<i64: 1, 24>}, {pipeline_mode = #tpu.pipeline_mode<synchronous>, transform_indices = @transform_3, window_bounds = array<i64: 1, 8>}, {pipeline_mode = #tpu.pipeline_mode<synchronous>, transform_indices = @transform_4, window_bounds = array<i64: 1, 8>}, {transform_indices = @transform_5, window_bounds = array<i64: 32, 24>}]} {
    %c0_i32 = arith.constant 0 : i32
    %0 = arith.cmpi eq, %arg1, %c0_i32 : i32
    %1 = arith.extui %0 : i1 to i32
    %c0_i32_0 = arith.constant 0 : i32
    %2 = arith.cmpi ne, %1, %c0_i32_0 : i32
    scf.if %2 {
      %c0_8 = arith.constant 0 : index
      %c0_9 = arith.constant 0 : index
      %11 = vector.load %arg2[%c0_8, %c0_9] : memref<32x8xbf16, #tpu.memory_space<vmem>>, vector<32x8xbf16>
      %12 = arith.extf %11 : vector<32x8xbf16> to vector<32x8xf32>
      %cst_10 = arith.constant dense<0.000000e+00> : vector<32xf32>
      %13 = vector.multi_reduction <add>, %12, %cst_10 [1] : vector<32x8xf32> to vector<32xf32>
      %14 = vector.shape_cast %13 : vector<32xf32> to vector<32x1xf32>
      %cst_11 = arith.constant 8.000000e+00 : f32
      %15 = vector.broadcast %cst_11 : f32 to vector<32x1xf32>
      %16 = arith.divf %14, %15 : vector<32x1xf32>
      %17 = vector.broadcast %16 : vector<32x1xf32> to vector<32x8xf32>
      %18 = arith.subf %12, %17 : vector<32x8xf32>
      %19 = arith.mulf %18, %18 : vector<32x8xf32>
      %cst_12 = arith.constant dense<0.000000e+00> : vector<32xf32>
      %20 = vector.multi_reduction <add>, %19, %cst_12 [1] : vector<32x8xf32> to vector<32xf32>
      %21 = vector.shape_cast %20 : vector<32xf32> to vector<32x1xf32>
      %cst_13 = arith.constant 8.000000e+00 : f32
      %22 = vector.broadcast %cst_13 : f32 to vector<32x1xf32>
      %23 = arith.divf %21, %22 : vector<32x1xf32>
      %cst_14 = arith.constant 9.99999997E-7 : f32
      %24 = vector.broadcast %cst_14 : f32 to vector<32x1xf32>
      %25 = arith.addf %23, %24 : vector<32x1xf32>
      %26 = math.rsqrt %25 : vector<32x1xf32>
      %27 = vector.broadcast %26 : vector<32x1xf32> to vector<32x8xf32>
      %28 = arith.mulf %18, %27 : vector<32x8xf32>
      %c0_15 = arith.constant 0 : index
      %c0_16 = arith.constant 0 : index
      %29 = vector.load %arg5[%c0_15, %c0_16] : memref<1x8xf32, #tpu.memory_space<vmem>>, vector<1x8xf32>
      %30 = vector.broadcast %29 : vector<1x8xf32> to vector<32x8xf32>
      %31 = arith.mulf %28, %30 : vector<32x8xf32>
      %c0_17 = arith.constant 0 : index
      %c0_18 = arith.constant 0 : index
      %32 = vector.load %arg6[%c0_17, %c0_18] : memref<1x8xf32, #tpu.memory_space<vmem>>, vector<1x8xf32>
      %33 = vector.broadcast %32 : vector<1x8xf32> to vector<32x8xf32>
      %34 = arith.addf %31, %33 : vector<32x8xf32>
      %35 = arith.truncf %34 : vector<32x8xf32> to vector<32x8xbf16>
      %c0_19 = arith.constant 0 : index
      %c0_20 = arith.constant 0 : index
      %36 = vector.load %arg8[%c0_19, %c0_20] : memref<32x8xbf16, #tpu.memory_space<vmem>>, vector<32x8xbf16>
      tpu.vector_store %arg8[%c0_19, %c0_20], %35 {strides = array<i32>} : memref<32x8xbf16, #tpu.memory_space<vmem>>, vector<32x8xbf16>,
    } else {
    }
    %c0 = arith.constant 0 : index
    %c0_1 = arith.constant 0 : index
    %3 = vector.load %arg8[%c0, %c0_1] : memref<32x8xbf16, #tpu.memory_space<vmem>>, vector<32x8xbf16>
    %c0_2 = arith.constant 0 : index
    %c0_3 = arith.constant 0 : index
    %4 = vector.load %arg3[%c0_2, %c0_3] : memref<8x24xbf16, #tpu.memory_space<vmem>>, vector<8x24xbf16>
    %cst = arith.constant dense<0.000000e+00> : vector<32x24xf32>
    %5 = tpu.matmul %3, %4, %cst {dimension_numbers = #tpu.dot_dimension_numbers<[1], [0], [0], [1], [0, 0, 1, 1], [], []>} : vector<32x8xbf16>, vector<8x24xbf16>, vector<32x24xf32> -> vector<32x24xf32>
    %c0_4 = arith.constant 0 : index
    %c0_5 = arith.constant 0 : index
    %6 = vector.load %arg4[%c0_4, %c0_5] : memref<1x24xf32, #tpu.memory_space<vmem>>, vector<1x24xf32>
    %7 = vector.broadcast %6 : vector<1x24xf32> to vector<32x24xf32>
    %8 = arith.addf %5, %7 : vector<32x24xf32>
    %9 = arith.truncf %8 : vector<32x24xf32> to vector<32x24xbf16>
    %c0_6 = arith.constant 0 : index
    %c0_7 = arith.constant 0 : index
    %10 = vector.load %arg7[%c0_6, %c0_7] : memref<32x24xbf16, #tpu.memory_space<vmem>>, vector<32x24xbf16>
    tpu.vector_store %arg7[%c0_6, %c0_7], %9 {strides = array<i32>} : memref<32x24xbf16, #tpu.memory_space<vmem>>, vector<32x24xbf16>,
    return
  }
  func.func @transform_0(%arg0: i32, %arg1: i32) -> (i32, i32) {
    %c0_i32 = arith.constant 0 : i32
    %c0_i32_0 = arith.constant 0 : i32
    return %arg0, %c0_i32 : i32, i32
  }
  func.func @transform_1(%arg0: i32, %arg1: i32) -> (i32, i32) {
    %c0_i32 = arith.constant 0 : i32
    %c0_i32_0 = arith.constant 0 : i32
    return %c0_i32, %arg1 : i32, i32
  }
  func.func @transform_2(%arg0: i32, %arg1: i32) -> (i32, i32) {
    %c0_i32 = arith.constant 0 : i32
    %c0_i32_0 = arith.constant 0 : i32
    return %c0_i32, %arg1 : i32, i32
  }
  func.func @transform_3(%arg0: i32, %arg1: i32) -> (i32, i32) {
    %c0_i32 = arith.constant 0 : i32
    %c0_i32_0 = arith.constant 0 : i32
    %c0_i32_1 = arith.constant 0 : i32
    return %c0_i32, %c0_i32_0 : i32, i32
  }
  func.func @transform_4(%arg0: i32, %arg1: i32) -> (i32, i32) {
    %c0_i32 = arith.constant 0 : i32
    %c0_i32_0 = arith.constant 0 : i32
    %c0_i32_1 = arith.constant 0 : i32
    return %c0_i32, %c0_i32_0 : i32, i32
  }
  func.func @transform_5(%arg0: i32, %arg1: i32) -> (i32, i32) {
    %c0_i32 = arith.constant 0 : i32
    return %arg0, %arg1 : i32, i32
  }
}

module attributes {stable_mosaic.version = 11 : i64} {
  func.func @_fused_linear_kernel(%arg0: i32, %arg1: i32, %arg2: memref<32x8xbf16, #tpu.memory_space<vmem>>, %arg3: memref<8x32xbf16, #tpu.memory_space<vmem>>, %arg4: memref<1x32xf32, #tpu.memory_space<vmem>>, %arg5: memref<1x8xf32, #tpu.memory_space<vmem>>, %arg6: memref<1x8xf32, #tpu.memory_space<vmem>>, %arg7: memref<32x32xbf16, #tpu.memory_space<vmem>>, %arg8: memref<32x8xbf16, #tpu.memory_space<vmem>>) attributes {dimension_semantics = [#tpu.dimension_semantics<parallel>, #tpu.dimension_semantics<arbitrary>], iteration_bounds = array<i64: 1, 1>, scalar_prefetch = 0 : i64, scratch_operands = 1 : i64, tpu.core_type = #tpu.core_type<tc>, window_params = [{transform_indices = @transform_0, window_bounds = array<i64: 32, 8>}, {transform_indices = @transform_1, window_bounds = array<i64: 8, 32>}, {transform_indices = @transform_2, window_bounds = array<i64: 1, 32>}, {pipeline_mode = #tpu.pipeline_mode<synchronous>, transform_indices = @transform_3, window_bounds = array<i64: 1, 8>}, {pipeline_mode = #tpu.pipeline_mode<synchronous>, transform_indices = @transform_4, window_bounds = array<i64: 1, 8>}, {transform_indices = @transform_5, window_bounds = array<i64: 32, 32>}]} {
    %c0_i32 = arith.constant 0 : i32
    %0 = arith.cmpi eq, %arg1, %c0_i32 : i32
    %1 = arith.extui %0 : i1 to i32
    %c0_i32_0 = arith.constant 0 : i32
    %2 = arith.cmpi ne, %1, %c0_i32_0 : i32
    scf.if %2 {
      %c0_23 = arith.constant 0 : index
      %c0_24 = arith.constant 0 : index
      %51 = vector.load %arg2[%c0_23, %c0_24] : memref<32x8xbf16, #tpu.memory_space<vmem>>, vector<32x8xbf16>
      %52 = arith.extf %51 : vector<32x8xbf16> to vector<32x8xf32>
      %cst_25 = arith.constant dense<0.000000e+00> : vector<32xf32>
      %53 = vector.multi_reduction <add>, %52, %cst_25 [1] : vector<32x8xf32> to vector<32xf32>
      %54 = vector.shape_cast %53 : vector<32xf32> to vector<32x1xf32>
      %cst_26 = arith.constant 8.000000e+00 : f32
      %55 = vector.broadcast %cst_26 : f32 to vector<32x1xf32>
      %56 = arith.divf %54, %55 : vector<32x1xf32>
      %57 = vector.broadcast %56 : vector<32x1xf32> to vector<32x8xf32>
      %58 = arith.subf %52, %57 : vector<32x8xf32>
      %59 = arith.mulf %58, %58 : vector<32x8xf32>
      %cst_27 = arith.constant dense<0.000000e+00> : vector<32xf32>
      %60 = vector.multi_reduction <add>, %59, %cst_27 [1] : vector<32x8xf32> to vector<32xf32>
      %61 = vector.shape_cast %60 : vector<32xf32> to vector<32x1xf32>
      %cst_28 = arith.constant 8.000000e+00 : f32
      %62 = vector.broadcast %cst_28 : f32 to vector<32x1xf32>
      %63 = arith.divf %61, %62 : vector<32x1xf32>
      %cst_29 = arith.constant 9.99999997E-7 : f32
      %64 = vector.broadcast %cst_29 : f32 to vector<32x1xf32>
      %65 = arith.addf %63, %64 : vector<32x1xf32>
      %66 = math.rsqrt %65 : vector<32x1xf32>
      %67 = vector.broadcast %66 : vector<32x1xf32> to vector<32x8xf32>
      %68 = arith.mulf %58, %67 : vector<32x8xf32>
      %c0_30 = arith.constant 0 : index
      %c0_31 = arith.constant 0 : index
      %69 = vector.load %arg5[%c0_30, %c0_31] : memref<1x8xf32, #tpu.memory_space<vmem>>, vector<1x8xf32>
      %70 = vector.broadcast %69 : vector<1x8xf32> to vector<32x8xf32>
      %71 = arith.mulf %68, %70 : vector<32x8xf32>
      %c0_32 = arith.constant 0 : index
      %c0_33 = arith.constant 0 : index
      %72 = vector.load %arg6[%c0_32, %c0_33] : memref<1x8xf32, #tpu.memory_space<vmem>>, vector<1x8xf32>
      %73 = vector.broadcast %72 : vector<1x8xf32> to vector<32x8xf32>
      %74 = arith.addf %71, %73 : vector<32x8xf32>
      %75 = arith.truncf %74 : vector<32x8xf32> to vector<32x8xbf16>
      %c0_34 = arith.constant 0 : index
      %c0_35 = arith.constant 0 : index
      %76 = vector.load %arg8[%c0_34, %c0_35] : memref<32x8xbf16, #tpu.memory_space<vmem>>, vector<32x8xbf16>
      tpu.vector_store %arg8[%c0_34, %c0_35], %75 {strides = array<i32>} : memref<32x8xbf16, #tpu.memory_space<vmem>>, vector<32x8xbf16>,
    } else {
    }
    %c0 = arith.constant 0 : index
    %c0_1 = arith.constant 0 : index
    %3 = vector.load %arg8[%c0, %c0_1] : memref<32x8xbf16, #tpu.memory_space<vmem>>, vector<32x8xbf16>
    %c0_2 = arith.constant 0 : index
    %c0_3 = arith.constant 0 : index
    %4 = vector.load %arg3[%c0_2, %c0_3] : memref<8x32xbf16, #tpu.memory_space<vmem>>, vector<8x32xbf16>
    %cst = arith.constant dense<0.000000e+00> : vector<32x32xf32>
    %5 = tpu.matmul %3, %4, %cst {dimension_numbers = #tpu.dot_dimension_numbers<[1], [0], [0], [1], [0, 0, 1, 1], [], []>} : vector<32x8xbf16>, vector<8x32xbf16>, vector<32x32xf32> -> vector<32x32xf32>
    %c0_4 = arith.constant 0 : index
    %c0_5 = arith.constant 0 : index
    %6 = vector.load %arg4[%c0_4, %c0_5] : memref<1x32xf32, #tpu.memory_space<vmem>>, vector<1x32xf32>
    %7 = vector.broadcast %6 : vector<1x32xf32> to vector<32x32xf32>
    %8 = arith.addf %5, %7 : vector<32x32xf32>
    %cst_6 = arith.constant 0.707106769 : f32
    %9 = vector.broadcast %cst_6 : f32 to vector<32x32xf32>
    %10 = arith.mulf %8, %9 : vector<32x32xf32>
    %11 = math.absf %10 : vector<32x32xf32>
    %cst_7 = arith.constant 0.327591091 : f32
    %12 = vector.broadcast %cst_7 : f32 to vector<32x32xf32>
    %13 = arith.mulf %12, %11 : vector<32x32xf32>
    %cst_8 = arith.constant 1.000000e+00 : f32
    %14 = vector.broadcast %cst_8 : f32 to vector<32x32xf32>
    %15 = arith.addf %14, %13 : vector<32x32xf32>
    %cst_9 = arith.constant 1.000000e+00 : f32
    %16 = vector.broadcast %cst_9 : f32 to vector<32x32xf32>
    %17 = arith.divf %16, %15 : vector<32x32xf32>
    %cst_10 = arith.constant 1.06140542 : f32
    %18 = vector.broadcast %cst_10 : f32 to vector<32x32xf32>
    %19 = arith.mulf %18, %17 : vector<32x32xf32>
    %cst_11 = arith.constant 1.45315206 : f32
    %20 = vector.broadcast %cst_11 : f32 to vector<32x32xf32>
    %21 = arith.subf %19, %20 : vector<32x32xf32>
    %22 = arith.mulf %21, %17 : vector<32x32xf32>
    %cst_12 = arith.constant 1.42141378 : f32
    %23 = vector.broadcast %cst_12 : f32 to vector<32x32xf32>
    %24 = arith.addf %22, %23 : vector<32x32xf32>
    %25 = arith.mulf %24, %17 : vector<32x32xf32>
    %cst_13 = arith.constant 0.284496725 : f32
    %26 = vector.broadcast %cst_13 : f32 to vector<32x32xf32>
    %27 = arith.subf %25, %26 : vector<32x32xf32>
    %28 = arith.mulf %27, %17 : vector<32x32xf32>
    %cst_14 = arith.constant 0.254829586 : f32
    %29 = vector.broadcast %cst_14 : f32 to vector<32x32xf32>
    %30 = arith.addf %28, %29 : vector<32x32xf32>
    %31 = arith.mulf %30, %17 : vector<32x32xf32>
    %cst_15 = arith.constant 0.000000e+00 : f32
    %32 = vector.broadcast %cst_15 : f32 to vector<32x32xf32>
    %33 = arith.subf %32, %11 : vector<32x32xf32>
    %34 = arith.mulf %33, %11 : vector<32x32xf32>
    %35 = math.exp %34 : vector<32x32xf32>
    %36 = arith.mulf %31, %35 : vector<32x32xf32>
    %cst_16 = arith.constant 1.000000e+00 : f32
    %37 = vector.broadcast %cst_16 : f32 to vector<32x32xf32>
    %38 = arith.subf %37, %36 : vector<32x32xf32>
    %cst_17 = arith.constant 0.000000e+00 : f32
    %39 = vector.broadcast %cst_17 : f32 to vector<32x32xf32>
    %40 = arith.cmpf oge, %10, %39 : vector<32x32xf32>
    %cst_18 = arith.constant 0.000000e+00 : f32
    %41 = vector.broadcast %cst_18 : f32 to vector<32x32xf32>
    %42 = arith.subf %41, %38 : vector<32x32xf32>
    %43 = arith.select %40, %38, %42 : vector<32x32xi1>, vector<32x32xf32>
    %cst_19 = arith.constant 5.000000e-01 : f32
    %44 = vector.broadcast %cst_19 : f32 to vector<32x32xf32>
    %45 = arith.mulf %44, %8 : vector<32x32xf32>
    %cst_20 = arith.constant 1.000000e+00 : f32
    %46 = vector.broadcast %cst_20 : f32 to vector<32x32xf32>
    %47 = arith.addf %46, %43 : vector<32x32xf32>
    %48 = arith.mulf %45, %47 : vector<32x32xf32>
    %49 = arith.truncf %48 : vector<32x32xf32> to vector<32x32xbf16>
    %c0_21 = arith.constant 0 : index
    %c0_22 = arith.constant 0 : index
    %50 = vector.load %arg7[%c0_21, %c0_22] : memref<32x32xbf16, #tpu.memory_space<vmem>>, vector<32x32xbf16>
    tpu.vector_store %arg7[%c0_21, %c0_22], %49 {strides = array<i32>} : memref<32x32xbf16, #tpu.memory_space<vmem>>, vector<32x32xbf16>,
    return
  }
  func.func @transform_0(%arg0: i32, %arg1: i32) -> (i32, i32) {
    %c0_i32 = arith.constant 0 : i32
    %c0_i32_0 = arith.constant 0 : i32
    return %arg0, %c0_i32 : i32, i32
  }
  func.func @transform_1(%arg0: i32, %arg1: i32) -> (i32, i32) {
    %c0_i32 = arith.constant 0 : i32
    %c0_i32_0 = arith.constant 0 : i32
    return %c0_i32, %arg1 : i32, i32
  }
  func.func @transform_2(%arg0: i32, %arg1: i32) -> (i32, i32) {
    %c0_i32 = arith.constant 0 : i32
    %c0_i32_0 = arith.constant 0 : i32
    return %c0_i32, %arg1 : i32, i32
  }
  func.func @transform_3(%arg0: i32, %arg1: i32) -> (i32, i32) {
    %c0_i32 = arith.constant 0 : i32
    %c0_i32_0 = arith.constant 0 : i32
    %c0_i32_1 = arith.constant 0 : i32
    return %c0_i32, %c0_i32_0 : i32, i32
  }
  func.func @transform_4(%arg0: i32, %arg1: i32) -> (i32, i32) {
    %c0_i32 = arith.constant 0 : i32
    %c0_i32_0 = arith.constant 0 : i32
    %c0_i32_1 = arith.constant 0 : i32
    return %c0_i32, %c0_i32_0 : i32, i32
  }
  func.func @transform_5(%arg0: i32, %arg1: i32) -> (i32, i32) {
    %c0_i32 = arith.constant 0 : i32
    return %arg0, %arg1 : i32, i32
  }
}

module attributes {stable_mosaic.version = 11 : i64} {
  func.func @_fused_linear_kernel(%arg0: i32, %arg1: i32, %arg2: memref<32x32xbf16, #tpu.memory_space<vmem>>, %arg3: memref<32x8xbf16, #tpu.memory_space<vmem>>, %arg4: memref<1x8xf32, #tpu.memory_space<vmem>>, %arg5: memref<32x8xbf16, #tpu.memory_space<vmem>>, %arg6: memref<32x8xbf16, #tpu.memory_space<vmem>>) attributes {dimension_semantics = [#tpu.dimension_semantics<parallel>, #tpu.dimension_semantics<parallel>], iteration_bounds = array<i64: 1, 1>, scalar_prefetch = 0 : i64, scratch_operands = 0 : i64, tpu.core_type = #tpu.core_type<tc>, window_params = [{transform_indices = @transform_0, window_bounds = array<i64: 32, 32>}, {transform_indices = @transform_1, window_bounds = array<i64: 32, 8>}, {transform_indices = @transform_2, window_bounds = array<i64: 1, 8>}, {transform_indices = @transform_3, window_bounds = array<i64: 32, 8>}, {transform_indices = @transform_4, window_bounds = array<i64: 32, 8>}]} {
    %c0 = arith.constant 0 : index
    %c0_0 = arith.constant 0 : index
    %0 = vector.load %arg2[%c0, %c0_0] : memref<32x32xbf16, #tpu.memory_space<vmem>>, vector<32x32xbf16>
    %c0_1 = arith.constant 0 : index
    %c0_2 = arith.constant 0 : index
    %1 = vector.load %arg3[%c0_1, %c0_2] : memref<32x8xbf16, #tpu.memory_space<vmem>>, vector<32x8xbf16>
    %cst = arith.constant dense<0.000000e+00> : vector<32x8xf32>
    %2 = tpu.matmul %0, %1, %cst {dimension_numbers = #tpu.dot_dimension_numbers<[1], [0], [0], [1], [0, 0, 1, 1], [], []>} : vector<32x32xbf16>, vector<32x8xbf16>, vector<32x8xf32> -> vector<32x8xf32>
    %c0_3 = arith.constant 0 : index
    %c0_4 = arith.constant 0 : index
    %3 = vector.load %arg4[%c0_3, %c0_4] : memref<1x8xf32, #tpu.memory_space<vmem>>, vector<1x8xf32>
    %4 = vector.broadcast %3 : vector<1x8xf32> to vector<32x8xf32>
    %5 = arith.addf %2, %4 : vector<32x8xf32>
    %c0_5 = arith.constant 0 : index
    %c0_6 = arith.constant 0 : index
    %6 = vector.load %arg5[%c0_5, %c0_6] : memref<32x8xbf16, #tpu.memory_space<vmem>>, vector<32x8xbf16>
    %7 = arith.extf %6 : vector<32x8xbf16> to vector<32x8xf32>
    %8 = arith.addf %5, %7 : vector<32x8xf32>
    %9 = arith.truncf %8 : vector<32x8xf32> to vector<32x8xbf16>
    %c0_7 = arith.constant 0 : index
    %c0_8 = arith.constant 0 : index
    %10 = vector.load %arg6[%c0_7, %c0_8] : memref<32x8xbf16, #tpu.memory_space<vmem>>, vector<32x8xbf16>
    tpu.vector_store %arg6[%c0_7, %c0_8], %9 {strides = array<i32>} : memref<32x8xbf16, #tpu.memory_space<vmem>>, vector<32x8xbf16>,
    return
  }
  func.func @transform_0(%arg0: i32, %arg1: i32) -> (i32, i32) {
    %c0_i32 = arith.constant 0 : i32
    %c0_i32_0 = arith.constant 0 : i32
    return %arg0, %c0_i32 : i32, i32
  }
  func.func @transform_1(%arg0: i32, %arg1: i32) -> (i32, i32) {
    %c0_i32 = arith.constant 0 : i32
    %c0_i32_0 = arith.constant 0 : i32
    return %c0_i32, %arg1 : i32, i32
  }
  func.func @transform_2(%arg0: i32, %arg1: i32) -> (i32, i32) {
    %c0_i32 = arith.constant 0 : i32
    %c0_i32_0 = arith.constant 0 : i32
    return %c0_i32, %arg1 : i32, i32
  }
  func.func @transform_3(%arg0: i32, %arg1: i32) -> (i32, i32) {
    %c0_i32 = arith.constant 0 : i32
    return %arg0, %arg1 : i32, i32
  }
  func.func @transform_4(%arg0: i32, %arg1: i32) -> (i32, i32) {
    %c0_i32 = arith.constant 0 : i32
    return %arg0, %arg1 : i32, i32
  }
}

module attributes {stable_mosaic.version = 11 : i64} {
  func.func @_fused_linear_kernel(%arg0: i32, %arg1: i32, %arg2: memref<32x8xbf16, #tpu.memory_space<vmem>>, %arg3: memref<8x48xbf16, #tpu.memory_space<vmem>>, %arg4: memref<1x48xf32, #tpu.memory_space<vmem>>, %arg5: memref<32x48xf32, #tpu.memory_space<vmem>>) attributes {dimension_semantics = [#tpu.dimension_semantics<parallel>, #tpu.dimension_semantics<parallel>], iteration_bounds = array<i64: 1, 1>, scalar_prefetch = 0 : i64, scratch_operands = 0 : i64, tpu.core_type = #tpu.core_type<tc>, window_params = [{transform_indices = @transform_0, window_bounds = array<i64: 32, 8>}, {transform_indices = @transform_1, window_bounds = array<i64: 8, 48>}, {transform_indices = @transform_2, window_bounds = array<i64: 1, 48>}, {transform_indices = @transform_3, window_bounds = array<i64: 32, 48>}]} {
    %c0 = arith.constant 0 : index
    %c0_0 = arith.constant 0 : index
    %0 = vector.load %arg2[%c0, %c0_0] : memref<32x8xbf16, #tpu.memory_space<vmem>>, vector<32x8xbf16>
    %c0_1 = arith.constant 0 : index
    %c0_2 = arith.constant 0 : index
    %1 = vector.load %arg3[%c0_1, %c0_2] : memref<8x48xbf16, #tpu.memory_space<vmem>>, vector<8x48xbf16>
    %cst = arith.constant dense<0.000000e+00> : vector<32x48xf32>
    %2 = tpu.matmul %0, %1, %cst {dimension_numbers = #tpu.dot_dimension_numbers<[1], [0], [0], [1], [0, 0, 1, 1], [], []>} : vector<32x8xbf16>, vector<8x48xbf16>, vector<32x48xf32> -> vector<32x48xf32>
    %c0_3 = arith.constant 0 : index
    %c0_4 = arith.constant 0 : index
    %3 = vector.load %arg4[%c0_3, %c0_4] : memref<1x48xf32, #tpu.memory_space<vmem>>, vector<1x48xf32>
    %4 = vector.broadcast %3 : vector<1x48xf32> to vector<32x48xf32>
    %5 = arith.addf %2, %4 : vector<32x48xf32>
    %c0_5 = arith.constant 0 : index
    %c0_6 = arith.constant 0 : index
    %6 = vector.load %arg5[%c0_5, %c0_6] : memref<32x48xf32, #tpu.memory_space<vmem>>, vector<32x48xf32>
    tpu.vector_store %arg5[%c0_5, %c0_6], %5 {strides = array<i32>} : memref<32x48xf32, #tpu.memory_space<vmem>>, vector<32x48xf32>,
    return
  }
  func.func @transform_0(%arg0: i32, %arg1: i32) -> (i32, i32) {
    %c0_i32 = arith.constant 0 : i32
    %c0_i32_0 = arith.constant 0 : i32
    return %arg0, %c0_i32 : i32, i32
  }
  func.func @transform_1(%arg0: i32, %arg1: i32) -> (i32, i32) {
    %c0_i32 = arith.constant 0 : i32
    %c0_i32_0 = arith.constant 0 : i32
    return %c0_i32, %arg1 : i32, i32
  }
  func.func @transform_2(%arg0: i32, %arg1: i32) -> (i32, i32) {
    %c0_i32 = arith.constant 0 : i32
    %c0_i32_0 = arith.constant 0 : i32
    return %c0_i32, %arg1 : i32, i32
  }
  func.func @transform_3(%arg0: i32, %arg1: i32) -> (i32, i32) {
    %c0_i32 = arith.constant 0 : i32
    return %arg0, %arg1 : i32, i32
  }
}

</mosaic_0001>

<llo_original>
// kernel: mae_forward.19
$region0: #{mae_forward.19}
  #allocation0 [shape = 'u32[]', space=smem, size = 0x4, offset = 0x4, fixed_abs, tag = 'smem constant byte address 0x4 - core index']
  #allocation1 [shape = 'u32[144,128]{1,0:T(1,128)}', space=vmem, size = 0x12000, scoped, tag = 'internal scratch']
  #allocation2 [shape = 'bf16[8,32]{1,0:T(8,128)(2,1)}', space=vmem, size = 0x800, scoped, tag = 'scratch operand']
  %s0 = inlined_call_operand.vmem [shape: bf16[8,32], index: 0, kind: input, shape index: {}]
  %s1 = inlined_call_operand.vmem [shape: bf16[32,96], index: 1, kind: input, shape index: {}]
  %s2 = inlined_call_operand.vmem [shape: f32[1,96], index: 2, kind: input, shape index: {}]
  %s3 = inlined_call_operand.vmem [shape: f32[1,32], index: 3, kind: input, shape index: {}]
  %s4 = inlined_call_operand.vmem [shape: f32[1,32], index: 4, kind: input, shape index: {}]
  %s5 = inlined_call_operand.vmem [shape: bf16[8,96], index: 5, kind: output, shape index: {}]
  %s6 = sld [smem:[#allocation0]]
  $region34: #{mae_forward.19} parent=0
    _
  %s8 = ssub.s32 1, %s6
  %s9 = scalar_select 0, %s8, %s6
  // Predicated region
  $region2: #{mae_forward.19} parent=0 // pred_check
    _
  $region3: #{mae_forward.19} parent=0 // pred_check_branch
    %11 = sbr.rel (0) target = $region5
  $region4: #{mae_forward.19} parent=0 // pred_region
    _
  $region5: #{mae_forward.19} parent=0 // pred_fallthru
    _
  // Predicated region
  $region6: #{mae_forward.19} parent=0 // pred_check
    _
  $region7: #{mae_forward.19} parent=0 // pred_check_branch
    %13 = sbr.rel (0) target = $region9
  $region8: #{mae_forward.19} parent=0 // pred_region
    _
  $region9: #{mae_forward.19} parent=0 // pred_fallthru
    _
  // Predicated region
  $region10: #{mae_forward.19} parent=0 // pred_check
    _
  $region11: #{mae_forward.19} parent=0 // pred_check_branch
    %15 = sbr.rel (0) target = $region13
  $region12: #{mae_forward.19} parent=0 // pred_region
    _
  $region13: #{mae_forward.19} parent=0 // pred_fallthru
    _
  // Predicated region
  $region14: #{mae_forward.19} parent=0 // pred_check
    _
  $region15: #{mae_forward.19} parent=0 // pred_check_branch
    %17 = sbr.rel (0) target = $region17
  $region16: #{mae_forward.19} parent=0 // pred_region
    _
  $region17: #{mae_forward.19} parent=0 // pred_fallthru
    _
  // Predicated region
  $region18: #{mae_forward.19} parent=0 // pred_check
    _
  $region19: #{mae_forward.19} parent=0 // pred_check_branch
    %19 = sbr.rel (0) target = $region21
  $region20: #{mae_forward.19} parent=0 // pred_region
    _
  $region21: #{mae_forward.19} parent=0 // pred_fallthru
    _
  %p21 = scmp.eq.s32.totalorder 0, 0
  // Predicated region
  $region22: #{mae_forward.19} parent=0 // pred_check
    %p22 = pneg %p21
  $region23: #{mae_forward.19} parent=0 // pred_check_branch
    %24 = sbr.rel (%p22) target = $region25
  $region24: #{mae_forward.19} parent=0 // pred_region
    %v25 = vld [vmem:[%s0] sm:$0xf]
    %v26 = vunpack.c.l.bf16 %v25
    %vm27 = vcmask 261120
    %v28 = vsel %vm27, %v26, 0.0
    %29 = vadd.xlane.f32.xlu0 %v28
    %v30 = vpop.xlane.xlu0 %29
    %v31 = vrcp.pop 32.0
    %v32 = vmul.f32 %v30, %v31
    %v33 = vsub.f32 %v26, %v32
    %v34 = vmul.f32 %v33, %v33
    %v35 = vsel %vm27, %v34, 0.0
    %36 = vadd.xlane.f32.xlu0 %v35
    %v37 = vpop.xlane.xlu0 %36
    %v38 = vmul.f32 %v37, %v31
    %v39 = vadd.f32 %v38, 1e-06
    %v40 = vrsqrt.pop %v39
    %v41 = vmul.f32 %v33, %v40
    %v42 = vld [vmem:[%s3] sm:$0x1]
    %v44 = vlaneseq
    %v45 = vshrl.u32 %v44, 7
    %v46 = vsub.s32 0, %v45
    %v47 = vrot.slane %v42, %v46
    %v49 = vmul.f32 %v41, %v47
    %v50 = vld [vmem:[%s4] sm:$0x1]
    %v52 = vlaneseq
    %v53 = vshrl.u32 %v52, 7
    %v54 = vsub.s32 0, %v53
    %v55 = vrot.slane %v50, %v54
    %v57 = vadd.f32 %v49, %v55
    %v58 = vpack.c.bf16 %v57, %v57
    %vm59 = vcmask 257024
    %60 = vst.msk [vmem:[#allocation2] sm:$0xf] %vm59, %v58
  $region25: #{mae_forward.19} parent=0 // pred_fallthru
    _
  %v61 = vld [vmem:[#allocation2] sm:$0xf]
  %v62 = vld [vmem:[%s1] sm:$0xf]
  %v63 = vld [vmem:[%s1 + $0x4] sm:$0xf]
  %v64 = vld [vmem:[%s1 + $0x8] sm:$0xf]
  %v65 = vld [vmem:[%s1 + $0xc] sm:$0xf]
  %v66 = vld [vmem:[%s2] sm:$0x1]
  %v68 = vlaneseq
  %v69 = vshrl.u32 %v68, 7
  %v70 = vsub.s32 0, %v69
  %v71 = vrot.slane %v66, %v70
  %v77 = vunpack.c.l.b16 %v62
  %v78 = vunpack.c.l.b16 %v63
  %v79 = vunpack.c.l.b16 %v64
  %v80 = vunpack.c.l.b16 %v65
  %v81 = vpack.c.b16 %v78, %v77
  %v82 = vpack.c.b16 %v80, %v79
  %vm85 = vcmask 261120
  %v87 = vsel %vm85, %v61, 0
  %89 = vmatprep.subr.bf16.mxu0 0
  %90 = vmatpush1.bf16.msra.mxu0 0
  %91 = vmatprep.subr.bf16.mxu0 0
  %92 = vmatpush1.bf16.msra.mxu0 0
  %93 = vmatprep.subr.bf16.mxu0 0
  %94 = vmatpush1.bf16.msra.mxu0 0
  %95 = vmatprep.subr.bf16.mxu0 0
  %96 = vmatpush1.bf16.msra.mxu0 0
  %97 = vmatprep.subr.bf16.mxu0 0
  %98 = vmatpush1.bf16.msra.mxu0 0
  %99 = vmatprep.subr.bf16.mxu0 0
  %100 = vmatpush1.bf16.msra.mxu0 0
  %101 = vmatprep.subr.bf16.mxu0 0
  %102 = vmatpush1.bf16.msra.mxu0 %v82
  %103 = vmatprep.subr.bf16.mxu0 0
  %104 = vmatpush1.bf16.msra.mxu0 %v81
  %105 = vmatprep.subr.bf16.mxu0 0
  %106 = vmatpush2.bf16.msra.mxu0 0
  %107 = vmatprep.subr.bf16.mxu0 0
  %108 = vmatpush2.bf16.msra.mxu0 0
  %109 = vmatprep.subr.bf16.mxu0 0
  %110 = vmatpush2.bf16.msra.mxu0 0
  %111 = vmatprep.subr.bf16.mxu0 0
  %112 = vmatpush2.bf16.msra.mxu0 0
  %113 = vmatprep.subr.bf16.mxu0 0
  %114 = vmatpush2.bf16.msra.mxu0 0
  %115 = vmatprep.subr.bf16.mxu0 0
  %116 = vmatpush2.bf16.msra.mxu0 0
  %117 = vmatprep.subr.bf16.mxu0 0
  %118 = vmatpush2.bf16.msra.mxu0 0
  %119 = vmatprep.subr.bf16.mxu0 0
  %120 = vmatpush2.bf16.msra.mxu0 0
  %121 = vmatprep.mubr.bf16.mxu0 0
  %122 = vmatmul.mubr.bf16.gmra.mxu0 %v87
  %v123 = vpop.f32.mrf.mxu0
  %v124 = vadd.f32 %v71, %v123
  %v125 = vpop.f32.mrf.mxu0
  %v126 = vpop.f32.mrf.mxu0
  %v127 = vpop.f32.mrf.mxu0
  %128 = vdwg.mxu0
  %v129 = vpack.c.bf16 %v124, %v124
  %vm130 = vcmask 781312
  %131 = vst.msk [vmem:[%s5] sm:$0xf] %vm130, %v129
  // Predicated region
  $region26: #{mae_forward.19} parent=0 // pred_check
    _
  $region27: #{mae_forward.19} parent=0 // pred_check_branch
    %133 = sbr.rel (0) target = $region29
  $region28: #{mae_forward.19} parent=0 // pred_region
    _
  $region29: #{mae_forward.19} parent=0 // pred_fallthru
    _
  // Predicated region
  $region30: #{mae_forward.19} parent=0 // pred_check
    _
  $region31: #{mae_forward.19} parent=0 // pred_check_branch
    %135 = sbr.rel (0) target = $region33
  $region32: #{mae_forward.19} parent=0 // pred_region
    _
  $region33: #{mae_forward.19} parent=0 // pred_fallthru
    _

// kernel: mae_forward.18
$region0: #{mae_forward.18}
  #allocation0 [shape = 'u32[]', space=smem, size = 0x4, offset = 0x4, fixed_abs, tag = 'smem constant byte address 0x4 - core index']
  #allocation1 [shape = 'u32[144,128]{1,0:T(1,128)}', space=vmem, size = 0x12000, scoped, tag = 'internal scratch']
  %s0 = inlined_call_operand.vmem [shape: bf16[32,48], index: 0, kind: input, shape index: {}]
  %s1 = inlined_call_operand.vmem [shape: bf16[48,32], index: 1, kind: input, shape index: {}]
  %s2 = inlined_call_operand.vmem [shape: f32[1,32], index: 2, kind: input, shape index: {}]
  %s3 = inlined_call_operand.vmem [shape: bf16[32,32], index: 3, kind: input, shape index: {}]
  %s4 = inlined_call_operand.vmem [shape: bf16[32,32], index: 4, kind: output, shape index: {}]
  %s5 = sld [smem:[#allocation0]]
  $region26: #{mae_forward.18} parent=0
    _
  %s7 = ssub.s32 1, %s5
  %s8 = scalar_select 0, %s7, %s5
  // Predicated region
  $region2: #{mae_forward.18} parent=0 // pred_check
    _
  $region3: #{mae_forward.18} parent=0 // pred_check_branch
    %10 = sbr.rel (0) target = $region5
  $region4: #{mae_forward.18} parent=0 // pred_region
    _
  $region5: #{mae_forward.18} parent=0 // pred_fallthru
    _
  // Predicated region
  $region6: #{mae_forward.18} parent=0 // pred_check
    _
  $region7: #{mae_forward.18} parent=0 // pred_check_branch
    %12 = sbr.rel (0) target = $region9
  $region8: #{mae_forward.18} parent=0 // pred_region
    _
  $region9: #{mae_forward.18} parent=0 // pred_fallthru
    _
  // Predicated region
  $region10: #{mae_forward.18} parent=0 // pred_check
    _
  $region11: #{mae_forward.18} parent=0 // pred_check_branch
    %14 = sbr.rel (0) target = $region13
  $region12: #{mae_forward.18} parent=0 // pred_region
    _
  $region13: #{mae_forward.18} parent=0 // pred_fallthru
    _
  // Predicated region
  $region14: #{mae_forward.18} parent=0 // pred_check
    _
  $region15: #{mae_forward.18} parent=0 // pred_check_branch
    %16 = sbr.rel (0) target = $region17
  $region16: #{mae_forward.18} parent=0 // pred_region
    _
  $region17: #{mae_forward.18} parent=0 // pred_fallthru
    _
  %v18 = vld [vmem:[%s0] sm:$0xf]
  %v19 = vld [vmem:[%s0 + $0x4] sm:$0xf]
  %v20 = vld [vmem:[%s0 + $0x8] sm:$0xf]
  %v21 = vld [vmem:[%s0 + $0xc] sm:$0xf]
  %v22 = vld [vmem:[%s1] sm:$0xf]
  %v23 = vld [vmem:[%s1 + $0x4] sm:$0xf]
  %v24 = vld [vmem:[%s1 + $0x8] sm:$0xf]
  %v25 = vld [vmem:[%s1 + $0xc] sm:$0xf]
  %v26 = vld [vmem:[%s1 + $0x10] sm:$0xf]
  %v27 = vld [vmem:[%s1 + $0x14] sm:$0xf]
  %v28 = vld [vmem:[%s2] sm:$0x1]
  %v30 = vlaneseq
  %v31 = vshrl.u32 %v30, 7
  %v32 = vsub.s32 0, %v31
  %v33 = vrot.slane %v28, %v32
  %v39 = vunpack.c.l.b16 %v18
  %v40 = vunpack.c.l.b16 %v19
  %v41 = vunpack.c.l.b16 %v20
  %v42 = vunpack.c.l.b16 %v21
  %v43 = vpack.c.b16 %v40, %v39
  %v44 = vpack.c.b16 %v42, %v41
  %v51 = vunpack.c.l.b16 %v22
  %v52 = vunpack.c.l.b16 %v23
  %v53 = vunpack.c.l.b16 %v24
  %v54 = vunpack.c.l.b16 %v25
  %v55 = vunpack.c.l.b16 %v26
  %v56 = vunpack.c.l.b16 %v27
  %v57 = vpack.c.b16 %v52, %v51
  %v58 = vpack.c.b16 %v54, %v53
  %v59 = vpack.c.b16 %v56, %v55
  %vm63 = vcmask 392192
  %v65 = vsel %vm63, %v43, 0
  %v68 = vsel %vm63, %v44, 0
  %70 = vmatprep.subr.bf16.mxu0 0
  %71 = vmatpush1.bf16.msra.mxu0 0
  %72 = vmatprep.subr.bf16.mxu0 0
  %73 = vmatpush1.bf16.msra.mxu0 0
  %74 = vmatprep.subr.bf16.mxu0 0
  %75 = vmatpush1.bf16.msra.mxu0 0
  %76 = vmatprep.subr.bf16.mxu0 0
  %77 = vmatpush1.bf16.msra.mxu0 0
  %78 = vmatprep.subr.bf16.mxu0 0
  %79 = vmatpush1.bf16.msra.mxu0 0
  %80 = vmatprep.subr.bf16.mxu0 0
  %81 = vmatpush1.bf16.msra.mxu0 %v59
  %82 = vmatprep.subr.bf16.mxu0 0
  %83 = vmatpush1.bf16.msra.mxu0 %v58
  %84 = vmatprep.subr.bf16.mxu0 0
  %85 = vmatpush1.bf16.msra.mxu0 %v57
  %86 = vmatprep.subr.bf16.mxu0 0
  %87 = vmatpush2.bf16.msra.mxu0 0
  %88 = vmatprep.subr.bf16.mxu0 0
  %89 = vmatpush2.bf16.msra.mxu0 0
  %90 = vmatprep.subr.bf16.mxu0 0
  %91 = vmatpush2.bf16.msra.mxu0 0
  %92 = vmatprep.subr.bf16.mxu0 0
  %93 = vmatpush2.bf16.msra.mxu0 0
  %94 = vmatprep.subr.bf16.mxu0 0
  %95 = vmatpush2.bf16.msra.mxu0 0
  %96 = vmatprep.subr.bf16.mxu0 0
  %97 = vmatpush2.bf16.msra.mxu0 0
  %98 = vmatprep.subr.bf16.mxu0 0
  %99 = vmatpush2.bf16.msra.mxu0 0
  %100 = vmatprep.subr.bf16.mxu0 0
  %101 = vmatpush2.bf16.msra.mxu0 0
  %102 = vmatprep.mubr.bf16.mxu0 0
  %103 = vmatmul.mubr.bf16.gmra.mxu0 %v65
  %v104 = vpop.f32.mrf.mxu0
  %v105 = vadd.f32 %v33, %v104
  %v106 = vpop.f32.mrf.mxu0
  %v107 = vpop.f32.mrf.mxu0
  %v108 = vadd.f32 %v33, %v107
  %v109 = vpop.f32.mrf.mxu0
  %110 = vmatprep.mubr.bf16.mxu0 0
  %111 = vmatmul.mubr.bf16.gmra.mxu0 %v68
  %v112 = vpop.f32.mrf.mxu0
  %v113 = vadd.f32 %v33, %v112
  %v114 = vpop.f32.mrf.mxu0
  %v115 = vpop.f32.mrf.mxu0
  %v116 = vadd.f32 %v33, %v115
  %v117 = vpop.f32.mrf.mxu0
  %118 = vdwg.mxu0
  %v119 = vld [vmem:[%s3] sm:$0xf]
  %v120 = vld [vmem:[%s3 + $0x4] sm:$0xf]
  %v121 = vld [vmem:[%s3 + $0x8] sm:$0xf]
  %v122 = vld [vmem:[%s3 + $0xc] sm:$0xf]
  %v123 = vunpack.c.l.bf16 %v119
  %v124 = vunpack.c.l.bf16 %v120
  %v125 = vunpack.c.l.bf16 %v121
  %v126 = vunpack.c.l.bf16 %v122
  %v127 = vadd.f32 %v105, %v123
  %v128 = vadd.f32 %v108, %v124
  %v129 = vadd.f32 %v113, %v125
  %v130 = vadd.f32 %v116, %v126
  %v131 = vpack.c.bf16 %v128, %v127
  %v132 = vpack.c.bf16 %v130, %v129
  %v135 = vunpack.c.l.b16 %v131
  %v136 = vunpack.c.h.b16 %v131
  %v137 = vunpack.c.l.b16 %v132
  %v138 = vunpack.c.h.b16 %v132
  %v139 = vpack.c.b16 %v135, %v135
  %v140 = vpack.c.b16 %v136, %v136
  %v141 = vpack.c.b16 %v137, %v137
  %v142 = vpack.c.b16 %v138, %v138
  %vm147 = vcmask 257024
  %148 = vst.msk [vmem:[%s4] sm:$0xf] %vm147, %v139
  %149 = vst.msk [vmem:[%s4 + $0x4] sm:$0xf] %vm147, %v140
  %150 = vst.msk [vmem:[%s4 + $0x8] sm:$0xf] %vm147, %v141
  %151 = vst.msk [vmem:[%s4 + $0xc] sm:$0xf] %vm147, %v142
  // Predicated region
  $region18: #{mae_forward.18} parent=0 // pred_check
    _
  $region19: #{mae_forward.18} parent=0 // pred_check_branch
    %153 = sbr.rel (0) target = $region21
  $region20: #{mae_forward.18} parent=0 // pred_region
    _
  $region21: #{mae_forward.18} parent=0 // pred_fallthru
    _
  // Predicated region
  $region22: #{mae_forward.18} parent=0 // pred_check
    _
  $region23: #{mae_forward.18} parent=0 // pred_check_branch
    %155 = sbr.rel (0) target = $region25
  $region24: #{mae_forward.18} parent=0 // pred_region
    _
  $region25: #{mae_forward.18} parent=0 // pred_fallthru
    _

// kernel: mae_forward.20
$region0: #{mae_forward.20}
  #allocation0 [shape = 'u32[]', space=smem, size = 0x4, offset = 0x4, fixed_abs, tag = 'smem constant byte address 0x4 - core index']
  #allocation1 [shape = 'u32[144,128]{1,0:T(1,128)}', space=vmem, size = 0x12000, scoped, tag = 'internal scratch']
  %s0 = inlined_call_operand.vmem [shape: bf16[2,4,96], index: 0, kind: input, shape index: {}]
  %s1 = inlined_call_operand.vmem [shape: bf16[2,4,32], index: 1, kind: output, shape index: {}]
  %s2 = sld [smem:[#allocation0]]
  $region37: #{mae_forward.20} parent=0
    _
  %s4 = ssub.s32 1, %s2
  %s5 = scalar_select 0, %s4, %s2
  loop: start=0, step=1, limit=4
  $region2: #{mae_forward.20} parent=0 // loop_pre_header
    _
  $region3: #{mae_forward.20} parent=0 // loop_header
    %s7 = sphi 0, %s11
    %p8 = scmp.ge.s32.totalorder %s7, 4
    %s17 = sphi 0, %s19
    %s20 = sphi 0, %s17
    %s21 = sphi 0, %s20
    %s37 = sphi 0, %s21
    %s43 = sphi 0, %s45
    %s46 = sphi 0, %s43
    %s47 = sphi 0, %s46
    %s63 = sphi 0, %s47
  $region4: #{mae_forward.20} parent=0 // loop_header_branch
    %10 = sbr.rel (%p8) target = $region8
  $region5: #{mae_forward.20} parent=0 // loop_body
    %s12 = ssub.s32 %s7, 1
    %s13 = ssub.s32 %s7, 2
    %s14 = sadd.s32 %s7, 1
    %s15 = ssub.s32 %s7, %s14
    %p16 = scmp.eq.s32.totalorder %s15, 0
    %s18 = sadd.s32 %s17, 1
    %s19 = scalar_select %p16, %s17, %s18
    %p22 = pneg %p16
    %p23 = scmp.eq.s32.totalorder %s7, 1
    %p24 = por %p22, %p23
    %p25 = scmp.ne.s32.totalorder %s17, %s20
    %p26 = scmp.eq.s32.totalorder %s7, 0
    %p27 = por %p25, %p26
    %p28 = scmp.ne.s32.totalorder %s17, %s20
    %p29 = scmp.eq.s32.totalorder %s12, 1
    %p30 = por %p28, %p29
    %p31 = scmp.ne.s32.totalorder %s20, %s21
    %p32 = scmp.eq.s32.totalorder %s12, 0
    %p33 = por %p31, %p32
    %p34 = scmp.ne.s32.totalorder %s20, %s21
    %p35 = scmp.eq.s32.totalorder %s13, 1
    %p36 = por %p34, %p35
    %p38 = scmp.ne.s32.totalorder %s21, %s37
    %p39 = scmp.eq.s32.totalorder %s13, 0
    %p40 = por %p38, %p39
    %s41 = ssub.s32 %s7, %s14
    %p42 = scmp.eq.s32.totalorder %s41, 0
    %s44 = sadd.s32 %s43, 1
    %s45 = scalar_select %p42, %s43, %s44
    %p48 = pneg %p42
    %p49 = scmp.eq.s32.totalorder %s7, 1
    %p50 = por %p48, %p49
    %p51 = scmp.ne.s32.totalorder %s43, %s46
    %p52 = scmp.eq.s32.totalorder %s7, 0
    %p53 = por %p51, %p52
    %p54 = scmp.ne.s32.totalorder %s43, %s46
    %p55 = scmp.eq.s32.totalorder %s12, 1
    %p56 = por %p54, %p55
    %p57 = scmp.ne.s32.totalorder %s46, %s47
    %p58 = scmp.eq.s32.totalorder %s12, 0
    %p59 = por %p57, %p58
    %p60 = scmp.ne.s32.totalorder %s46, %s47
    %p61 = scmp.eq.s32.totalorder %s13, 1
    %p62 = por %p60, %p61
    %p64 = scmp.ne.s32.totalorder %s47, %s63
    %p65 = scmp.eq.s32.totalorder %s13, 0
    %p66 = por %p64, %p65
    %p67 = scmp.le.s32.totalorder 1, %s7
    %p68 = scmp.lt.s32.totalorder %s7, 3
    %p69 = pnand %p67, %p68
    %p70 = pneg %p69
    // Predicated region
    $region9: #{mae_forward.20} parent=5 // pred_check
      _
    $region10: #{mae_forward.20} parent=5 // pred_check_branch
      %72 = sbr.rel (%p69) target = $region12
    $region11: #{mae_forward.20} parent=5 // pred_region
      %s73 = ssub.s32 %s7, 1
    $region12: #{mae_forward.20} parent=5 // pred_fallthru
      _
    %p74 = scmp.lt.s32.totalorder %s7, 2
    // Predicated region
    $region13: #{mae_forward.20} parent=5 // pred_check
      %p75 = pneg %p74
    $region14: #{mae_forward.20} parent=5 // pred_check_branch
      %77 = sbr.rel (%p75) target = $region16
    $region15: #{mae_forward.20} parent=5 // pred_region
      // Predicated region
      $region17: #{mae_forward.20} parent=15 // pred_check
        %p78 = pneg %p27
      $region18: #{mae_forward.20} parent=15 // pred_check_branch
        %80 = sbr.rel (%p78) target = $region20
      $region19: #{mae_forward.20} parent=15 // pred_region
        %p81 = scmp.lt.s32.totalorder %s7, 1
        %s82 = scalar_select %p81, %s7, 1
        %s83 = smul.addr %s82, 2
        %s84 = scalar_lea.vmem %s0, %s83
      $region20: #{mae_forward.20} parent=15 // pred_fallthru
        _
    $region16: #{mae_forward.20} parent=5 // pred_fallthru
      _
    %p85 = scmp.le.s32.totalorder 1, %s7
    %p86 = scmp.lt.s32.totalorder %s7, 3
    %p87 = pnand %p85, %p86
    %p88 = pneg %p87
    // Predicated region
    $region21: #{mae_forward.20} parent=5 // pred_check
      _
    $region22: #{mae_forward.20} parent=5 // pred_check_branch
      %90 = sbr.rel (%p87) target = $region24
    $region23: #{mae_forward.20} parent=5 // pred_region
      %s91 = ssub.s32 %s7, 1
      %p92 = scmp.lt.s32.totalorder %s12, 1
      %s93 = scalar_select %p92, %s12, 1
      %s94 = smul.addr %s93, 2
      %s95 = scalar_lea.vmem %s0, %s94
      %p96 = pneg %p33
      %p97 = pneg %p30
      %p98 = pneg %p59
      %p99 = pneg %p56
      %p100 = scmp.lt.s32.totalorder %s12, 1
      %s101 = scalar_select %p100, %s12, 1
      %s102 = smul.addr %s101, 2
      %s103 = scalar_lea.vmem %s1, %s102
      %p104 = scmp.lt.s32.totalorder %s12, 1
      %s105 = scalar_select %p104, %s12, 1
      %s106 = smul.addr %s105, 2
      %s107 = scalar_lea.vmem %s0, %s106
      %p108 = scmp.lt.s32.totalorder %s12, 1
      %s109 = scalar_select %p108, %s12, 1
      %s110 = smul.addr %s109, 2
      %s111 = scalar_lea.vmem %s1, %s110
      %v113 = vld [vmem:[%s107] sm:$0x3]
      %v116 = vunpack.c.l.s4 1983009808
      %v117 = vunpack.c.0.s8 %v116
      %v118 = vlaneseq
      %v119 = vshrl.u32 %v118, 7
      %v120 = vsub.s32 %v117, %v119
      %v121 = vrot.slane %v113, %v120
      %122 = vrot.lane.b32.xlu0 %v121, 96
      %v123 = vpop.permute.xlu0 %122
      %vm124 = vcmask 64512
      %v126 = vsel %vm124, %v113, 0
      %v129 = vsel %vm124, %v123, 0
      %131 = vmatprep.subr.bf16.mxu0 0
      %132 = vmatpush1.bf16.xpose.msra.mxu0 0
      %133 = vmatprep.subr.bf16.mxu0 0
      %134 = vmatpush1.bf16.xpose.msra.mxu0 0
      %135 = vmatprep.subr.bf16.mxu0 0
      %136 = vmatpush1.bf16.xpose.msra.mxu0 0
      %137 = vmatprep.subr.bf16.mxu0 0
      %138 = vmatpush1.bf16.xpose.msra.mxu0 0
      %139 = vmatprep.subr.bf16.mxu0 0
      %140 = vmatpush1.bf16.xpose.msra.mxu0 0
      %141 = vmatprep.subr.bf16.mxu0 0
      %142 = vmatpush1.bf16.xpose.msra.mxu0 0
      %143 = vmatprep.subr.bf16.mxu0 0
      %144 = vmatpush1.bf16.xpose.msra.mxu0 0
      %145 = vmatprep.subr.bf16.mxu0 0
      %146 = vmatpush1.bf16.xpose.msra.mxu0 %v129
      %147 = vmatprep.subr.bf16.mxu0 0
      %148 = vmatpush2.bf16.xpose.msra.mxu0 0
      %149 = vmatprep.subr.bf16.mxu0 0
      %150 = vmatpush2.bf16.xpose.msra.mxu0 0
      %151 = vmatprep.subr.bf16.mxu0 0
      %152 = vmatpush2.bf16.xpose.msra.mxu0 0
      %153 = vmatprep.subr.bf16.mxu0 0
      %154 = vmatpush2.bf16.xpose.msra.mxu0 0
      %155 = vmatprep.subr.bf16.mxu0 0
      %156 = vmatpush2.bf16.xpose.msra.mxu0 0
      %157 = vmatprep.subr.bf16.mxu0 0
      %158 = vmatpush2.bf16.xpose.msra.mxu0 0
      %159 = vmatprep.subr.bf16.mxu0 0
      %160 = vmatpush2.bf16.xpose.msra.mxu0 0
      %161 = vmatprep.subr.bf16.mxu0 0
      %162 = vmatpush2.bf16.xpose.msra.mxu0 0
      %163 = vmatprep.mubr.bf16.mxu0 0
      %164 = vmatmul.mubr.bf16.gmra.mxu0 %v126
      %v165 = vpop.f32.mrf.mxu0
      %v166 = vadd.f32 0.0, %v165
      %v167 = vpop.f32.mrf.mxu0
      %v168 = vpop.f32.mrf.mxu0
      %v169 = vpop.f32.mrf.mxu0
      %170 = vdwg.mxu0
      %v171 = vmul.f32 %v166, 0.35355338
      %vm172 = vcmask 27648
      %v173 = vsel %vm172, %v171, -inf
      %174 = vmax.xlane.f32.xlu0 %v173
      %v175 = vpop.xlane.xlu0 %174
      %v176 = vsub.f32 %v171, %v175
      %v177 = vmul.f32 %v176, 1.442695
      %v178 = vpow.pop %v177
      %v179 = vsel %vm172, %v178, 0.0
      %180 = vadd.xlane.f32.xlu0 %v179
      %v181 = vpop.xlane.xlu0 %180
      %v182 = vrcp.pop %v181
      %v183 = vmul.f32 %v178, %v182
      %v184 = vpack.c.bf16 %v183, %v183
      %185 = vrot.lane.b32.xlu0 %v121, 64
      %v186 = vpop.permute.xlu0 %185
      %vm187 = vcmask 31744
      %v189 = vsel %vm187, %v184, 0
      %vm191 = vcmask 1041408
      %v193 = vsel %vm191, %v186, 0
      %195 = vmatprep.subr.bf16.mxu0 0
      %196 = vmatpush1.bf16.msra.mxu0 0
      %197 = vmatprep.subr.bf16.mxu0 0
      %198 = vmatpush1.bf16.msra.mxu0 0
      %199 = vmatprep.subr.bf16.mxu0 0
      %200 = vmatpush1.bf16.msra.mxu0 0
      %201 = vmatprep.subr.bf16.mxu0 0
      %202 = vmatpush1.bf16.msra.mxu0 0
      %203 = vmatprep.subr.bf16.mxu0 0
      %204 = vmatpush1.bf16.msra.mxu0 0
      %205 = vmatprep.subr.bf16.mxu0 0
      %206 = vmatpush1.bf16.msra.mxu0 0
      %207 = vmatprep.subr.bf16.mxu0 0
      %208 = vmatpush1.bf16.msra.mxu0 0
      %209 = vmatprep.subr.bf16.mxu0 0
      %210 = vmatpush1.bf16.msra.mxu0 %v193
      %211 = vmatprep.subr.bf16.mxu0 0
      %212 = vmatpush2.bf16.msra.mxu0 0
      %213 = vmatprep.subr.bf16.mxu0 0
      %214 = vmatpush2.bf16.msra.mxu0 0
      %215 = vmatprep.subr.bf16.mxu0 0
      %216 = vmatpush2.bf16.msra.mxu0 0
      %217 = vmatprep.subr.bf16.mxu0 0
      %218 = vmatpush2.bf16.msra.mxu0 0
      %219 = vmatprep.subr.bf16.mxu0 0
      %220 = vmatpush2.bf16.msra.mxu0 0
      %221 = vmatprep.subr.bf16.mxu0 0
      %222 = vmatpush2.bf16.msra.mxu0 0
      %223 = vmatprep.subr.bf16.mxu0 0
      %224 = vmatpush2.bf16.msra.mxu0 0
      %225 = vmatprep.subr.bf16.mxu0 0
      %226 = vmatpush2.bf16.msra.mxu0 0
      %227 = vmatprep.mubr.bf16.mxu0 0
      %228 = vmatmul.mubr.bf16.gmra.mxu0 %v189
      %v229 = vpop.f32.mrf.mxu0
      %v230 = vadd.f32 0.0, %v229
      %v231 = vpop.f32.mrf.mxu0
      %v232 = vpop.f32.mrf.mxu0
      %v233 = vpop.f32.mrf.mxu0
      %234 = vdwg.mxu0
      %v235 = vpack.c.bf16 %v230, %v230
      %vm236 = vcmask 58368
      %237 = vst.msk [vmem:[%s111] sm:$0x3] %vm236, %v235
      %v238 = vld [vmem:[%s107] sm:$0x3]
      %v241 = vunpack.c.l.s4 1983009808
      %v242 = vunpack.c.0.s8 %v241
      %v243 = vlaneseq
      %v244 = vshrl.u32 %v243, 7
      %v245 = vsub.s32 %v242, %v244
      %v246 = vrot.slane %v238, %v245
      %247 = vrot.lane.b32.xlu0 %v246, 120
      %v248 = vpop.permute.xlu0 %247
      %249 = vrot.lane.b32.xlu0 %v246, 88
      %v250 = vpop.permute.xlu0 %249
      %v252 = vsel %vm124, %v248, 0
      %v255 = vsel %vm124, %v250, 0
      %257 = vmatprep.subr.bf16.mxu0 0
      %258 = vmatpush1.bf16.xpose.msra.mxu0 0
      %259 = vmatprep.subr.bf16.mxu0 0
      %260 = vmatpush1.bf16.xpose.msra.mxu0 0
      %261 = vmatprep.subr.bf16.mxu0 0
      %262 = vmatpush1.bf16.xpose.msra.mxu0 0
      %263 = vmatprep.subr.bf16.mxu0 0
      %264 = vmatpush1.bf16.xpose.msra.mxu0 0
      %265 = vmatprep.subr.bf16.mxu0 0
      %266 = vmatpush1.bf16.xpose.msra.mxu0 0
      %267 = vmatprep.subr.bf16.mxu0 0
      %268 = vmatpush1.bf16.xpose.msra.mxu0 0
      %269 = vmatprep.subr.bf16.mxu0 0
      %270 = vmatpush1.bf16.xpose.msra.mxu0 0
      %271 = vmatprep.subr.bf16.mxu0 0
      %272 = vmatpush1.bf16.xpose.msra.mxu0 %v255
      %273 = vmatprep.subr.bf16.mxu0 0
      %274 = vmatpush2.bf16.xpose.msra.mxu0 0
      %275 = vmatprep.subr.bf16.mxu0 0
      %276 = vmatpush2.bf16.xpose.msra.mxu0 0
      %277 = vmatprep.subr.bf16.mxu0 0
      %278 = vmatpush2.bf16.xpose.msra.mxu0 0
      %279 = vmatprep.subr.bf16.mxu0 0
      %280 = vmatpush2.bf16.xpose.msra.mxu0 0
      %281 = vmatprep.subr.bf16.mxu0 0
      %282 = vmatpush2.bf16.xpose.msra.mxu0 0
      %283 = vmatprep.subr.bf16.mxu0 0
      %284 = vmatpush2.bf16.xpose.msra.mxu0 0
      %285 = vmatprep.subr.bf16.mxu0 0
      %286 = vmatpush2.bf16.xpose.msra.mxu0 0
      %287 = vmatprep.subr.bf16.mxu0 0
      %288 = vmatpush2.bf16.xpose.msra.mxu0 0
      %289 = vmatprep.mubr.bf16.mxu0 0
      %290 = vmatmul.mubr.bf16.gmra.mxu0 %v252
      %v291 = vpop.f32.mrf.mxu0
      %v292 = vadd.f32 0.0, %v291
      %v293 = vpop.f32.mrf.mxu0
      %v294 = vpop.f32.mrf.mxu0
      %v295 = vpop.f32.mrf.mxu0
      %296 = vdwg.mxu0
      %v297 = vmul.f32 %v292, 0.35355338
      %v298 = vsel %vm172, %v297, -inf
      %299 = vmax.xlane.f32.xlu0 %v298
      %v300 = vpop.xlane.xlu0 %299
      %v301 = vsub.f32 %v297, %v300
      %v302 = vmul.f32 %v301, 1.442695
      %v303 = vpow.pop %v302
      %v304 = vsel %vm172, %v303, 0.0
      %305 = vadd.xlane.f32.xlu0 %v304
      %v306 = vpop.xlane.xlu0 %305
      %v307 = vrcp.pop %v306
      %v308 = vmul.f32 %v303, %v307
      %v309 = vpack.c.bf16 %v308, %v308
      %310 = vrot.lane.b32.xlu0 %v246, 56
      %v311 = vpop.permute.xlu0 %310
      %v313 = vsel %vm187, %v309, 0
      %v316 = vsel %vm191, %v311, 0
      %318 = vmatprep.subr.bf16.mxu0 0
      %319 = vmatpush1.bf16.msra.mxu0 0
      %320 = vmatprep.subr.bf16.mxu0 0
      %321 = vmatpush1.bf16.msra.mxu0 0
      %322 = vmatprep.subr.bf16.mxu0 0
      %323 = vmatpush1.bf16.msra.mxu0 0
      %324 = vmatprep.subr.bf16.mxu0 0
      %325 = vmatpush1.bf16.msra.mxu0 0
      %326 = vmatprep.subr.bf16.mxu0 0
      %327 = vmatpush1.bf16.msra.mxu0 0
      %328 = vmatprep.subr.bf16.mxu0 0
      %329 = vmatpush1.bf16.msra.mxu0 0
      %330 = vmatprep.subr.bf16.mxu0 0
      %331 = vmatpush1.bf16.msra.mxu0 0
      %332 = vmatprep.subr.bf16.mxu0 0
      %333 = vmatpush1.bf16.msra.mxu0 %v316
      %334 = vmatprep.subr.bf16.mxu0 0
      %335 = vmatpush2.bf16.msra.mxu0 0
      %336 = vmatprep.subr.bf16.mxu0 0
      %337 = vmatpush2.bf16.msra.mxu0 0
      %338 = vmatprep.subr.bf16.mxu0 0
      %339 = vmatpush2.bf16.msra.mxu0 0
      %340 = vmatprep.subr.bf16.mxu0 0
      %341 = vmatpush2.bf16.msra.mxu0 0
      %342 = vmatprep.subr.bf16.mxu0 0
      %343 = vmatpush2.bf16.msra.mxu0 0
      %344 = vmatprep.subr.bf16.mxu0 0
      %345 = vmatpush2.bf16.msra.mxu0 0
      %346 = vmatprep.subr.bf16.mxu0 0
      %347 = vmatpush2.bf16.msra.mxu0 0
      %348 = vmatprep.subr.bf16.mxu0 0
      %349 = vmatpush2.bf16.msra.mxu0 0
      %350 = vmatprep.mubr.bf16.mxu0 0
      %351 = vmatmul.mubr.bf16.gmra.mxu0 %v313
      %v352 = vpop.f32.mrf.mxu0
      %v353 = vadd.f32 0.0, %v352
      %v354 = vpop.f32.mrf.mxu0
      %v355 = vpop.f32.mrf.mxu0
      %v356 = vpop.f32.mrf.mxu0
      %357 = vdwg.mxu0
      %v358 = vpack.c.bf16 %v353, %v353
      %v361 = vunpack.c.l.s4 1983009808
      %v362 = vunpack.c.0.s8 %v361
      %v363 = vlaneseq
      %v364 = vshrl.u32 %v363, 7
      %v365 = vsub.s32 %v362, %v364
      %v366 = vrot.slane %v358, %v365
      %367 = vrot.lane.b32.xlu0 %v366, 8
      %v368 = vpop.permute.xlu0 %367
      %vm370 = vcmask 123968
      %371 = vst.msk [vmem:[%s111] sm:$0x3] %vm370, %v368
      %v372 = vld [vmem:[%s107] sm:$0x3]
      %v375 = vunpack.c.l.s4 1983009808
      %v376 = vunpack.c.0.s8 %v375
      %v377 = vlaneseq
      %v378 = vshrl.u32 %v377, 7
      %v379 = vsub.s32 %v376, %v378
      %v380 = vrot.slane %v372, %v379
      %381 = vrot.lane.b32.xlu0 %v380, 112
      %v382 = vpop.permute.xlu0 %381
      %383 = vrot.lane.b32.xlu0 %v380, 80
      %v384 = vpop.permute.xlu0 %383
      %v386 = vsel %vm124, %v382, 0
      %v389 = vsel %vm124, %v384, 0
      %391 = vmatprep.subr.bf16.mxu0 0
      %392 = vmatpush1.bf16.xpose.msra.mxu0 0
      %393 = vmatprep.subr.bf16.mxu0 0
      %394 = vmatpush1.bf16.xpose.msra.mxu0 0
      %395 = vmatprep.subr.bf16.mxu0 0
      %396 = vmatpush1.bf16.xpose.msra.mxu0 0
      %397 = vmatprep.subr.bf16.mxu0 0
      %398 = vmatpush1.bf16.xpose.msra.mxu0 0
      %399 = vmatprep.subr.bf16.mxu0 0
      %400 = vmatpush1.bf16.xpose.msra.mxu0 0
      %401 = vmatprep.subr.bf16.mxu0 0
      %402 = vmatpush1.bf16.xpose.msra.mxu0 0
      %403 = vmatprep.subr.bf16.mxu0 0
      %404 = vmatpush1.bf16.xpose.msra.mxu0 0
      %405 = vmatprep.subr.bf16.mxu0 0
      %406 = vmatpush1.bf16.xpose.msra.mxu0 %v389
      %407 = vmatprep.subr.bf16.mxu0 0
      %408 = vmatpush2.bf16.xpose.msra.mxu0 0
      %409 = vmatprep.subr.bf16.mxu0 0
      %410 = vmatpush2.bf16.xpose.msra.mxu0 0
      %411 = vmatprep.subr.bf16.mxu0 0
      %412 = vmatpush2.bf16.xpose.msra.mxu0 0
      %413 = vmatprep.subr.bf16.mxu0 0
      %414 = vmatpush2.bf16.xpose.msra.mxu0 0
      %415 = vmatprep.subr.bf16.mxu0 0
      %416 = vmatpush2.bf16.xpose.msra.mxu0 0
      %417 = vmatprep.subr.bf16.mxu0 0
      %418 = vmatpush2.bf16.xpose.msra.mxu0 0
      %419 = vmatprep.subr.bf16.mxu0 0
      %420 = vmatpush2.bf16.xpose.msra.mxu0 0
      %421 = vmatprep.subr.bf16.mxu0 0
      %422 = vmatpush2.bf16.xpose.msra.mxu0 0
      %423 = vmatprep.mubr.bf16.mxu0 0
      %424 = vmatmul.mubr.bf16.gmra.mxu0 %v386
      %v425 = vpop.f32.mrf.mxu0
      %v426 = vadd.f32 0.0, %v425
      %v427 = vpop.f32.mrf.mxu0
      %v428 = vpop.f32.mrf.mxu0
      %v429 = vpop.f32.mrf.mxu0
      %430 = vdwg.mxu0
      %v431 = vmul.f32 %v426, 0.35355338
      %v432 = vsel %vm172, %v431, -inf
      %433 = vmax.xlane.f32.xlu0 %v432
      %v434 = vpop.xlane.xlu0 %433
      %v435 = vsub.f32 %v431, %v434
      %v436 = vmul.f32 %v435, 1.442695
      %v437 = vpow.pop %v436
      %v438 = vsel %vm172, %v437, 0.0
      %439 = vadd.xlane.f32.xlu0 %v438
      %v440 = vpop.xlane.xlu0 %439
      %v441 = vrcp.pop %v440
      %v442 = vmul.f32 %v437, %v441
      %v443 = vpack.c.bf16 %v442, %v442
      %444 = vrot.lane.b32.xlu0 %v380, 48
      %v445 = vpop.permute.xlu0 %444
      %v447 = vsel %vm187, %v443, 0
      %v450 = vsel %vm191, %v445, 0
      %452 = vmatprep.subr.bf16.mxu0 0
      %453 = vmatpush1.bf16.msra.mxu0 0
      %454 = vmatprep.subr.bf16.mxu0 0
      %455 = vmatpush1.bf16.msra.mxu0 0
      %456 = vmatprep.subr.bf16.mxu0 0
      %457 = vmatpush1.bf16.msra.mxu0 0
      %458 = vmatprep.subr.bf16.mxu0 0
      %459 = vmatpush1.bf16.msra.mxu0 0
      %460 = vmatprep.subr.bf16.mxu0 0
      %461 = vmatpush1.bf16.msra.mxu0 0
      %462 = vmatprep.subr.bf16.mxu0 0
      %463 = vmatpush1.bf16.msra.mxu0 0
      %464 = vmatprep.subr.bf16.mxu0 0
      %465 = vmatpush1.bf16.msra.mxu0 0
      %466 = vmatprep.subr.bf16.mxu0 0
      %467 = vmatpush1.bf16.msra.mxu0 %v450
      %468 = vmatprep.subr.bf16.mxu0 0
      %469 = vmatpush2.bf16.msra.mxu0 0
      %470 = vmatprep.subr.bf16.mxu0 0
      %471 = vmatpush2.bf16.msra.mxu0 0
      %472 = vmatprep.subr.bf16.mxu0 0
      %473 = vmatpush2.bf16.msra.mxu0 0
      %474 = vmatprep.subr.bf16.mxu0 0
      %475 = vmatpush2.bf16.msra.mxu0 0
      %476 = vmatprep.subr.bf16.mxu0 0
      %477 = vmatpush2.bf16.msra.mxu0 0
      %478 = vmatprep.subr.bf16.mxu0 0
      %479 = vmatpush2.bf16.msra.mxu0 0
      %480 = vmatprep.subr.bf16.mxu0 0
      %481 = vmatpush2.bf16.msra.mxu0 0
      %482 = vmatprep.subr.bf16.mxu0 0
      %483 = vmatpush2.bf16.msra.mxu0 0
      %484 = vmatprep.mubr.bf16.mxu0 0
      %485 = vmatmul.mubr.bf16.gmra.mxu0 %v447
      %v486 = vpop.f32.mrf.mxu0
      %v487 = vadd.f32 0.0, %v486
      %v488 = vpop.f32.mrf.mxu0
      %v489 = vpop.f32.mrf.mxu0
      %v490 = vpop.f32.mrf.mxu0
      %491 = vdwg.mxu0
      %v492 = vpack.c.bf16 %v487, %v487
      %v495 = vunpack.c.l.s4 1983009808
      %v496 = vunpack.c.0.s8 %v495
      %v497 = vlaneseq
      %v498 = vshrl.u32 %v497, 7
      %v499 = vsub.s32 %v496, %v498
      %v500 = vrot.slane %v492, %v499
      %501 = vrot.lane.b32.xlu0 %v500, 16
      %v502 = vpop.permute.xlu0 %501
      %vm504 = vcmask 189568
      %505 = vst.msk [vmem:[%s111] sm:$0x3] %vm504, %v502
      %v506 = vld [vmem:[%s107] sm:$0x3]
      %v509 = vunpack.c.l.s4 1983009808
      %v510 = vunpack.c.0.s8 %v509
      %v511 = vlaneseq
      %v512 = vshrl.u32 %v511, 7
      %v513 = vsub.s32 %v510, %v512
      %v514 = vrot.slane %v506, %v513
      %515 = vrot.lane.b32.xlu0 %v514, 104
      %v516 = vpop.permute.xlu0 %515
      %517 = vrot.lane.b32.xlu0 %v514, 72
      %v518 = vpop.permute.xlu0 %517
      %v520 = vsel %vm124, %v516, 0
      %v523 = vsel %vm124, %v518, 0
      %525 = vmatprep.subr.bf16.mxu0 0
      %526 = vmatpush1.bf16.xpose.msra.mxu0 0
      %527 = vmatprep.subr.bf16.mxu0 0
      %528 = vmatpush1.bf16.xpose.msra.mxu0 0
      %529 = vmatprep.subr.bf16.mxu0 0
      %530 = vmatpush1.bf16.xpose.msra.mxu0 0
      %531 = vmatprep.subr.bf16.mxu0 0
      %532 = vmatpush1.bf16.xpose.msra.mxu0 0
      %533 = vmatprep.subr.bf16.mxu0 0
      %534 = vmatpush1.bf16.xpose.msra.mxu0 0
      %535 = vmatprep.subr.bf16.mxu0 0
      %536 = vmatpush1.bf16.xpose.msra.mxu0 0
      %537 = vmatprep.subr.bf16.mxu0 0
      %538 = vmatpush1.bf16.xpose.msra.mxu0 0
      %539 = vmatprep.subr.bf16.mxu0 0
      %540 = vmatpush1.bf16.xpose.msra.mxu0 %v523
      %541 = vmatprep.subr.bf16.mxu0 0
      %542 = vmatpush2.bf16.xpose.msra.mxu0 0
      %543 = vmatprep.subr.bf16.mxu0 0
      %544 = vmatpush2.bf16.xpose.msra.mxu0 0
      %545 = vmatprep.subr.bf16.mxu0 0
      %546 = vmatpush2.bf16.xpose.msra.mxu0 0
      %547 = vmatprep.subr.bf16.mxu0 0
      %548 = vmatpush2.bf16.xpose.msra.mxu0 0
      %549 = vmatprep.subr.bf16.mxu0 0
      %550 = vmatpush2.bf16.xpose.msra.mxu0 0
      %551 = vmatprep.subr.bf16.mxu0 0
      %552 = vmatpush2.bf16.xpose.msra.mxu0 0
      %553 = vmatprep.subr.bf16.mxu0 0
      %554 = vmatpush2.bf16.xpose.msra.mxu0 0
      %555 = vmatprep.subr.bf16.mxu0 0
      %556 = vmatpush2.bf16.xpose.msra.mxu0 0
      %557 = vmatprep.mubr.bf16.mxu0 0
      %558 = vmatmul.mubr.bf16.gmra.mxu0 %v520
      %v559 = vpop.f32.mrf.mxu0
      %v560 = vadd.f32 0.0, %v559
      %v561 = vpop.f32.mrf.mxu0
      %v562 = vpop.f32.mrf.mxu0
      %v563 = vpop.f32.mrf.mxu0
      %564 = vdwg.mxu0
      %v565 = vmul.f32 %v560, 0.35355338
      %v566 = vsel %vm172, %v565, -inf
      %567 = vmax.xlane.f32.xlu0 %v566
      %v568 = vpop.xlane.xlu0 %567
      %v569 = vsub.f32 %v565, %v568
      %v570 = vmul.f32 %v569, 1.442695
      %v571 = vpow.pop %v570
      %v572 = vsel %vm172, %v571, 0.0
      %573 = vadd.xlane.f32.xlu0 %v572
      %v574 = vpop.xlane.xlu0 %573
      %v575 = vrcp.pop %v574
      %v576 = vmul.f32 %v571, %v575
      %v577 = vpack.c.bf16 %v576, %v576
      %578 = vrot.lane.b32.xlu0 %v514, 40
      %v579 = vpop.permute.xlu0 %578
      %v581 = vsel %vm187, %v577, 0
      %v584 = vsel %vm191, %v579, 0
      %586 = vmatprep.subr.bf16.mxu0 0
      %587 = vmatpush1.bf16.msra.mxu0 0
      %588 = vmatprep.subr.bf16.mxu0 0
      %589 = vmatpush1.bf16.msra.mxu0 0
      %590 = vmatprep.subr.bf16.mxu0 0
      %591 = vmatpush1.bf16.msra.mxu0 0
      %592 = vmatprep.subr.bf16.mxu0 0
      %593 = vmatpush1.bf16.msra.mxu0 0
      %594 = vmatprep.subr.bf16.mxu0 0
      %595 = vmatpush1.bf16.msra.mxu0 0
      %596 = vmatprep.subr.bf16.mxu0 0
      %597 = vmatpush1.bf16.msra.mxu0 0
      %598 = vmatprep.subr.bf16.mxu0 0
      %599 = vmatpush1.bf16.msra.mxu0 0
      %600 = vmatprep.subr.bf16.mxu0 0
      %601 = vmatpush1.bf16.msra.mxu0 %v584
      %602 = vmatprep.subr.bf16.mxu0 0
      %603 = vmatpush2.bf16.msra.mxu0 0
      %604 = vmatprep.subr.bf16.mxu0 0
      %605 = vmatpush2.bf16.msra.mxu0 0
      %606 = vmatprep.subr.bf16.mxu0 0
      %607 = vmatpush2.bf16.msra.mxu0 0
      %608 = vmatprep.subr.bf16.mxu0 0
      %609 = vmatpush2.bf16.msra.mxu0 0
      %610 = vmatprep.subr.bf16.mxu0 0
      %611 = vmatpush2.bf16.msra.mxu0 0
      %612 = vmatprep.subr.bf16.mxu0 0
      %613 = vmatpush2.bf16.msra.mxu0 0
      %614 = vmatprep.subr.bf16.mxu0 0
      %615 = vmatpush2.bf16.msra.mxu0 0
      %616 = vmatprep.subr.bf16.mxu0 0
      %617 = vmatpush2.bf16.msra.mxu0 0
      %618 = vmatprep.mubr.bf16.mxu0 0
      %619 = vmatmul.mubr.bf16.gmra.mxu0 %v581
      %v620 = vpop.f32.mrf.mxu0
      %v621 = vadd.f32 0.0, %v620
      %v622 = vpop.f32.mrf.mxu0
      %v623 = vpop.f32.mrf.mxu0
      %v624 = vpop.f32.mrf.mxu0
      %625 = vdwg.mxu0
      %v626 = vpack.c.bf16 %v621, %v621
      %v629 = vunpack.c.l.s4 1983009808
      %v630 = vunpack.c.0.s8 %v629
      %v631 = vlaneseq
      %v632 = vshrl.u32 %v631, 7
      %v633 = vsub.s32 %v630, %v632
      %v634 = vrot.slane %v626, %v633
      %635 = vrot.lane.b32.xlu0 %v634, 24
      %v636 = vpop.permute.xlu0 %635
      %vm638 = vcmask 255168
      %639 = vst.msk [vmem:[%s111] sm:$0x3] %vm638, %v636
      %p640 = scmp.lt.s32.totalorder %s12, 1
      %s641 = scalar_select %p640, %s12, 1
      %s642 = smul.addr %s641, 2
      %s643 = scalar_lea.vmem %s1, %s642
      // Predicated region
      $region25: #{mae_forward.20} parent=23 // pred_check
        %p644 = pneg %p56
      $region26: #{mae_forward.20} parent=23 // pred_check_branch
        %646 = sbr.rel (%p644) target = $region28
      $region27: #{mae_forward.20} parent=23 // pred_region
        _
      $region28: #{mae_forward.20} parent=23 // pred_fallthru
        _
    $region24: #{mae_forward.20} parent=5 // pred_fallthru
      _
    %p647 = scmp.le.s32.totalorder 2, %s7
    // Predicated region
    $region29: #{mae_forward.20} parent=5 // pred_check
      %p648 = pneg %p647
    $region30: #{mae_forward.20} parent=5 // pred_check_branch
      %650 = sbr.rel (%p648) target = $region32
    $region31: #{mae_forward.20} parent=5 // pred_region
      %s651 = ssub.s32 %s7, 2
      // Predicated region
      $region33: #{mae_forward.20} parent=31 // pred_check
        %p652 = pneg %p62
      $region34: #{mae_forward.20} parent=31 // pred_check_branch
        %654 = sbr.rel (%p652) target = $region36
      $region35: #{mae_forward.20} parent=31 // pred_region
        %p655 = scmp.lt.s32.totalorder %s13, 1
        %s656 = scalar_select %p655, %s13, 1
        %s657 = smul.addr %s656, 2
        %s658 = scalar_lea.vmem %s1, %s657
      $region36: #{mae_forward.20} parent=31 // pred_fallthru
        _
    $region32: #{mae_forward.20} parent=5 // pred_fallthru
      _
  $region6: #{mae_forward.20} parent=0 // loop_footer
    %s11 = sadd.s32 1, %s7
  $region7: #{mae_forward.20} parent=0 // loop_footer_branch
    %6 = sbr.rel target = $region3
  $region8: #{mae_forward.20} parent=0 // loop_exit
    _

// kernel: mae_forward.21
$region0: #{mae_forward.21}
  #allocation0 [shape = 'u32[]', space=smem, size = 0x4, offset = 0x4, fixed_abs, tag = 'smem constant byte address 0x4 - core index']
  #allocation1 [shape = 'u32[144,128]{1,0:T(1,128)}', space=vmem, size = 0x12000, scoped, tag = 'internal scratch']
  %s0 = inlined_call_operand.vmem [shape: bf16[8,32], index: 0, kind: input, shape index: {}]
  %s1 = inlined_call_operand.vmem [shape: bf16[32,32], index: 1, kind: input, shape index: {}]
  %s2 = inlined_call_operand.vmem [shape: f32[1,32], index: 2, kind: input, shape index: {}]
  %s3 = inlined_call_operand.vmem [shape: bf16[8,32], index: 3, kind: input, shape index: {}]
  %s4 = inlined_call_operand.vmem [shape: bf16[8,32], index: 4, kind: output, shape index: {}]
  %s5 = sld [smem:[#allocation0]]
  $region26: #{mae_forward.21} parent=0
    _
  %s7 = ssub.s32 1, %s5
  %s8 = scalar_select 0, %s7, %s5
  // Predicated region
  $region2: #{mae_forward.21} parent=0 // pred_check
    _
  $region3: #{mae_forward.21} parent=0 // pred_check_branch
    %10 = sbr.rel (0) target = $region5
  $region4: #{mae_forward.21} parent=0 // pred_region
    _
  $region5: #{mae_forward.21} parent=0 // pred_fallthru
    _
  // Predicated region
  $region6: #{mae_forward.21} parent=0 // pred_check
    _
  $region7: #{mae_forward.21} parent=0 // pred_check_branch
    %12 = sbr.rel (0) target = $region9
  $region8: #{mae_forward.21} parent=0 // pred_region
    _
  $region9: #{mae_forward.21} parent=0 // pred_fallthru
    _
  // Predicated region
  $region10: #{mae_forward.21} parent=0 // pred_check
    _
  $region11: #{mae_forward.21} parent=0 // pred_check_branch
    %14 = sbr.rel (0) target = $region13
  $region12: #{mae_forward.21} parent=0 // pred_region
    _
  $region13: #{mae_forward.21} parent=0 // pred_fallthru
    _
  // Predicated region
  $region14: #{mae_forward.21} parent=0 // pred_check
    _
  $region15: #{mae_forward.21} parent=0 // pred_check_branch
    %16 = sbr.rel (0) target = $region17
  $region16: #{mae_forward.21} parent=0 // pred_region
    _
  $region17: #{mae_forward.21} parent=0 // pred_fallthru
    _
  %v18 = vld [vmem:[%s0] sm:$0xf]
  %v19 = vld [vmem:[%s1] sm:$0xf]
  %v20 = vld [vmem:[%s1 + $0x4] sm:$0xf]
  %v21 = vld [vmem:[%s1 + $0x8] sm:$0xf]
  %v22 = vld [vmem:[%s1 + $0xc] sm:$0xf]
  %v23 = vld [vmem:[%s2] sm:$0x1]
  %v25 = vlaneseq
  %v26 = vshrl.u32 %v25, 7
  %v27 = vsub.s32 0, %v26
  %v28 = vrot.slane %v23, %v27
  %v34 = vunpack.c.l.b16 %v19
  %v35 = vunpack.c.l.b16 %v20
  %v36 = vunpack.c.l.b16 %v21
  %v37 = vunpack.c.l.b16 %v22
  %v38 = vpack.c.b16 %v35, %v34
  %v39 = vpack.c.b16 %v37, %v36
  %vm42 = vcmask 261120
  %v44 = vsel %vm42, %v18, 0
  %46 = vmatprep.subr.bf16.mxu0 0
  %47 = vmatpush1.bf16.msra.mxu0 0
  %48 = vmatprep.subr.bf16.mxu0 0
  %49 = vmatpush1.bf16.msra.mxu0 0
  %50 = vmatprep.subr.bf16.mxu0 0
  %51 = vmatpush1.bf16.msra.mxu0 0
  %52 = vmatprep.subr.bf16.mxu0 0
  %53 = vmatpush1.bf16.msra.mxu0 0
  %54 = vmatprep.subr.bf16.mxu0 0
  %55 = vmatpush1.bf16.msra.mxu0 0
  %56 = vmatprep.subr.bf16.mxu0 0
  %57 = vmatpush1.bf16.msra.mxu0 0
  %58 = vmatprep.subr.bf16.mxu0 0
  %59 = vmatpush1.bf16.msra.mxu0 %v39
  %60 = vmatprep.subr.bf16.mxu0 0
  %61 = vmatpush1.bf16.msra.mxu0 %v38
  %62 = vmatprep.subr.bf16.mxu0 0
  %63 = vmatpush2.bf16.msra.mxu0 0
  %64 = vmatprep.subr.bf16.mxu0 0
  %65 = vmatpush2.bf16.msra.mxu0 0
  %66 = vmatprep.subr.bf16.mxu0 0
  %67 = vmatpush2.bf16.msra.mxu0 0
  %68 = vmatprep.subr.bf16.mxu0 0
  %69 = vmatpush2.bf16.msra.mxu0 0
  %70 = vmatprep.subr.bf16.mxu0 0
  %71 = vmatpush2.bf16.msra.mxu0 0
  %72 = vmatprep.subr.bf16.mxu0 0
  %73 = vmatpush2.bf16.msra.mxu0 0
  %74 = vmatprep.subr.bf16.mxu0 0
  %75 = vmatpush2.bf16.msra.mxu0 0
  %76 = vmatprep.subr.bf16.mxu0 0
  %77 = vmatpush2.bf16.msra.mxu0 0
  %78 = vmatprep.mubr.bf16.mxu0 0
  %79 = vmatmul.mubr.bf16.gmra.mxu0 %v44
  %v80 = vpop.f32.mrf.mxu0
  %v81 = vadd.f32 %v28, %v80
  %v82 = vpop.f32.mrf.mxu0
  %v83 = vpop.f32.mrf.mxu0
  %v84 = vpop.f32.mrf.mxu0
  %85 = vdwg.mxu0
  %v86 = vld [vmem:[%s3] sm:$0xf]
  %v87 = vunpack.c.l.bf16 %v86
  %v88 = vadd.f32 %v81, %v87
  %v89 = vpack.c.bf16 %v88, %v88
  %vm90 = vcmask 257024
  %91 = vst.msk [vmem:[%s4] sm:$0xf] %vm90, %v89
  // Predicated region
  $region18: #{mae_forward.21} parent=0 // pred_check
    _
  $region19: #{mae_forward.21} parent=0 // pred_check_branch
    %93 = sbr.rel (0) target = $region21
  $region20: #{mae_forward.21} parent=0 // pred_region
    _
  $region21: #{mae_forward.21} parent=0 // pred_fallthru
    _
  // Predicated region
  $region22: #{mae_forward.21} parent=0 // pred_check
    _
  $region23: #{mae_forward.21} parent=0 // pred_check_branch
    %95 = sbr.rel (0) target = $region25
  $region24: #{mae_forward.21} parent=0 // pred_region
    _
  $region25: #{mae_forward.21} parent=0 // pred_fallthru
    _

// kernel: mae_forward.22
$region0: #{mae_forward.22}
  #allocation0 [shape = 'u32[]', space=smem, size = 0x4, offset = 0x4, fixed_abs, tag = 'smem constant byte address 0x4 - core index']
  #allocation1 [shape = 'u32[144,128]{1,0:T(1,128)}', space=vmem, size = 0x12000, scoped, tag = 'internal scratch']
  #allocation2 [shape = 'bf16[8,32]{1,0:T(8,128)(2,1)}', space=vmem, size = 0x800, scoped, tag = 'scratch operand']
  %s0 = inlined_call_operand.vmem [shape: bf16[8,32], index: 0, kind: input, shape index: {}]
  %s1 = inlined_call_operand.vmem [shape: bf16[32,128], index: 1, kind: input, shape index: {}]
  %s2 = inlined_call_operand.vmem [shape: f32[1,128], index: 2, kind: input, shape index: {}]
  %s3 = inlined_call_operand.vmem [shape: f32[1,32], index: 3, kind: input, shape index: {}]
  %s4 = inlined_call_operand.vmem [shape: f32[1,32], index: 4, kind: input, shape index: {}]
  %s5 = inlined_call_operand.vmem [shape: bf16[8,128], index: 5, kind: output, shape index: {}]
  %s6 = sld [smem:[#allocation0]]
  $region34: #{mae_forward.22} parent=0
    _
  %s8 = ssub.s32 1, %s6
  %s9 = scalar_select 0, %s8, %s6
  // Predicated region
  $region2: #{mae_forward.22} parent=0 // pred_check
    _
  $region3: #{mae_forward.22} parent=0 // pred_check_branch
    %11 = sbr.rel (0) target = $region5
  $region4: #{mae_forward.22} parent=0 // pred_region
    _
  $region5: #{mae_forward.22} parent=0 // pred_fallthru
    _
  // Predicated region
  $region6: #{mae_forward.22} parent=0 // pred_check
    _
  $region7: #{mae_forward.22} parent=0 // pred_check_branch
    %13 = sbr.rel (0) target = $region9
  $region8: #{mae_forward.22} parent=0 // pred_region
    _
  $region9: #{mae_forward.22} parent=0 // pred_fallthru
    _
  // Predicated region
  $region10: #{mae_forward.22} parent=0 // pred_check
    _
  $region11: #{mae_forward.22} parent=0 // pred_check_branch
    %15 = sbr.rel (0) target = $region13
  $region12: #{mae_forward.22} parent=0 // pred_region
    _
  $region13: #{mae_forward.22} parent=0 // pred_fallthru
    _
  // Predicated region
  $region14: #{mae_forward.22} parent=0 // pred_check
    _
  $region15: #{mae_forward.22} parent=0 // pred_check_branch
    %17 = sbr.rel (0) target = $region17
  $region16: #{mae_forward.22} parent=0 // pred_region
    _
  $region17: #{mae_forward.22} parent=0 // pred_fallthru
    _
  // Predicated region
  $region18: #{mae_forward.22} parent=0 // pred_check
    _
  $region19: #{mae_forward.22} parent=0 // pred_check_branch
    %19 = sbr.rel (0) target = $region21
  $region20: #{mae_forward.22} parent=0 // pred_region
    _
  $region21: #{mae_forward.22} parent=0 // pred_fallthru
    _
  %p21 = scmp.eq.s32.totalorder 0, 0
  // Predicated region
  $region22: #{mae_forward.22} parent=0 // pred_check
    %p22 = pneg %p21
  $region23: #{mae_forward.22} parent=0 // pred_check_branch
    %24 = sbr.rel (%p22) target = $region25
  $region24: #{mae_forward.22} parent=0 // pred_region
    %v25 = vld [vmem:[%s0] sm:$0xf]
    %v26 = vunpack.c.l.bf16 %v25
    %vm27 = vcmask 261120
    %v28 = vsel %vm27, %v26, 0.0
    %29 = vadd.xlane.f32.xlu0 %v28
    %v30 = vpop.xlane.xlu0 %29
    %v31 = vrcp.pop 32.0
    %v32 = vmul.f32 %v30, %v31
    %v33 = vsub.f32 %v26, %v32
    %v34 = vmul.f32 %v33, %v33
    %v35 = vsel %vm27, %v34, 0.0
    %36 = vadd.xlane.f32.xlu0 %v35
    %v37 = vpop.xlane.xlu0 %36
    %v38 = vmul.f32 %v37, %v31
    %v39 = vadd.f32 %v38, 1e-06
    %v40 = vrsqrt.pop %v39
    %v41 = vmul.f32 %v33, %v40
    %v42 = vld [vmem:[%s3] sm:$0x1]
    %v44 = vlaneseq
    %v45 = vshrl.u32 %v44, 7
    %v46 = vsub.s32 0, %v45
    %v47 = vrot.slane %v42, %v46
    %v49 = vmul.f32 %v41, %v47
    %v50 = vld [vmem:[%s4] sm:$0x1]
    %v52 = vlaneseq
    %v53 = vshrl.u32 %v52, 7
    %v54 = vsub.s32 0, %v53
    %v55 = vrot.slane %v50, %v54
    %v57 = vadd.f32 %v49, %v55
    %v58 = vpack.c.bf16 %v57, %v57
    %vm59 = vcmask 257024
    %60 = vst.msk [vmem:[#allocation2] sm:$0xf] %vm59, %v58
  $region25: #{mae_forward.22} parent=0 // pred_fallthru
    _
  %v61 = vld [vmem:[#allocation2] sm:$0xf]
  %v62 = vld [vmem:[%s1] sm:$0xf]
  %v63 = vld [vmem:[%s1 + $0x4] sm:$0xf]
  %v64 = vld [vmem:[%s1 + $0x8] sm:$0xf]
  %v65 = vld [vmem:[%s1 + $0xc] sm:$0xf]
  %v66 = vld [vmem:[%s2] sm:$0x1]
  %v68 = vlaneseq
  %v69 = vshrl.u32 %v68, 7
  %v70 = vsub.s32 0, %v69
  %v71 = vrot.slane %v66, %v70
  %v77 = vunpack.c.l.b16 %v62
  %v78 = vunpack.c.l.b16 %v63
  %v79 = vunpack.c.l.b16 %v64
  %v80 = vunpack.c.l.b16 %v65
  %v81 = vpack.c.b16 %v78, %v77
  %v82 = vpack.c.b16 %v80, %v79
  %vm85 = vcmask 261120
  %v87 = vsel %vm85, %v61, 0
  %89 = vmatprep.subr.bf16.mxu0 0
  %90 = vmatpush1.bf16.msra.mxu0 0
  %91 = vmatprep.subr.bf16.mxu0 0
  %92 = vmatpush1.bf16.msra.mxu0 0
  %93 = vmatprep.subr.bf16.mxu0 0
  %94 = vmatpush1.bf16.msra.mxu0 0
  %95 = vmatprep.subr.bf16.mxu0 0
  %96 = vmatpush1.bf16.msra.mxu0 0
  %97 = vmatprep.subr.bf16.mxu0 0
  %98 = vmatpush1.bf16.msra.mxu0 0
  %99 = vmatprep.subr.bf16.mxu0 0
  %100 = vmatpush1.bf16.msra.mxu0 0
  %101 = vmatprep.subr.bf16.mxu0 0
  %102 = vmatpush1.bf16.msra.mxu0 %v82
  %103 = vmatprep.subr.bf16.mxu0 0
  %104 = vmatpush1.bf16.msra.mxu0 %v81
  %105 = vmatprep.subr.bf16.mxu0 0
  %106 = vmatpush2.bf16.msra.mxu0 0
  %107 = vmatprep.subr.bf16.mxu0 0
  %108 = vmatpush2.bf16.msra.mxu0 0
  %109 = vmatprep.subr.bf16.mxu0 0
  %110 = vmatpush2.bf16.msra.mxu0 0
  %111 = vmatprep.subr.bf16.mxu0 0
  %112 = vmatpush2.bf16.msra.mxu0 0
  %113 = vmatprep.subr.bf16.mxu0 0
  %114 = vmatpush2.bf16.msra.mxu0 0
  %115 = vmatprep.subr.bf16.mxu0 0
  %116 = vmatpush2.bf16.msra.mxu0 0
  %117 = vmatprep.subr.bf16.mxu0 0
  %118 = vmatpush2.bf16.msra.mxu0 0
  %119 = vmatprep.subr.bf16.mxu0 0
  %120 = vmatpush2.bf16.msra.mxu0 0
  %121 = vmatprep.mubr.bf16.mxu0 0
  %122 = vmatmul.mubr.bf16.gmra.mxu0 %v87
  %v123 = vpop.f32.mrf.mxu0
  %v124 = vadd.f32 %v71, %v123
  %v125 = vpop.f32.mrf.mxu0
  %v126 = vpop.f32.mrf.mxu0
  %v127 = vpop.f32.mrf.mxu0
  %128 = vdwg.mxu0
  %v129 = vmul.f32 %v124, 0.70710677
  %v130 = vand.u32 2147483647, %v129
  %v131 = vmul.f32 %v130, 0.3275911
  %v132 = vadd.f32 %v131, 1.0
  %v133 = vrcp.pop %v132
  %v134 = vmul.f32 1.0, %v133
  %v135 = vmul.f32 %v134, 1.0614054
  %v136 = vsub.f32 %v135, 1.4531521
  %v137 = vmul.f32 %v136, %v134
  %v138 = vadd.f32 %v137, 1.4214138
  %v139 = vmul.f32 %v138, %v134
  %v140 = vsub.f32 %v139, 0.28449672
  %v141 = vmul.f32 %v140, %v134
  %v142 = vadd.f32 %v141, 0.2548296
  %v143 = vmul.f32 %v142, %v134
  %v144 = vsub.f32 0.0, %v130
  %v145 = vmul.f32 %v144, %v130
  %v146 = vmul.f32 %v145, 1.442695
  %v147 = vpow.pop %v146
  %v148 = vmul.f32 %v143, %v147
  %v149 = vsub.f32 1.0, %v148
  %vm150 = vcmp.ge.f32.partialorder %v129, 0.0
  %v151 = vsub.f32 0.0, %v149
  %v152 = vsel %vm150, %v149, %v151
  %v153 = vmul.f32 %v124, 0.5
  %v154 = vadd.f32 %v152, 1.0
  %v155 = vmul.f32 %v153, %v154
  %v156 = vpack.c.bf16 %v155, %v155
  %157 = vst [vmem:[%s5] sm:$0xf] %v156
  // Predicated region
  $region26: #{mae_forward.22} parent=0 // pred_check
    _
  $region27: #{mae_forward.22} parent=0 // pred_check_branch
    %159 = sbr.rel (0) target = $region29
  $region28: #{mae_forward.22} parent=0 // pred_region
    _
  $region29: #{mae_forward.22} parent=0 // pred_fallthru
    _
  // Predicated region
  $region30: #{mae_forward.22} parent=0 // pred_check
    _
  $region31: #{mae_forward.22} parent=0 // pred_check_branch
    %161 = sbr.rel (0) target = $region33
  $region32: #{mae_forward.22} parent=0 // pred_region
    _
  $region33: #{mae_forward.22} parent=0 // pred_fallthru
    _

// kernel: mae_forward.23
$region0: #{mae_forward.23}
  #allocation0 [shape = 'u32[]', space=smem, size = 0x4, offset = 0x4, fixed_abs, tag = 'smem constant byte address 0x4 - core index']
  #allocation1 [shape = 'u32[144,128]{1,0:T(1,128)}', space=vmem, size = 0x12000, scoped, tag = 'internal scratch']
  %s0 = inlined_call_operand.vmem [shape: bf16[8,128], index: 0, kind: input, shape index: {}]
  %s1 = inlined_call_operand.vmem [shape: bf16[128,32], index: 1, kind: input, shape index: {}]
  %s2 = inlined_call_operand.vmem [shape: f32[1,32], index: 2, kind: input, shape index: {}]
  %s3 = inlined_call_operand.vmem [shape: bf16[8,32], index: 3, kind: input, shape index: {}]
  %s4 = inlined_call_operand.vmem [shape: bf16[8,32], index: 4, kind: output, shape index: {}]
  %s5 = sld [smem:[#allocation0]]
  $region26: #{mae_forward.23} parent=0
    _
  %s7 = ssub.s32 1, %s5
  %s8 = scalar_select 0, %s7, %s5
  // Predicated region
  $region2: #{mae_forward.23} parent=0 // pred_check
    _
  $region3: #{mae_forward.23} parent=0 // pred_check_branch
    %10 = sbr.rel (0) target = $region5
  $region4: #{mae_forward.23} parent=0 // pred_region
    _
  $region5: #{mae_forward.23} parent=0 // pred_fallthru
    _
  // Predicated region
  $region6: #{mae_forward.23} parent=0 // pred_check
    _
  $region7: #{mae_forward.23} parent=0 // pred_check_branch
    %12 = sbr.rel (0) target = $region9
  $region8: #{mae_forward.23} parent=0 // pred_region
    _
  $region9: #{mae_forward.23} parent=0 // pred_fallthru
    _
  // Predicated region
  $region10: #{mae_forward.23} parent=0 // pred_check
    _
  $region11: #{mae_forward.23} parent=0 // pred_check_branch
    %14 = sbr.rel (0) target = $region13
  $region12: #{mae_forward.23} parent=0 // pred_region
    _
  $region13: #{mae_forward.23} parent=0 // pred_fallthru
    _
  // Predicated region
  $region14: #{mae_forward.23} parent=0 // pred_check
    _
  $region15: #{mae_forward.23} parent=0 // pred_check_branch
    %16 = sbr.rel (0) target = $region17
  $region16: #{mae_forward.23} parent=0 // pred_region
    _
  $region17: #{mae_forward.23} parent=0 // pred_fallthru
    _
  %v18 = vld [vmem:[%s0] sm:$0xf]
  %v19 = vld [vmem:[%s1] sm:$0xf]
  %v20 = vld [vmem:[%s1 + $0x4] sm:$0xf]
  %v21 = vld [vmem:[%s1 + $0x8] sm:$0xf]
  %v22 = vld [vmem:[%s1 + $0xc] sm:$0xf]
  %v23 = vld [vmem:[%s1 + $0x10] sm:$0xf]
  %v24 = vld [vmem:[%s1 + $0x14] sm:$0xf]
  %v25 = vld [vmem:[%s1 + $0x18] sm:$0xf]
  %v26 = vld [vmem:[%s1 + $0x1c] sm:$0xf]
  %v27 = vld [vmem:[%s1 + $0x20] sm:$0xf]
  %v28 = vld [vmem:[%s1 + $0x24] sm:$0xf]
  %v29 = vld [vmem:[%s1 + $0x28] sm:$0xf]
  %v30 = vld [vmem:[%s1 + $0x2c] sm:$0xf]
  %v31 = vld [vmem:[%s1 + $0x30] sm:$0xf]
  %v32 = vld [vmem:[%s1 + $0x34] sm:$0xf]
  %v33 = vld [vmem:[%s1 + $0x38] sm:$0xf]
  %v34 = vld [vmem:[%s1 + $0x3c] sm:$0xf]
  %v35 = vld [vmem:[%s2] sm:$0x1]
  %v37 = vlaneseq
  %v38 = vshrl.u32 %v37, 7
  %v39 = vsub.s32 0, %v38
  %v40 = vrot.slane %v35, %v39
  %v58 = vunpack.c.l.b16 %v19
  %v59 = vunpack.c.l.b16 %v20
  %v60 = vunpack.c.l.b16 %v21
  %v61 = vunpack.c.l.b16 %v22
  %v62 = vunpack.c.l.b16 %v23
  %v63 = vunpack.c.l.b16 %v24
  %v64 = vunpack.c.l.b16 %v25
  %v65 = vunpack.c.l.b16 %v26
  %v66 = vunpack.c.l.b16 %v27
  %v67 = vunpack.c.l.b16 %v28
  %v68 = vunpack.c.l.b16 %v29
  %v69 = vunpack.c.l.b16 %v30
  %v70 = vunpack.c.l.b16 %v31
  %v71 = vunpack.c.l.b16 %v32
  %v72 = vunpack.c.l.b16 %v33
  %v73 = vunpack.c.l.b16 %v34
  %v74 = vpack.c.b16 %v59, %v58
  %v75 = vpack.c.b16 %v61, %v60
  %v76 = vpack.c.b16 %v63, %v62
  %v77 = vpack.c.b16 %v65, %v64
  %v78 = vpack.c.b16 %v67, %v66
  %v79 = vpack.c.b16 %v69, %v68
  %v80 = vpack.c.b16 %v71, %v70
  %v81 = vpack.c.b16 %v73, %v72
  %90 = vmatprep.subr.bf16.mxu0 0
  %91 = vmatpush1.bf16.msra.mxu0 %v81
  %92 = vmatprep.subr.bf16.mxu0 0
  %93 = vmatpush1.bf16.msra.mxu0 %v80
  %94 = vmatprep.subr.bf16.mxu0 0
  %95 = vmatpush1.bf16.msra.mxu0 %v79
  %96 = vmatprep.subr.bf16.mxu0 0
  %97 = vmatpush1.bf16.msra.mxu0 %v78
  %98 = vmatprep.subr.bf16.mxu0 0
  %99 = vmatpush1.bf16.msra.mxu0 %v77
  %100 = vmatprep.subr.bf16.mxu0 0
  %101 = vmatpush1.bf16.msra.mxu0 %v76
  %102 = vmatprep.subr.bf16.mxu0 0
  %103 = vmatpush1.bf16.msra.mxu0 %v75
  %104 = vmatprep.subr.bf16.mxu0 0
  %105 = vmatpush1.bf16.msra.mxu0 %v74
  %106 = vmatprep.subr.bf16.mxu0 0
  %107 = vmatpush2.bf16.msra.mxu0 0
  %108 = vmatprep.subr.bf16.mxu0 0
  %109 = vmatpush2.bf16.msra.mxu0 0
  %110 = vmatprep.subr.bf16.mxu0 0
  %111 = vmatpush2.bf16.msra.mxu0 0
  %112 = vmatprep.subr.bf16.mxu0 0
  %113 = vmatpush2.bf16.msra.mxu0 0
  %114 = vmatprep.subr.bf16.mxu0 0
  %115 = vmatpush2.bf16.msra.mxu0 0
  %116 = vmatprep.subr.bf16.mxu0 0
  %117 = vmatpush2.bf16.msra.mxu0 0
  %118 = vmatprep.subr.bf16.mxu0 0
  %119 = vmatpush2.bf16.msra.mxu0 0
  %120 = vmatprep.subr.bf16.mxu0 0
  %121 = vmatpush2.bf16.msra.mxu0 0
  %122 = vmatprep.mubr.bf16.mxu0 0
  %123 = vmatmul.mubr.bf16.gmra.mxu0 %v18
  %v124 = vpop.f32.mrf.mxu0
  %v125 = vadd.f32 %v40, %v124
  %v126 = vpop.f32.mrf.mxu0
  %v127 = vpop.f32.mrf.mxu0
  %v128 = vpop.f32.mrf.mxu0
  %129 = vdwg.mxu0
  %v130 = vld [vmem:[%s3] sm:$0xf]
  %v131 = vunpack.c.l.bf16 %v130
  %v132 = vadd.f32 %v125, %v131
  %v133 = vpack.c.bf16 %v132, %v132
  %vm134 = vcmask 257024
  %135 = vst.msk [vmem:[%s4] sm:$0xf] %vm134, %v133
  // Predicated region
  $region18: #{mae_forward.23} parent=0 // pred_check
    _
  $region19: #{mae_forward.23} parent=0 // pred_check_branch
    %137 = sbr.rel (0) target = $region21
  $region20: #{mae_forward.23} parent=0 // pred_region
    _
  $region21: #{mae_forward.23} parent=0 // pred_fallthru
    _
  // Predicated region
  $region22: #{mae_forward.23} parent=0 // pred_check
    _
  $region23: #{mae_forward.23} parent=0 // pred_check_branch
    %139 = sbr.rel (0) target = $region25
  $region24: #{mae_forward.23} parent=0 // pred_region
    _
  $region25: #{mae_forward.23} parent=0 // pred_fallthru
    _

// kernel: mae_forward.29
$region0: #{mae_forward.29}
  #allocation0 [shape = 'u32[]', space=smem, size = 0x4, offset = 0x4, fixed_abs, tag = 'smem constant byte address 0x4 - core index']
  #allocation1 [shape = 'u32[144,128]{1,0:T(1,128)}', space=vmem, size = 0x12000, scoped, tag = 'internal scratch']
  #allocation2 [shape = 'bf16[8,32]{1,0:T(8,128)(2,1)}', space=vmem, size = 0x800, scoped, tag = 'scratch operand']
  %s0 = inlined_call_operand.vmem [shape: bf16[8,32], index: 0, kind: input, shape index: {}]
  %s1 = inlined_call_operand.vmem [shape: bf16[32,8], index: 1, kind: input, shape index: {}]
  %s2 = inlined_call_operand.vmem [shape: f32[1,8], index: 2, kind: input, shape index: {}]
  %s3 = inlined_call_operand.vmem [shape: f32[1,32], index: 3, kind: input, shape index: {}]
  %s4 = inlined_call_operand.vmem [shape: f32[1,32], index: 4, kind: input, shape index: {}]
  %s5 = inlined_call_operand.vmem [shape: bf16[8,8], index: 5, kind: output, shape index: {}]
  %s6 = sld [smem:[#allocation0]]
  $region34: #{mae_forward.29} parent=0
    _
  %s8 = ssub.s32 1, %s6
  %s9 = scalar_select 0, %s8, %s6
  // Predicated region
  $region2: #{mae_forward.29} parent=0 // pred_check
    _
  $region3: #{mae_forward.29} parent=0 // pred_check_branch
    %11 = sbr.rel (0) target = $region5
  $region4: #{mae_forward.29} parent=0 // pred_region
    _
  $region5: #{mae_forward.29} parent=0 // pred_fallthru
    _
  // Predicated region
  $region6: #{mae_forward.29} parent=0 // pred_check
    _
  $region7: #{mae_forward.29} parent=0 // pred_check_branch
    %13 = sbr.rel (0) target = $region9
  $region8: #{mae_forward.29} parent=0 // pred_region
    _
  $region9: #{mae_forward.29} parent=0 // pred_fallthru
    _
  // Predicated region
  $region10: #{mae_forward.29} parent=0 // pred_check
    _
  $region11: #{mae_forward.29} parent=0 // pred_check_branch
    %15 = sbr.rel (0) target = $region13
  $region12: #{mae_forward.29} parent=0 // pred_region
    _
  $region13: #{mae_forward.29} parent=0 // pred_fallthru
    _
  // Predicated region
  $region14: #{mae_forward.29} parent=0 // pred_check
    _
  $region15: #{mae_forward.29} parent=0 // pred_check_branch
    %17 = sbr.rel (0) target = $region17
  $region16: #{mae_forward.29} parent=0 // pred_region
    _
  $region17: #{mae_forward.29} parent=0 // pred_fallthru
    _
  // Predicated region
  $region18: #{mae_forward.29} parent=0 // pred_check
    _
  $region19: #{mae_forward.29} parent=0 // pred_check_branch
    %19 = sbr.rel (0) target = $region21
  $region20: #{mae_forward.29} parent=0 // pred_region
    _
  $region21: #{mae_forward.29} parent=0 // pred_fallthru
    _
  %p21 = scmp.eq.s32.totalorder 0, 0
  // Predicated region
  $region22: #{mae_forward.29} parent=0 // pred_check
    %p22 = pneg %p21
  $region23: #{mae_forward.29} parent=0 // pred_check_branch
    %24 = sbr.rel (%p22) target = $region25
  $region24: #{mae_forward.29} parent=0 // pred_region
    %v25 = vld [vmem:[%s0] sm:$0xf]
    %v26 = vunpack.c.l.bf16 %v25
    %vm27 = vcmask 261120
    %v28 = vsel %vm27, %v26, 0.0
    %29 = vadd.xlane.f32.xlu0 %v28
    %v30 = vpop.xlane.xlu0 %29
    %v31 = vrcp.pop 32.0
    %v32 = vmul.f32 %v30, %v31
    %v33 = vsub.f32 %v26, %v32
    %v34 = vmul.f32 %v33, %v33
    %v35 = vsel %vm27, %v34, 0.0
    %36 = vadd.xlane.f32.xlu0 %v35
    %v37 = vpop.xlane.xlu0 %36
    %v38 = vmul.f32 %v37, %v31
    %v39 = vadd.f32 %v38, 1e-06
    %v40 = vrsqrt.pop %v39
    %v41 = vmul.f32 %v33, %v40
    %v42 = vld [vmem:[%s3] sm:$0x1]
    %v44 = vlaneseq
    %v45 = vshrl.u32 %v44, 7
    %v46 = vsub.s32 0, %v45
    %v47 = vrot.slane %v42, %v46
    %v49 = vmul.f32 %v41, %v47
    %v50 = vld [vmem:[%s4] sm:$0x1]
    %v52 = vlaneseq
    %v53 = vshrl.u32 %v52, 7
    %v54 = vsub.s32 0, %v53
    %v55 = vrot.slane %v50, %v54
    %v57 = vadd.f32 %v49, %v55
    %v58 = vpack.c.bf16 %v57, %v57
    %vm59 = vcmask 257024
    %60 = vst.msk [vmem:[#allocation2] sm:$0xf] %vm59, %v58
  $region25: #{mae_forward.29} parent=0 // pred_fallthru
    _
  %v61 = vld [vmem:[#allocation2] sm:$0xf]
  %v62 = vld [vmem:[%s1] sm:$0xf]
  %v63 = vld [vmem:[%s1 + $0x4] sm:$0xf]
  %v64 = vld [vmem:[%s1 + $0x8] sm:$0xf]
  %v65 = vld [vmem:[%s1 + $0xc] sm:$0xf]
  %v66 = vld [vmem:[%s2] sm:$0x1]
  %v68 = vlaneseq
  %v69 = vshrl.u32 %v68, 7
  %v70 = vsub.s32 0, %v69
  %v71 = vrot.slane %v66, %v70
  %v77 = vunpack.c.l.b16 %v62
  %v78 = vunpack.c.l.b16 %v63
  %v79 = vunpack.c.l.b16 %v64
  %v80 = vunpack.c.l.b16 %v65
  %v81 = vpack.c.b16 %v78, %v77
  %v82 = vpack.c.b16 %v80, %v79
  %vm85 = vcmask 261120
  %v87 = vsel %vm85, %v61, 0
  %89 = vmatprep.subr.bf16.mxu0 0
  %90 = vmatpush1.bf16.msra.mxu0 0
  %91 = vmatprep.subr.bf16.mxu0 0
  %92 = vmatpush1.bf16.msra.mxu0 0
  %93 = vmatprep.subr.bf16.mxu0 0
  %94 = vmatpush1.bf16.msra.mxu0 0
  %95 = vmatprep.subr.bf16.mxu0 0
  %96 = vmatpush1.bf16.msra.mxu0 0
  %97 = vmatprep.subr.bf16.mxu0 0
  %98 = vmatpush1.bf16.msra.mxu0 0
  %99 = vmatprep.subr.bf16.mxu0 0
  %100 = vmatpush1.bf16.msra.mxu0 0
  %101 = vmatprep.subr.bf16.mxu0 0
  %102 = vmatpush1.bf16.msra.mxu0 %v82
  %103 = vmatprep.subr.bf16.mxu0 0
  %104 = vmatpush1.bf16.msra.mxu0 %v81
  %105 = vmatprep.subr.bf16.mxu0 0
  %106 = vmatpush2.bf16.msra.mxu0 0
  %107 = vmatprep.subr.bf16.mxu0 0
  %108 = vmatpush2.bf16.msra.mxu0 0
  %109 = vmatprep.subr.bf16.mxu0 0
  %110 = vmatpush2.bf16.msra.mxu0 0
  %111 = vmatprep.subr.bf16.mxu0 0
  %112 = vmatpush2.bf16.msra.mxu0 0
  %113 = vmatprep.subr.bf16.mxu0 0
  %114 = vmatpush2.bf16.msra.mxu0 0
  %115 = vmatprep.subr.bf16.mxu0 0
  %116 = vmatpush2.bf16.msra.mxu0 0
  %117 = vmatprep.subr.bf16.mxu0 0
  %118 = vmatpush2.bf16.msra.mxu0 0
  %119 = vmatprep.subr.bf16.mxu0 0
  %120 = vmatpush2.bf16.msra.mxu0 0
  %121 = vmatprep.mubr.bf16.mxu0 0
  %122 = vmatmul.mubr.bf16.gmra.mxu0 %v87
  %v123 = vpop.f32.mrf.mxu0
  %v124 = vadd.f32 %v71, %v123
  %v125 = vpop.f32.mrf.mxu0
  %v126 = vpop.f32.mrf.mxu0
  %v127 = vpop.f32.mrf.mxu0
  %128 = vdwg.mxu0
  %v129 = vpack.c.bf16 %v124, %v124
  %vm130 = vcmask 60416
  %131 = vst.msk [vmem:[%s5] sm:$0xf] %vm130, %v129
  // Predicated region
  $region26: #{mae_forward.29} parent=0 // pred_check
    _
  $region27: #{mae_forward.29} parent=0 // pred_check_branch
    %133 = sbr.rel (0) target = $region29
  $region28: #{mae_forward.29} parent=0 // pred_region
    _
  $region29: #{mae_forward.29} parent=0 // pred_fallthru
    _
  // Predicated region
  $region30: #{mae_forward.29} parent=0 // pred_check
    _
  $region31: #{mae_forward.29} parent=0 // pred_check_branch
    %135 = sbr.rel (0) target = $region33
  $region32: #{mae_forward.29} parent=0 // pred_region
    _
  $region33: #{mae_forward.29} parent=0 // pred_fallthru
    _

// kernel: mae_forward.32
$region0: #{mae_forward.32}
  #allocation0 [shape = 'u32[]', space=smem, size = 0x4, offset = 0x4, fixed_abs, tag = 'smem constant byte address 0x4 - core index']
  #allocation1 [shape = 'u32[144,128]{1,0:T(1,128)}', space=vmem, size = 0x12000, scoped, tag = 'internal scratch']
  %s0 = inlined_call_operand.vmem [shape: bf16[32,8], index: 0, kind: input, shape index: {}]
  %s1 = inlined_call_operand.vmem [shape: bf16[8,8], index: 1, kind: input, shape index: {}]
  %s2 = inlined_call_operand.vmem [shape: f32[1,8], index: 2, kind: input, shape index: {}]
  %s3 = inlined_call_operand.vmem [shape: bf16[32,8], index: 3, kind: input, shape index: {}]
  %s4 = inlined_call_operand.vmem [shape: bf16[32,8], index: 4, kind: output, shape index: {}]
  %s5 = sld [smem:[#allocation0]]
  $region26: #{mae_forward.32} parent=0
    _
  %s7 = ssub.s32 1, %s5
  %s8 = scalar_select 0, %s7, %s5
  // Predicated region
  $region2: #{mae_forward.32} parent=0 // pred_check
    _
  $region3: #{mae_forward.32} parent=0 // pred_check_branch
    %10 = sbr.rel (0) target = $region5
  $region4: #{mae_forward.32} parent=0 // pred_region
    _
  $region5: #{mae_forward.32} parent=0 // pred_fallthru
    _
  // Predicated region
  $region6: #{mae_forward.32} parent=0 // pred_check
    _
  $region7: #{mae_forward.32} parent=0 // pred_check_branch
    %12 = sbr.rel (0) target = $region9
  $region8: #{mae_forward.32} parent=0 // pred_region
    _
  $region9: #{mae_forward.32} parent=0 // pred_fallthru
    _
  // Predicated region
  $region10: #{mae_forward.32} parent=0 // pred_check
    _
  $region11: #{mae_forward.32} parent=0 // pred_check_branch
    %14 = sbr.rel (0) target = $region13
  $region12: #{mae_forward.32} parent=0 // pred_region
    _
  $region13: #{mae_forward.32} parent=0 // pred_fallthru
    _
  // Predicated region
  $region14: #{mae_forward.32} parent=0 // pred_check
    _
  $region15: #{mae_forward.32} parent=0 // pred_check_branch
    %16 = sbr.rel (0) target = $region17
  $region16: #{mae_forward.32} parent=0 // pred_region
    _
  $region17: #{mae_forward.32} parent=0 // pred_fallthru
    _
  %v18 = vld [vmem:[%s0] sm:$0xf]
  %v19 = vld [vmem:[%s0 + $0x4] sm:$0xf]
  %v20 = vld [vmem:[%s0 + $0x8] sm:$0xf]
  %v21 = vld [vmem:[%s0 + $0xc] sm:$0xf]
  %v22 = vld [vmem:[%s1] sm:$0xf]
  %v23 = vld [vmem:[%s2] sm:$0x1]
  %v25 = vlaneseq
  %v26 = vshrl.u32 %v25, 7
  %v27 = vsub.s32 0, %v26
  %v28 = vrot.slane %v23, %v27
  %v34 = vunpack.c.l.b16 %v18
  %v35 = vunpack.c.l.b16 %v19
  %v36 = vunpack.c.l.b16 %v20
  %v37 = vunpack.c.l.b16 %v21
  %v38 = vpack.c.b16 %v35, %v34
  %v39 = vpack.c.b16 %v37, %v36
  %vm40 = vcmask 64512
  %v42 = vsel %vm40, %v38, 0
  %v45 = vsel %vm40, %v39, 0
  %vm47 = vcmask 1043456
  %v49 = vsel %vm47, %v22, 0
  %51 = vmatprep.subr.bf16.mxu0 0
  %52 = vmatpush1.bf16.msra.mxu0 0
  %53 = vmatprep.subr.bf16.mxu0 0
  %54 = vmatpush1.bf16.msra.mxu0 0
  %55 = vmatprep.subr.bf16.mxu0 0
  %56 = vmatpush1.bf16.msra.mxu0 0
  %57 = vmatprep.subr.bf16.mxu0 0
  %58 = vmatpush1.bf16.msra.mxu0 0
  %59 = vmatprep.subr.bf16.mxu0 0
  %60 = vmatpush1.bf16.msra.mxu0 0
  %61 = vmatprep.subr.bf16.mxu0 0
  %62 = vmatpush1.bf16.msra.mxu0 0
  %63 = vmatprep.subr.bf16.mxu0 0
  %64 = vmatpush1.bf16.msra.mxu0 0
  %65 = vmatprep.subr.bf16.mxu0 0
  %66 = vmatpush1.bf16.msra.mxu0 %v49
  %67 = vmatprep.subr.bf16.mxu0 0
  %68 = vmatpush2.bf16.msra.mxu0 0
  %69 = vmatprep.subr.bf16.mxu0 0
  %70 = vmatpush2.bf16.msra.mxu0 0
  %71 = vmatprep.subr.bf16.mxu0 0
  %72 = vmatpush2.bf16.msra.mxu0 0
  %73 = vmatprep.subr.bf16.mxu0 0
  %74 = vmatpush2.bf16.msra.mxu0 0
  %75 = vmatprep.subr.bf16.mxu0 0
  %76 = vmatpush2.bf16.msra.mxu0 0
  %77 = vmatprep.subr.bf16.mxu0 0
  %78 = vmatpush2.bf16.msra.mxu0 0
  %79 = vmatprep.subr.bf16.mxu0 0
  %80 = vmatpush2.bf16.msra.mxu0 0
  %81 = vmatprep.subr.bf16.mxu0 0
  %82 = vmatpush2.bf16.msra.mxu0 0
  %83 = vmatprep.mubr.bf16.mxu0 0
  %84 = vmatmul.mubr.bf16.gmra.mxu0 %v42
  %v85 = vpop.f32.mrf.mxu0
  %v86 = vadd.f32 %v28, %v85
  %v87 = vpop.f32.mrf.mxu0
  %v88 = vpop.f32.mrf.mxu0
  %v89 = vadd.f32 %v28, %v88
  %v90 = vpop.f32.mrf.mxu0
  %91 = vmatprep.mubr.bf16.mxu0 0
  %92 = vmatmul.mubr.bf16.gmra.mxu0 %v45
  %v93 = vpop.f32.mrf.mxu0
  %v94 = vadd.f32 %v28, %v93
  %v95 = vpop.f32.mrf.mxu0
  %v96 = vpop.f32.mrf.mxu0
  %v97 = vadd.f32 %v28, %v96
  %v98 = vpop.f32.mrf.mxu0
  %99 = vdwg.mxu0
  %v100 = vld [vmem:[%s3] sm:$0xf]
  %v101 = vld [vmem:[%s3 + $0x4] sm:$0xf]
  %v102 = vld [vmem:[%s3 + $0x8] sm:$0xf]
  %v103 = vld [vmem:[%s3 + $0xc] sm:$0xf]
  %v104 = vunpack.c.l.bf16 %v100
  %v105 = vunpack.c.l.bf16 %v101
  %v106 = vunpack.c.l.bf16 %v102
  %v107 = vunpack.c.l.bf16 %v103
  %v108 = vadd.f32 %v86, %v104
  %v109 = vadd.f32 %v89, %v105
  %v110 = vadd.f32 %v94, %v106
  %v111 = vadd.f32 %v97, %v107
  %v112 = vpack.c.bf16 %v109, %v108
  %v113 = vpack.c.bf16 %v111, %v110
  %v116 = vunpack.c.l.b16 %v112
  %v117 = vunpack.c.h.b16 %v112
  %v118 = vunpack.c.l.b16 %v113
  %v119 = vunpack.c.h.b16 %v113
  %v120 = vpack.c.b16 %v116, %v116
  %v121 = vpack.c.b16 %v117, %v117
  %v122 = vpack.c.b16 %v118, %v118
  %v123 = vpack.c.b16 %v119, %v119
  %vm128 = vcmask 60416
  %129 = vst.msk [vmem:[%s4] sm:$0xf] %vm128, %v120
  %130 = vst.msk [vmem:[%s4 + $0x4] sm:$0xf] %vm128, %v121
  %131 = vst.msk [vmem:[%s4 + $0x8] sm:$0xf] %vm128, %v122
  %132 = vst.msk [vmem:[%s4 + $0xc] sm:$0xf] %vm128, %v123
  // Predicated region
  $region18: #{mae_forward.32} parent=0 // pred_check
    _
  $region19: #{mae_forward.32} parent=0 // pred_check_branch
    %134 = sbr.rel (0) target = $region21
  $region20: #{mae_forward.32} parent=0 // pred_region
    _
  $region21: #{mae_forward.32} parent=0 // pred_fallthru
    _
  // Predicated region
  $region22: #{mae_forward.32} parent=0 // pred_check
    _
  $region23: #{mae_forward.32} parent=0 // pred_check_branch
    %136 = sbr.rel (0) target = $region25
  $region24: #{mae_forward.32} parent=0 // pred_region
    _
  $region25: #{mae_forward.32} parent=0 // pred_fallthru
    _

// kernel: mae_forward.31
$region0: #{mae_forward.31}
  #allocation0 [shape = 'u32[]', space=smem, size = 0x4, offset = 0x4, fixed_abs, tag = 'smem constant byte address 0x4 - core index']
  #allocation1 [shape = 'u32[144,128]{1,0:T(1,128)}', space=vmem, size = 0x12000, scoped, tag = 'internal scratch']
  %s0 = inlined_call_operand.vmem [shape: bf16[2,16,24], index: 0, kind: input, shape index: {}]
  %s1 = inlined_call_operand.vmem [shape: bf16[2,16,8], index: 1, kind: output, shape index: {}]
  %s2 = sld [smem:[#allocation0]]
  $region37: #{mae_forward.31} parent=0
    _
  %s4 = ssub.s32 1, %s2
  %s5 = scalar_select 0, %s4, %s2
  loop: start=0, step=1, limit=4
  $region2: #{mae_forward.31} parent=0 // loop_pre_header
    _
  $region3: #{mae_forward.31} parent=0 // loop_header
    %s7 = sphi 0, %s11
    %p8 = scmp.ge.s32.totalorder %s7, 4
    %s17 = sphi 0, %s19
    %s20 = sphi 0, %s17
    %s21 = sphi 0, %s20
    %s37 = sphi 0, %s21
    %s43 = sphi 0, %s45
    %s46 = sphi 0, %s43
    %s47 = sphi 0, %s46
    %s63 = sphi 0, %s47
  $region4: #{mae_forward.31} parent=0 // loop_header_branch
    %10 = sbr.rel (%p8) target = $region8
  $region5: #{mae_forward.31} parent=0 // loop_body
    %s12 = ssub.s32 %s7, 1
    %s13 = ssub.s32 %s7, 2
    %s14 = sadd.s32 %s7, 1
    %s15 = ssub.s32 %s7, %s14
    %p16 = scmp.eq.s32.totalorder %s15, 0
    %s18 = sadd.s32 %s17, 1
    %s19 = scalar_select %p16, %s17, %s18
    %p22 = pneg %p16
    %p23 = scmp.eq.s32.totalorder %s7, 1
    %p24 = por %p22, %p23
    %p25 = scmp.ne.s32.totalorder %s17, %s20
    %p26 = scmp.eq.s32.totalorder %s7, 0
    %p27 = por %p25, %p26
    %p28 = scmp.ne.s32.totalorder %s17, %s20
    %p29 = scmp.eq.s32.totalorder %s12, 1
    %p30 = por %p28, %p29
    %p31 = scmp.ne.s32.totalorder %s20, %s21
    %p32 = scmp.eq.s32.totalorder %s12, 0
    %p33 = por %p31, %p32
    %p34 = scmp.ne.s32.totalorder %s20, %s21
    %p35 = scmp.eq.s32.totalorder %s13, 1
    %p36 = por %p34, %p35
    %p38 = scmp.ne.s32.totalorder %s21, %s37
    %p39 = scmp.eq.s32.totalorder %s13, 0
    %p40 = por %p38, %p39
    %s41 = ssub.s32 %s7, %s14
    %p42 = scmp.eq.s32.totalorder %s41, 0
    %s44 = sadd.s32 %s43, 1
    %s45 = scalar_select %p42, %s43, %s44
    %p48 = pneg %p42
    %p49 = scmp.eq.s32.totalorder %s7, 1
    %p50 = por %p48, %p49
    %p51 = scmp.ne.s32.totalorder %s43, %s46
    %p52 = scmp.eq.s32.totalorder %s7, 0
    %p53 = por %p51, %p52
    %p54 = scmp.ne.s32.totalorder %s43, %s46
    %p55 = scmp.eq.s32.totalorder %s12, 1
    %p56 = por %p54, %p55
    %p57 = scmp.ne.s32.totalorder %s46, %s47
    %p58 = scmp.eq.s32.totalorder %s12, 0
    %p59 = por %p57, %p58
    %p60 = scmp.ne.s32.totalorder %s46, %s47
    %p61 = scmp.eq.s32.totalorder %s13, 1
    %p62 = por %p60, %p61
    %p64 = scmp.ne.s32.totalorder %s47, %s63
    %p65 = scmp.eq.s32.totalorder %s13, 0
    %p66 = por %p64, %p65
    %p67 = scmp.le.s32.totalorder 1, %s7
    %p68 = scmp.lt.s32.totalorder %s7, 3
    %p69 = pnand %p67, %p68
    %p70 = pneg %p69
    // Predicated region
    $region9: #{mae_forward.31} parent=5 // pred_check
      _
    $region10: #{mae_forward.31} parent=5 // pred_check_branch
      %72 = sbr.rel (%p69) target = $region12
    $region11: #{mae_forward.31} parent=5 // pred_region
      %s73 = ssub.s32 %s7, 1
    $region12: #{mae_forward.31} parent=5 // pred_fallthru
      _
    %p74 = scmp.lt.s32.totalorder %s7, 2
    // Predicated region
    $region13: #{mae_forward.31} parent=5 // pred_check
      %p75 = pneg %p74
    $region14: #{mae_forward.31} parent=5 // pred_check_branch
      %77 = sbr.rel (%p75) target = $region16
    $region15: #{mae_forward.31} parent=5 // pred_region
      // Predicated region
      $region17: #{mae_forward.31} parent=15 // pred_check
        %p78 = pneg %p27
      $region18: #{mae_forward.31} parent=15 // pred_check_branch
        %80 = sbr.rel (%p78) target = $region20
      $region19: #{mae_forward.31} parent=15 // pred_region
        %p81 = scmp.lt.s32.totalorder %s7, 1
        %s82 = scalar_select %p81, %s7, 1
        %s83 = smul.addr %s82, 2
        %s84 = smul.addr %s83, 4
        %s85 = scalar_lea.vmem %s0, %s84
      $region20: #{mae_forward.31} parent=15 // pred_fallthru
        _
    $region16: #{mae_forward.31} parent=5 // pred_fallthru
      _
    %p86 = scmp.le.s32.totalorder 1, %s7
    %p87 = scmp.lt.s32.totalorder %s7, 3
    %p88 = pnand %p86, %p87
    %p89 = pneg %p88
    // Predicated region
    $region21: #{mae_forward.31} parent=5 // pred_check
      _
    $region22: #{mae_forward.31} parent=5 // pred_check_branch
      %91 = sbr.rel (%p88) target = $region24
    $region23: #{mae_forward.31} parent=5 // pred_region
      %s92 = ssub.s32 %s7, 1
      %p93 = scmp.lt.s32.totalorder %s12, 1
      %s94 = scalar_select %p93, %s12, 1
      %s95 = smul.addr %s94, 2
      %s96 = smul.addr %s95, 4
      %s97 = scalar_lea.vmem %s0, %s96
      %p98 = pneg %p33
      %p99 = pneg %p30
      %p100 = pneg %p59
      %p101 = pneg %p56
      %p102 = scmp.lt.s32.totalorder %s12, 1
      %s103 = scalar_select %p102, %s12, 1
      %s104 = smul.addr %s103, 2
      %s105 = smul.addr %s104, 4
      %s106 = scalar_lea.vmem %s1, %s105
      %p107 = scmp.lt.s32.totalorder %s12, 1
      %s108 = scalar_select %p107, %s12, 1
      %s109 = smul.addr %s108, 2
      %s110 = smul.addr %s109, 4
      %s111 = scalar_lea.vmem %s0, %s110
      %p112 = scmp.lt.s32.totalorder %s12, 1
      %s113 = scalar_select %p112, %s12, 1
      %s114 = smul.addr %s113, 2
      %s115 = smul.addr %s114, 4
      %s116 = scalar_lea.vmem %s1, %s115
      %v118 = vld [vmem:[%s111] sm:$0xf]
      %v119 = vld [vmem:[%s111 + $0x4] sm:$0xf]
      %v122 = vunpack.c.l.b16 %v118
      %v123 = vunpack.c.l.b16 %v119
      %v124 = vpack.c.b16 %v123, %v122
      %125 = vrot.lane.b32.xlu0 %v124, 120
      %v126 = vpop.permute.xlu0 %125
      %vm127 = vcmask 31744
      %v129 = vsel %vm127, %v124, 0
      %v132 = vsel %vm127, %v126, 0
      %134 = vmatprep.subr.bf16.mxu0 0
      %135 = vmatpush1.bf16.xpose.msra.mxu0 0
      %136 = vmatprep.subr.bf16.mxu0 0
      %137 = vmatpush1.bf16.xpose.msra.mxu0 0
      %138 = vmatprep.subr.bf16.mxu0 0
      %139 = vmatpush1.bf16.xpose.msra.mxu0 0
      %140 = vmatprep.subr.bf16.mxu0 0
      %141 = vmatpush1.bf16.xpose.msra.mxu0 0
      %142 = vmatprep.subr.bf16.mxu0 0
      %143 = vmatpush1.bf16.xpose.msra.mxu0 0
      %144 = vmatprep.subr.bf16.mxu0 0
      %145 = vmatpush1.bf16.xpose.msra.mxu0 0
      %146 = vmatprep.subr.bf16.mxu0 0
      %147 = vmatpush1.bf16.xpose.msra.mxu0 0
      %148 = vmatprep.subr.bf16.mxu0 0
      %149 = vmatpush1.bf16.xpose.msra.mxu0 %v132
      %150 = vmatprep.subr.bf16.mxu0 0
      %151 = vmatpush2.bf16.xpose.msra.mxu0 0
      %152 = vmatprep.subr.bf16.mxu0 0
      %153 = vmatpush2.bf16.xpose.msra.mxu0 0
      %154 = vmatprep.subr.bf16.mxu0 0
      %155 = vmatpush2.bf16.xpose.msra.mxu0 0
      %156 = vmatprep.subr.bf16.mxu0 0
      %157 = vmatpush2.bf16.xpose.msra.mxu0 0
      %158 = vmatprep.subr.bf16.mxu0 0
      %159 = vmatpush2.bf16.xpose.msra.mxu0 0
      %160 = vmatprep.subr.bf16.mxu0 0
      %161 = vmatpush2.bf16.xpose.msra.mxu0 0
      %162 = vmatprep.subr.bf16.mxu0 0
      %163 = vmatpush2.bf16.xpose.msra.mxu0 0
      %164 = vmatprep.subr.bf16.mxu0 0
      %165 = vmatpush2.bf16.xpose.msra.mxu0 0
      %166 = vmatprep.mubr.bf16.mxu0 0
      %167 = vmatmul.mubr.bf16.gmra.mxu0 %v129
      %v168 = vpop.f32.mrf.mxu0
      %v169 = vadd.f32 0.0, %v168
      %v170 = vpop.f32.mrf.mxu0
      %v171 = vpop.f32.mrf.mxu0
      %v172 = vadd.f32 0.0, %v171
      %v173 = vpop.f32.mrf.mxu0
      %174 = vdwg.mxu0
      %v175 = vmul.f32 %v169, 0.5
      %v176 = vmul.f32 %v172, 0.5
      %vm177 = vcmask 130048
      %v178 = vsel %vm177, %v175, -inf
      %179 = vmax.xlane.f32.xlu0 %v178
      %v180 = vpop.xlane.xlu0 %179
      %v181 = vsel %vm177, %v176, -inf
      %182 = vmax.xlane.f32.xlu0 %v181
      %v183 = vpop.xlane.xlu0 %182
      %v184 = vsub.f32 %v175, %v180
      %v185 = vsub.f32 %v176, %v183
      %v186 = vmul.f32 %v184, 1.442695
      %v187 = vpow.pop %v186
      %v188 = vmul.f32 %v185, 1.442695
      %v189 = vpow.pop %v188
      %v190 = vsel %vm177, %v187, 0.0
      %191 = vadd.xlane.f32.xlu0 %v190
      %v192 = vpop.xlane.xlu0 %191
      %v193 = vsel %vm177, %v189, 0.0
      %194 = vadd.xlane.f32.xlu0 %v193
      %v195 = vpop.xlane.xlu0 %194
      %v196 = vrcp.pop %v192
      %v197 = vrcp.pop %v195
      %v198 = vmul.f32 %v187, %v196
      %v199 = vmul.f32 %v189, %v197
      %v200 = vpack.c.bf16 %v199, %v198
      %201 = vrot.lane.b32.xlu0 %v124, 112
      %v202 = vpop.permute.xlu0 %201
      %v205 = vsel %vm177, %v200, 0
      %207 = vmatprep.subr.bf16.mxu0 0
      %208 = vmatpush1.bf16.msra.mxu0 0
      %209 = vmatprep.subr.bf16.mxu0 0
      %210 = vmatpush1.bf16.msra.mxu0 0
      %211 = vmatprep.subr.bf16.mxu0 0
      %212 = vmatpush1.bf16.msra.mxu0 0
      %213 = vmatprep.subr.bf16.mxu0 0
      %214 = vmatpush1.bf16.msra.mxu0 0
      %215 = vmatprep.subr.bf16.mxu0 0
      %216 = vmatpush1.bf16.msra.mxu0 0
      %217 = vmatprep.subr.bf16.mxu0 0
      %218 = vmatpush1.bf16.msra.mxu0 0
      %219 = vmatprep.subr.bf16.mxu0 0
      %220 = vmatpush1.bf16.msra.mxu0 0
      %221 = vmatprep.subr.bf16.mxu0 0
      %222 = vmatpush1.bf16.msra.mxu0 %v202
      %223 = vmatprep.subr.bf16.mxu0 0
      %224 = vmatpush2.bf16.msra.mxu0 0
      %225 = vmatprep.subr.bf16.mxu0 0
      %226 = vmatpush2.bf16.msra.mxu0 0
      %227 = vmatprep.subr.bf16.mxu0 0
      %228 = vmatpush2.bf16.msra.mxu0 0
      %229 = vmatprep.subr.bf16.mxu0 0
      %230 = vmatpush2.bf16.msra.mxu0 0
      %231 = vmatprep.subr.bf16.mxu0 0
      %232 = vmatpush2.bf16.msra.mxu0 0
      %233 = vmatprep.subr.bf16.mxu0 0
      %234 = vmatpush2.bf16.msra.mxu0 0
      %235 = vmatprep.subr.bf16.mxu0 0
      %236 = vmatpush2.bf16.msra.mxu0 0
      %237 = vmatprep.subr.bf16.mxu0 0
      %238 = vmatpush2.bf16.msra.mxu0 0
      %239 = vmatprep.mubr.bf16.mxu0 0
      %240 = vmatmul.mubr.bf16.gmra.mxu0 %v205
      %v241 = vpop.f32.mrf.mxu0
      %v242 = vadd.f32 0.0, %v241
      %v243 = vpop.f32.mrf.mxu0
      %v244 = vpop.f32.mrf.mxu0
      %v245 = vadd.f32 0.0, %v244
      %v246 = vpop.f32.mrf.mxu0
      %247 = vdwg.mxu0
      %v248 = vpack.c.bf16 %v245, %v242
      %v250 = vunpack.c.l.b16 %v248
      %v251 = vunpack.c.h.b16 %v248
      %v252 = vpack.c.b16 %v250, %v250
      %v253 = vpack.c.b16 %v251, %v251
      %vm256 = vcmask 27648
      %257 = vst.msk [vmem:[%s116] sm:$0xf] %vm256, %v252
      %258 = vst.msk [vmem:[%s116 + $0x4] sm:$0xf] %vm256, %v253
      %v259 = vld [vmem:[%s111] sm:$0xf]
      %v260 = vld [vmem:[%s111 + $0x4] sm:$0xf]
      %v263 = vunpack.c.l.b16 %v259
      %v264 = vunpack.c.l.b16 %v260
      %v265 = vpack.c.b16 %v264, %v263
      %266 = vrot.lane.b32.xlu0 %v265, 124
      %v267 = vpop.permute.xlu0 %266
      %268 = vrot.lane.b32.xlu0 %v265, 116
      %v269 = vpop.permute.xlu0 %268
      %v271 = vsel %vm127, %v267, 0
      %v274 = vsel %vm127, %v269, 0
      %276 = vmatprep.subr.bf16.mxu0 0
      %277 = vmatpush1.bf16.xpose.msra.mxu0 0
      %278 = vmatprep.subr.bf16.mxu0 0
      %279 = vmatpush1.bf16.xpose.msra.mxu0 0
      %280 = vmatprep.subr.bf16.mxu0 0
      %281 = vmatpush1.bf16.xpose.msra.mxu0 0
      %282 = vmatprep.subr.bf16.mxu0 0
      %283 = vmatpush1.bf16.xpose.msra.mxu0 0
      %284 = vmatprep.subr.bf16.mxu0 0
      %285 = vmatpush1.bf16.xpose.msra.mxu0 0
      %286 = vmatprep.subr.bf16.mxu0 0
      %287 = vmatpush1.bf16.xpose.msra.mxu0 0
      %288 = vmatprep.subr.bf16.mxu0 0
      %289 = vmatpush1.bf16.xpose.msra.mxu0 0
      %290 = vmatprep.subr.bf16.mxu0 0
      %291 = vmatpush1.bf16.xpose.msra.mxu0 %v274
      %292 = vmatprep.subr.bf16.mxu0 0
      %293 = vmatpush2.bf16.xpose.msra.mxu0 0
      %294 = vmatprep.subr.bf16.mxu0 0
      %295 = vmatpush2.bf16.xpose.msra.mxu0 0
      %296 = vmatprep.subr.bf16.mxu0 0
      %297 = vmatpush2.bf16.xpose.msra.mxu0 0
      %298 = vmatprep.subr.bf16.mxu0 0
      %299 = vmatpush2.bf16.xpose.msra.mxu0 0
      %300 = vmatprep.subr.bf16.mxu0 0
      %301 = vmatpush2.bf16.xpose.msra.mxu0 0
      %302 = vmatprep.subr.bf16.mxu0 0
      %303 = vmatpush2.bf16.xpose.msra.mxu0 0
      %304 = vmatprep.subr.bf16.mxu0 0
      %305 = vmatpush2.bf16.xpose.msra.mxu0 0
      %306 = vmatprep.subr.bf16.mxu0 0
      %307 = vmatpush2.bf16.xpose.msra.mxu0 0
      %308 = vmatprep.mubr.bf16.mxu0 0
      %309 = vmatmul.mubr.bf16.gmra.mxu0 %v271
      %v310 = vpop.f32.mrf.mxu0
      %v311 = vadd.f32 0.0, %v310
      %v312 = vpop.f32.mrf.mxu0
      %v313 = vpop.f32.mrf.mxu0
      %v314 = vadd.f32 0.0, %v313
      %v315 = vpop.f32.mrf.mxu0
      %316 = vdwg.mxu0
      %v317 = vmul.f32 %v311, 0.5
      %v318 = vmul.f32 %v314, 0.5
      %v319 = vsel %vm177, %v317, -inf
      %320 = vmax.xlane.f32.xlu0 %v319
      %v321 = vpop.xlane.xlu0 %320
      %v322 = vsel %vm177, %v318, -inf
      %323 = vmax.xlane.f32.xlu0 %v322
      %v324 = vpop.xlane.xlu0 %323
      %v325 = vsub.f32 %v317, %v321
      %v326 = vsub.f32 %v318, %v324
      %v327 = vmul.f32 %v325, 1.442695
      %v328 = vpow.pop %v327
      %v329 = vmul.f32 %v326, 1.442695
      %v330 = vpow.pop %v329
      %v331 = vsel %vm177, %v328, 0.0
      %332 = vadd.xlane.f32.xlu0 %v331
      %v333 = vpop.xlane.xlu0 %332
      %v334 = vsel %vm177, %v330, 0.0
      %335 = vadd.xlane.f32.xlu0 %v334
      %v336 = vpop.xlane.xlu0 %335
      %v337 = vrcp.pop %v333
      %v338 = vrcp.pop %v336
      %v339 = vmul.f32 %v328, %v337
      %v340 = vmul.f32 %v330, %v338
      %v341 = vpack.c.bf16 %v340, %v339
      %342 = vrot.lane.b32.xlu0 %v265, 108
      %v343 = vpop.permute.xlu0 %342
      %v346 = vsel %vm177, %v341, 0
      %348 = vmatprep.subr.bf16.mxu0 0
      %349 = vmatpush1.bf16.msra.mxu0 0
      %350 = vmatprep.subr.bf16.mxu0 0
      %351 = vmatpush1.bf16.msra.mxu0 0
      %352 = vmatprep.subr.bf16.mxu0 0
      %353 = vmatpush1.bf16.msra.mxu0 0
      %354 = vmatprep.subr.bf16.mxu0 0
      %355 = vmatpush1.bf16.msra.mxu0 0
      %356 = vmatprep.subr.bf16.mxu0 0
      %357 = vmatpush1.bf16.msra.mxu0 0
      %358 = vmatprep.subr.bf16.mxu0 0
      %359 = vmatpush1.bf16.msra.mxu0 0
      %360 = vmatprep.subr.bf16.mxu0 0
      %361 = vmatpush1.bf16.msra.mxu0 0
      %362 = vmatprep.subr.bf16.mxu0 0
      %363 = vmatpush1.bf16.msra.mxu0 %v343
      %364 = vmatprep.subr.bf16.mxu0 0
      %365 = vmatpush2.bf16.msra.mxu0 0
      %366 = vmatprep.subr.bf16.mxu0 0
      %367 = vmatpush2.bf16.msra.mxu0 0
      %368 = vmatprep.subr.bf16.mxu0 0
      %369 = vmatpush2.bf16.msra.mxu0 0
      %370 = vmatprep.subr.bf16.mxu0 0
      %371 = vmatpush2.bf16.msra.mxu0 0
      %372 = vmatprep.subr.bf16.mxu0 0
      %373 = vmatpush2.bf16.msra.mxu0 0
      %374 = vmatprep.subr.bf16.mxu0 0
      %375 = vmatpush2.bf16.msra.mxu0 0
      %376 = vmatprep.subr.bf16.mxu0 0
      %377 = vmatpush2.bf16.msra.mxu0 0
      %378 = vmatprep.subr.bf16.mxu0 0
      %379 = vmatpush2.bf16.msra.mxu0 0
      %380 = vmatprep.mubr.bf16.mxu0 0
      %381 = vmatmul.mubr.bf16.gmra.mxu0 %v346
      %v382 = vpop.f32.mrf.mxu0
      %v383 = vadd.f32 0.0, %v382
      %v384 = vpop.f32.mrf.mxu0
      %v385 = vpop.f32.mrf.mxu0
      %v386 = vadd.f32 0.0, %v385
      %v387 = vpop.f32.mrf.mxu0
      %388 = vdwg.mxu0
      %v389 = vpack.c.bf16 %v386, %v383
      %v391 = vunpack.c.l.b16 %v389
      %v392 = vunpack.c.h.b16 %v389
      %v393 = vpack.c.b16 %v391, %v391
      %v394 = vpack.c.b16 %v392, %v392
      %395 = vrot.lane.b32.xlu0 %v393, 4
      %v396 = vpop.permute.xlu0 %395
      %397 = vrot.lane.b32.xlu0 %v394, 4
      %v398 = vpop.permute.xlu0 %397
      %vm401 = vcmask 60448
      %402 = vst.msk [vmem:[%s116] sm:$0xf] %vm401, %v396
      %403 = vst.msk [vmem:[%s116 + $0x4] sm:$0xf] %vm401, %v398
      %p404 = scmp.lt.s32.totalorder %s12, 1
      %s405 = scalar_select %p404, %s12, 1
      %s406 = smul.addr %s405, 2
      %s407 = smul.addr %s406, 4
      %s408 = scalar_lea.vmem %s1, %s407
      // Predicated region
      $region25: #{mae_forward.31} parent=23 // pred_check
        %p409 = pneg %p56
      $region26: #{mae_forward.31} parent=23 // pred_check_branch
        %411 = sbr.rel (%p409) target = $region28
      $region27: #{mae_forward.31} parent=23 // pred_region
        _
      $region28: #{mae_forward.31} parent=23 // pred_fallthru
        _
    $region24: #{mae_forward.31} parent=5 // pred_fallthru
      _
    %p412 = scmp.le.s32.totalorder 2, %s7
    // Predicated region
    $region29: #{mae_forward.31} parent=5 // pred_check
      %p413 = pneg %p412
    $region30: #{mae_forward.31} parent=5 // pred_check_branch
      %415 = sbr.rel (%p413) target = $region32
    $region31: #{mae_forward.31} parent=5 // pred_region
      %s416 = ssub.s32 %s7, 2
      // Predicated region
      $region33: #{mae_forward.31} parent=31 // pred_check
        %p417 = pneg %p62
      $region34: #{mae_forward.31} parent=31 // pred_check_branch
        %419 = sbr.rel (%p417) target = $region36
      $region35: #{mae_forward.31} parent=31 // pred_region
        %p420 = scmp.lt.s32.totalorder %s13, 1
        %s421 = scalar_select %p420, %s13, 1
        %s422 = smul.addr %s421, 2
        %s423 = smul.addr %s422, 4
        %s424 = scalar_lea.vmem %s1, %s423
      $region36: #{mae_forward.31} parent=31 // pred_fallthru
        _
    $region32: #{mae_forward.31} parent=5 // pred_fallthru
      _
  $region6: #{mae_forward.31} parent=0 // loop_footer
    %s11 = sadd.s32 1, %s7
  $region7: #{mae_forward.31} parent=0 // loop_footer_branch
    %6 = sbr.rel target = $region3
  $region8: #{mae_forward.31} parent=0 // loop_exit
    _

// kernel: mae_forward.30
$region0: #{mae_forward.30}
  #allocation0 [shape = 'u32[]', space=smem, size = 0x4, offset = 0x4, fixed_abs, tag = 'smem constant byte address 0x4 - core index']
  #allocation1 [shape = 'u32[144,128]{1,0:T(1,128)}', space=vmem, size = 0x12000, scoped, tag = 'internal scratch']
  #allocation2 [shape = 'bf16[32,8]{1,0:T(8,128)(2,1)}', space=vmem, size = 0x2000, scoped, tag = 'scratch operand']
  %s0 = inlined_call_operand.vmem [shape: bf16[32,8], index: 0, kind: input, shape index: {}]
  %s1 = inlined_call_operand.vmem [shape: bf16[8,24], index: 1, kind: input, shape index: {}]
  %s2 = inlined_call_operand.vmem [shape: f32[1,24], index: 2, kind: input, shape index: {}]
  %s3 = inlined_call_operand.vmem [shape: f32[1,8], index: 3, kind: input, shape index: {}]
  %s4 = inlined_call_operand.vmem [shape: f32[1,8], index: 4, kind: input, shape index: {}]
  %s5 = inlined_call_operand.vmem [shape: bf16[32,24], index: 5, kind: output, shape index: {}]
  %s6 = sld [smem:[#allocation0]]
  $region34: #{mae_forward.30} parent=0
    _
  %s8 = ssub.s32 1, %s6
  %s9 = scalar_select 0, %s8, %s6
  // Predicated region
  $region2: #{mae_forward.30} parent=0 // pred_check
    _
  $region3: #{mae_forward.30} parent=0 // pred_check_branch
    %11 = sbr.rel (0) target = $region5
  $region4: #{mae_forward.30} parent=0 // pred_region
    _
  $region5: #{mae_forward.30} parent=0 // pred_fallthru
    _
  // Predicated region
  $region6: #{mae_forward.30} parent=0 // pred_check
    _
  $region7: #{mae_forward.30} parent=0 // pred_check_branch
    %13 = sbr.rel (0) target = $region9
  $region8: #{mae_forward.30} parent=0 // pred_region
    _
  $region9: #{mae_forward.30} parent=0 // pred_fallthru
    _
  // Predicated region
  $region10: #{mae_forward.30} parent=0 // pred_check
    _
  $region11: #{mae_forward.30} parent=0 // pred_check_branch
    %15 = sbr.rel (0) target = $region13
  $region12: #{mae_forward.30} parent=0 // pred_region
    _
  $region13: #{mae_forward.30} parent=0 // pred_fallthru
    _
  // Predicated region
  $region14: #{mae_forward.30} parent=0 // pred_check
    _
  $region15: #{mae_forward.30} parent=0 // pred_check_branch
    %17 = sbr.rel (0) target = $region17
  $region16: #{mae_forward.30} parent=0 // pred_region
    _
  $region17: #{mae_forward.30} parent=0 // pred_fallthru
    _
  // Predicated region
  $region18: #{mae_forward.30} parent=0 // pred_check
    _
  $region19: #{mae_forward.30} parent=0 // pred_check_branch
    %19 = sbr.rel (0) target = $region21
  $region20: #{mae_forward.30} parent=0 // pred_region
    _
  $region21: #{mae_forward.30} parent=0 // pred_fallthru
    _
  %p21 = scmp.eq.s32.totalorder 0, 0
  // Predicated region
  $region22: #{mae_forward.30} parent=0 // pred_check
    %p22 = pneg %p21
  $region23: #{mae_forward.30} parent=0 // pred_check_branch
    %24 = sbr.rel (%p22) target = $region25
  $region24: #{mae_forward.30} parent=0 // pred_region
    %v25 = vld [vmem:[%s0] sm:$0xf]
    %v26 = vld [vmem:[%s0 + $0x4] sm:$0xf]
    %v27 = vld [vmem:[%s0 + $0x8] sm:$0xf]
    %v28 = vld [vmem:[%s0 + $0xc] sm:$0xf]
    %v29 = vunpack.c.l.bf16 %v25
    %v30 = vunpack.c.l.bf16 %v26
    %v31 = vunpack.c.l.bf16 %v27
    %v32 = vunpack.c.l.bf16 %v28
    %vm33 = vcmask 64512
    %v34 = vsel %vm33, %v29, 0.0
    %35 = vadd.xlane.f32.xlu0 %v34
    %v36 = vpop.xlane.xlu0 %35
    %v37 = vsel %vm33, %v30, 0.0
    %38 = vadd.xlane.f32.xlu0 %v37
    %v39 = vpop.xlane.xlu0 %38
    %v40 = vsel %vm33, %v31, 0.0
    %41 = vadd.xlane.f32.xlu0 %v40
    %v42 = vpop.xlane.xlu0 %41
    %v43 = vsel %vm33, %v32, 0.0
    %44 = vadd.xlane.f32.xlu0 %v43
    %v45 = vpop.xlane.xlu0 %44
    %v46 = vrcp.pop 8.0
    %v47 = vmul.f32 %v36, %v46
    %v48 = vmul.f32 %v39, %v46
    %v49 = vmul.f32 %v42, %v46
    %v50 = vmul.f32 %v45, %v46
    %v51 = vsub.f32 %v29, %v47
    %v52 = vsub.f32 %v30, %v48
    %v53 = vsub.f32 %v31, %v49
    %v54 = vsub.f32 %v32, %v50
    %v55 = vmul.f32 %v51, %v51
    %v56 = vmul.f32 %v52, %v52
    %v57 = vmul.f32 %v53, %v53
    %v58 = vmul.f32 %v54, %v54
    %v59 = vsel %vm33, %v55, 0.0
    %60 = vadd.xlane.f32.xlu0 %v59
    %v61 = vpop.xlane.xlu0 %60
    %v62 = vsel %vm33, %v56, 0.0
    %63 = vadd.xlane.f32.xlu0 %v62
    %v64 = vpop.xlane.xlu0 %63
    %v65 = vsel %vm33, %v57, 0.0
    %66 = vadd.xlane.f32.xlu0 %v65
    %v67 = vpop.xlane.xlu0 %66
    %v68 = vsel %vm33, %v58, 0.0
    %69 = vadd.xlane.f32.xlu0 %v68
    %v70 = vpop.xlane.xlu0 %69
    %v71 = vmul.f32 %v61, %v46
    %v72 = vmul.f32 %v64, %v46
    %v73 = vmul.f32 %v67, %v46
    %v74 = vmul.f32 %v70, %v46
    %v75 = vadd.f32 %v71, 1e-06
    %v76 = vadd.f32 %v72, 1e-06
    %v77 = vadd.f32 %v73, 1e-06
    %v78 = vadd.f32 %v74, 1e-06
    %v79 = vrsqrt.pop %v75
    %v80 = vrsqrt.pop %v76
    %v81 = vrsqrt.pop %v77
    %v82 = vrsqrt.pop %v78
    %v83 = vmul.f32 %v51, %v79
    %v84 = vmul.f32 %v52, %v80
    %v85 = vmul.f32 %v53, %v81
    %v86 = vmul.f32 %v54, %v82
    %v87 = vld [vmem:[%s3] sm:$0x1]
    %v89 = vlaneseq
    %v90 = vshrl.u32 %v89, 7
    %v91 = vsub.s32 0, %v90
    %v92 = vrot.slane %v87, %v91
    %v94 = vmul.f32 %v83, %v92
    %v95 = vmul.f32 %v84, %v92
    %v96 = vmul.f32 %v85, %v92
    %v97 = vmul.f32 %v86, %v92
    %v98 = vld [vmem:[%s4] sm:$0x1]
    %v100 = vlaneseq
    %v101 = vshrl.u32 %v100, 7
    %v102 = vsub.s32 0, %v101
    %v103 = vrot.slane %v98, %v102
    %v105 = vadd.f32 %v94, %v103
    %v106 = vadd.f32 %v95, %v103
    %v107 = vadd.f32 %v96, %v103
    %v108 = vadd.f32 %v97, %v103
    %v109 = vpack.c.bf16 %v106, %v105
    %v110 = vpack.c.bf16 %v108, %v107
    %v113 = vunpack.c.l.b16 %v109
    %v114 = vunpack.c.h.b16 %v109
    %v115 = vunpack.c.l.b16 %v110
    %v116 = vunpack.c.h.b16 %v110
    %v117 = vpack.c.b16 %v113, %v113
    %v118 = vpack.c.b16 %v114, %v114
    %v119 = vpack.c.b16 %v115, %v115
    %v120 = vpack.c.b16 %v116, %v116
    %vm125 = vcmask 60416
    %126 = vst.msk [vmem:[#allocation2] sm:$0xf] %vm125, %v117
    %127 = vst.msk [vmem:[#allocation2 + $0x4] sm:$0xf] %vm125, %v118
    %128 = vst.msk [vmem:[#allocation2 + $0x8] sm:$0xf] %vm125, %v119
    %129 = vst.msk [vmem:[#allocation2 + $0xc] sm:$0xf] %vm125, %v120
  $region25: #{mae_forward.30} parent=0 // pred_fallthru
    _
  %v130 = vld [vmem:[#allocation2] sm:$0xf]
  %v131 = vld [vmem:[#allocation2 + $0x4] sm:$0xf]
  %v132 = vld [vmem:[#allocation2 + $0x8] sm:$0xf]
  %v133 = vld [vmem:[#allocation2 + $0xc] sm:$0xf]
  %v134 = vld [vmem:[%s1] sm:$0xf]
  %v135 = vld [vmem:[%s2] sm:$0x1]
  %v137 = vlaneseq
  %v138 = vshrl.u32 %v137, 7
  %v139 = vsub.s32 0, %v138
  %v140 = vrot.slane %v135, %v139
  %v146 = vunpack.c.l.b16 %v130
  %v147 = vunpack.c.l.b16 %v131
  %v148 = vunpack.c.l.b16 %v132
  %v149 = vunpack.c.l.b16 %v133
  %v150 = vpack.c.b16 %v147, %v146
  %v151 = vpack.c.b16 %v149, %v148
  %vm152 = vcmask 64512
  %v154 = vsel %vm152, %v150, 0
  %v157 = vsel %vm152, %v151, 0
  %vm159 = vcmask 1043456
  %v161 = vsel %vm159, %v134, 0
  %163 = vmatprep.subr.bf16.mxu0 0
  %164 = vmatpush1.bf16.msra.mxu0 0
  %165 = vmatprep.subr.bf16.mxu0 0
  %166 = vmatpush1.bf16.msra.mxu0 0
  %167 = vmatprep.subr.bf16.mxu0 0
  %168 = vmatpush1.bf16.msra.mxu0 0
  %169 = vmatprep.subr.bf16.mxu0 0
  %170 = vmatpush1.bf16.msra.mxu0 0
  %171 = vmatprep.subr.bf16.mxu0 0
  %172 = vmatpush1.bf16.msra.mxu0 0
  %173 = vmatprep.subr.bf16.mxu0 0
  %174 = vmatpush1.bf16.msra.mxu0 0
  %175 = vmatprep.subr.bf16.mxu0 0
  %176 = vmatpush1.bf16.msra.mxu0 0
  %177 = vmatprep.subr.bf16.mxu0 0
  %178 = vmatpush1.bf16.msra.mxu0 %v161
  %179 = vmatprep.subr.bf16.mxu0 0
  %180 = vmatpush2.bf16.msra.mxu0 0
  %181 = vmatprep.subr.bf16.mxu0 0
  %182 = vmatpush2.bf16.msra.mxu0 0
  %183 = vmatprep.subr.bf16.mxu0 0
  %184 = vmatpush2.bf16.msra.mxu0 0
  %185 = vmatprep.subr.bf16.mxu0 0
  %186 = vmatpush2.bf16.msra.mxu0 0
  %187 = vmatprep.subr.bf16.mxu0 0
  %188 = vmatpush2.bf16.msra.mxu0 0
  %189 = vmatprep.subr.bf16.mxu0 0
  %190 = vmatpush2.bf16.msra.mxu0 0
  %191 = vmatprep.subr.bf16.mxu0 0
  %192 = vmatpush2.bf16.msra.mxu0 0
  %193 = vmatprep.subr.bf16.mxu0 0
  %194 = vmatpush2.bf16.msra.mxu0 0
  %195 = vmatprep.mubr.bf16.mxu0 0
  %196 = vmatmul.mubr.bf16.gmra.mxu0 %v154
  %v197 = vpop.f32.mrf.mxu0
  %v198 = vadd.f32 %v140, %v197
  %v199 = vpop.f32.mrf.mxu0
  %v200 = vpop.f32.mrf.mxu0
  %v201 = vadd.f32 %v140, %v200
  %v202 = vpop.f32.mrf.mxu0
  %203 = vmatprep.mubr.bf16.mxu0 0
  %204 = vmatmul.mubr.bf16.gmra.mxu0 %v157
  %v205 = vpop.f32.mrf.mxu0
  %v206 = vadd.f32 %v140, %v205
  %v207 = vpop.f32.mrf.mxu0
  %v208 = vpop.f32.mrf.mxu0
  %v209 = vadd.f32 %v140, %v208
  %v210 = vpop.f32.mrf.mxu0
  %211 = vdwg.mxu0
  %v212 = vpack.c.bf16 %v201, %v198
  %v213 = vpack.c.bf16 %v209, %v206
  %v216 = vunpack.c.l.b16 %v212
  %v217 = vunpack.c.h.b16 %v212
  %v218 = vunpack.c.l.b16 %v213
  %v219 = vunpack.c.h.b16 %v213
  %v220 = vpack.c.b16 %v216, %v216
  %v221 = vpack.c.b16 %v217, %v217
  %v222 = vpack.c.b16 %v218, %v218
  %v223 = vpack.c.b16 %v219, %v219
  %vm228 = vcmask 191488
  %229 = vst.msk [vmem:[%s5] sm:$0xf] %vm228, %v220
  %230 = vst.msk [vmem:[%s5 + $0x4] sm:$0xf] %vm228, %v221
  %231 = vst.msk [vmem:[%s5 + $0x8] sm:$0xf] %vm228, %v222
  %232 = vst.msk [vmem:[%s5 + $0xc] sm:$0xf] %vm228, %v223
  // Predicated region
  $region26: #{mae_forward.30} parent=0 // pred_check
    _
  $region27: #{mae_forward.30} parent=0 // pred_check_branch
    %234 = sbr.rel (0) target = $region29
  $region28: #{mae_forward.30} parent=0 // pred_region
    _
  $region29: #{mae_forward.30} parent=0 // pred_fallthru
    _
  // Predicated region
  $region30: #{mae_forward.30} parent=0 // pred_check
    _
  $region31: #{mae_forward.30} parent=0 // pred_check_branch
    %236 = sbr.rel (0) target = $region33
  $region32: #{mae_forward.30} parent=0 // pred_region
    _
  $region33: #{mae_forward.30} parent=0 // pred_fallthru
    _

// kernel: mae_forward.34
$region0: #{mae_forward.34}
  #allocation0 [shape = 'u32[]', space=smem, size = 0x4, offset = 0x4, fixed_abs, tag = 'smem constant byte address 0x4 - core index']
  #allocation1 [shape = 'u32[144,128]{1,0:T(1,128)}', space=vmem, size = 0x12000, scoped, tag = 'internal scratch']
  %s0 = inlined_call_operand.vmem [shape: bf16[32,32], index: 0, kind: input, shape index: {}]
  %s1 = inlined_call_operand.vmem [shape: bf16[32,8], index: 1, kind: input, shape index: {}]
  %s2 = inlined_call_operand.vmem [shape: f32[1,8], index: 2, kind: input, shape index: {}]
  %s3 = inlined_call_operand.vmem [shape: bf16[32,8], index: 3, kind: input, shape index: {}]
  %s4 = inlined_call_operand.vmem [shape: bf16[32,8], index: 4, kind: output, shape index: {}]
  %s5 = sld [smem:[#allocation0]]
  $region26: #{mae_forward.34} parent=0
    _
  %s7 = ssub.s32 1, %s5
  %s8 = scalar_select 0, %s7, %s5
  // Predicated region
  $region2: #{mae_forward.34} parent=0 // pred_check
    _
  $region3: #{mae_forward.34} parent=0 // pred_check_branch
    %10 = sbr.rel (0) target = $region5
  $region4: #{mae_forward.34} parent=0 // pred_region
    _
  $region5: #{mae_forward.34} parent=0 // pred_fallthru
    _
  // Predicated region
  $region6: #{mae_forward.34} parent=0 // pred_check
    _
  $region7: #{mae_forward.34} parent=0 // pred_check_branch
    %12 = sbr.rel (0) target = $region9
  $region8: #{mae_forward.34} parent=0 // pred_region
    _
  $region9: #{mae_forward.34} parent=0 // pred_fallthru
    _
  // Predicated region
  $region10: #{mae_forward.34} parent=0 // pred_check
    _
  $region11: #{mae_forward.34} parent=0 // pred_check_branch
    %14 = sbr.rel (0) target = $region13
  $region12: #{mae_forward.34} parent=0 // pred_region
    _
  $region13: #{mae_forward.34} parent=0 // pred_fallthru
    _
  // Predicated region
  $region14: #{mae_forward.34} parent=0 // pred_check
    _
  $region15: #{mae_forward.34} parent=0 // pred_check_branch
    %16 = sbr.rel (0) target = $region17
  $region16: #{mae_forward.34} parent=0 // pred_region
    _
  $region17: #{mae_forward.34} parent=0 // pred_fallthru
    _
  %v18 = vld [vmem:[%s0] sm:$0xf]
  %v19 = vld [vmem:[%s0 + $0x4] sm:$0xf]
  %v20 = vld [vmem:[%s0 + $0x8] sm:$0xf]
  %v21 = vld [vmem:[%s0 + $0xc] sm:$0xf]
  %v22 = vld [vmem:[%s1] sm:$0xf]
  %v23 = vld [vmem:[%s1 + $0x4] sm:$0xf]
  %v24 = vld [vmem:[%s1 + $0x8] sm:$0xf]
  %v25 = vld [vmem:[%s1 + $0xc] sm:$0xf]
  %v26 = vld [vmem:[%s2] sm:$0x1]
  %v28 = vlaneseq
  %v29 = vshrl.u32 %v28, 7
  %v30 = vsub.s32 0, %v29
  %v31 = vrot.slane %v26, %v30
  %v37 = vunpack.c.l.b16 %v18
  %v38 = vunpack.c.l.b16 %v19
  %v39 = vunpack.c.l.b16 %v20
  %v40 = vunpack.c.l.b16 %v21
  %v41 = vpack.c.b16 %v38, %v37
  %v42 = vpack.c.b16 %v40, %v39
  %v47 = vunpack.c.l.b16 %v22
  %v48 = vunpack.c.l.b16 %v23
  %v49 = vunpack.c.l.b16 %v24
  %v50 = vunpack.c.l.b16 %v25
  %v51 = vpack.c.b16 %v48, %v47
  %v52 = vpack.c.b16 %v50, %v49
  %vm55 = vcmask 261120
  %v57 = vsel %vm55, %v41, 0
  %v60 = vsel %vm55, %v42, 0
  %62 = vmatprep.subr.bf16.mxu0 0
  %63 = vmatpush1.bf16.msra.mxu0 0
  %64 = vmatprep.subr.bf16.mxu0 0
  %65 = vmatpush1.bf16.msra.mxu0 0
  %66 = vmatprep.subr.bf16.mxu0 0
  %67 = vmatpush1.bf16.msra.mxu0 0
  %68 = vmatprep.subr.bf16.mxu0 0
  %69 = vmatpush1.bf16.msra.mxu0 0
  %70 = vmatprep.subr.bf16.mxu0 0
  %71 = vmatpush1.bf16.msra.mxu0 0
  %72 = vmatprep.subr.bf16.mxu0 0
  %73 = vmatpush1.bf16.msra.mxu0 0
  %74 = vmatprep.subr.bf16.mxu0 0
  %75 = vmatpush1.bf16.msra.mxu0 %v52
  %76 = vmatprep.subr.bf16.mxu0 0
  %77 = vmatpush1.bf16.msra.mxu0 %v51
  %78 = vmatprep.subr.bf16.mxu0 0
  %79 = vmatpush2.bf16.msra.mxu0 0
  %80 = vmatprep.subr.bf16.mxu0 0
  %81 = vmatpush2.bf16.msra.mxu0 0
  %82 = vmatprep.subr.bf16.mxu0 0
  %83 = vmatpush2.bf16.msra.mxu0 0
  %84 = vmatprep.subr.bf16.mxu0 0
  %85 = vmatpush2.bf16.msra.mxu0 0
  %86 = vmatprep.subr.bf16.mxu0 0
  %87 = vmatpush2.bf16.msra.mxu0 0
  %88 = vmatprep.subr.bf16.mxu0 0
  %89 = vmatpush2.bf16.msra.mxu0 0
  %90 = vmatprep.subr.bf16.mxu0 0
  %91 = vmatpush2.bf16.msra.mxu0 0
  %92 = vmatprep.subr.bf16.mxu0 0
  %93 = vmatpush2.bf16.msra.mxu0 0
  %94 = vmatprep.mubr.bf16.mxu0 0
  %95 = vmatmul.mubr.bf16.gmra.mxu0 %v57
  %v96 = vpop.f32.mrf.mxu0
  %v97 = vadd.f32 %v31, %v96
  %v98 = vpop.f32.mrf.mxu0
  %v99 = vpop.f32.mrf.mxu0
  %v100 = vadd.f32 %v31, %v99
  %v101 = vpop.f32.mrf.mxu0
  %102 = vmatprep.mubr.bf16.mxu0 0
  %103 = vmatmul.mubr.bf16.gmra.mxu0 %v60
  %v104 = vpop.f32.mrf.mxu0
  %v105 = vadd.f32 %v31, %v104
  %v106 = vpop.f32.mrf.mxu0
  %v107 = vpop.f32.mrf.mxu0
  %v108 = vadd.f32 %v31, %v107
  %v109 = vpop.f32.mrf.mxu0
  %110 = vdwg.mxu0
  %v111 = vld [vmem:[%s3] sm:$0xf]
  %v112 = vld [vmem:[%s3 + $0x4] sm:$0xf]
  %v113 = vld [vmem:[%s3 + $0x8] sm:$0xf]
  %v114 = vld [vmem:[%s3 + $0xc] sm:$0xf]
  %v115 = vunpack.c.l.bf16 %v111
  %v116 = vunpack.c.l.bf16 %v112
  %v117 = vunpack.c.l.bf16 %v113
  %v118 = vunpack.c.l.bf16 %v114
  %v119 = vadd.f32 %v97, %v115
  %v120 = vadd.f32 %v100, %v116
  %v121 = vadd.f32 %v105, %v117
  %v122 = vadd.f32 %v108, %v118
  %v123 = vpack.c.bf16 %v120, %v119
  %v124 = vpack.c.bf16 %v122, %v121
  %v127 = vunpack.c.l.b16 %v123
  %v128 = vunpack.c.h.b16 %v123
  %v129 = vunpack.c.l.b16 %v124
  %v130 = vunpack.c.h.b16 %v124
  %v131 = vpack.c.b16 %v127, %v127
  %v132 = vpack.c.b16 %v128, %v128
  %v133 = vpack.c.b16 %v129, %v129
  %v134 = vpack.c.b16 %v130, %v130
  %vm139 = vcmask 60416
  %140 = vst.msk [vmem:[%s4] sm:$0xf] %vm139, %v131
  %141 = vst.msk [vmem:[%s4 + $0x4] sm:$0xf] %vm139, %v132
  %142 = vst.msk [vmem:[%s4 + $0x8] sm:$0xf] %vm139, %v133
  %143 = vst.msk [vmem:[%s4 + $0xc] sm:$0xf] %vm139, %v134
  // Predicated region
  $region18: #{mae_forward.34} parent=0 // pred_check
    _
  $region19: #{mae_forward.34} parent=0 // pred_check_branch
    %145 = sbr.rel (0) target = $region21
  $region20: #{mae_forward.34} parent=0 // pred_region
    _
  $region21: #{mae_forward.34} parent=0 // pred_fallthru
    _
  // Predicated region
  $region22: #{mae_forward.34} parent=0 // pred_check
    _
  $region23: #{mae_forward.34} parent=0 // pred_check_branch
    %147 = sbr.rel (0) target = $region25
  $region24: #{mae_forward.34} parent=0 // pred_region
    _
  $region25: #{mae_forward.34} parent=0 // pred_fallthru
    _

// kernel: mae_forward.35
$region0: #{mae_forward.35}
  #allocation0 [shape = 'u32[]', space=smem, size = 0x4, offset = 0x4, fixed_abs, tag = 'smem constant byte address 0x4 - core index']
  #allocation1 [shape = 'u32[144,128]{1,0:T(1,128)}', space=vmem, size = 0x12000, scoped, tag = 'internal scratch']
  %s0 = inlined_call_operand.vmem [shape: bf16[32,8], index: 0, kind: input, shape index: {}]
  %s1 = inlined_call_operand.vmem [shape: bf16[8,48], index: 1, kind: input, shape index: {}]
  %s2 = inlined_call_operand.vmem [shape: f32[1,48], index: 2, kind: input, shape index: {}]
  %s3 = inlined_call_operand.hbm [shape: f32[32,48], index: 3, kind: output, shape index: {}]
  %s4 = sld [smem:[#allocation0]]
  $region22: #{mae_forward.35} parent=0
    _
  %s6 = ssub.s32 1, %s4
  %s7 = scalar_select 0, %s6, %s4
  $region1: #{mae_forward.35} parent=0
    #allocation2 [shape = 'u8[16384]{0}', space=vmem, size = 0x4000, scoped, tag = 'output window, operand 0, single buffered']
    #allocation3 [shape = 's32[1]{0}', space=sflag, size = 0x4, scoped, tag = 'scoped memory for mae_forward.35']
    %8 = vsyncpa [#allocation3], 0
    // Predicated region
    $region2: #{mae_forward.35} parent=1 // pred_check
      _
    $region3: #{mae_forward.35} parent=1 // pred_check_branch
      %10 = sbr.rel (0) target = $region5
    $region4: #{mae_forward.35} parent=1 // pred_region
      _
    $region5: #{mae_forward.35} parent=1 // pred_fallthru
      _
    // Predicated region
    $region6: #{mae_forward.35} parent=1 // pred_check
      _
    $region7: #{mae_forward.35} parent=1 // pred_check_branch
      %12 = sbr.rel (0) target = $region9
    $region8: #{mae_forward.35} parent=1 // pred_region
      _
    $region9: #{mae_forward.35} parent=1 // pred_fallthru
      _
    // Predicated region
    $region10: #{mae_forward.35} parent=1 // pred_check
      _
    $region11: #{mae_forward.35} parent=1 // pred_check_branch
      %14 = sbr.rel (0) target = $region13
    $region12: #{mae_forward.35} parent=1 // pred_region
      _
    $region13: #{mae_forward.35} parent=1 // pred_fallthru
      _
    %v16 = vld [vmem:[%s0] sm:$0xf]
    %v17 = vld [vmem:[%s0 + $0x4] sm:$0xf]
    %v18 = vld [vmem:[%s0 + $0x8] sm:$0xf]
    %v19 = vld [vmem:[%s0 + $0xc] sm:$0xf]
    %v20 = vld [vmem:[%s1] sm:$0xf]
    %v21 = vld [vmem:[%s2] sm:$0x1]
    %v23 = vlaneseq
    %v24 = vshrl.u32 %v23, 7
    %v25 = vsub.s32 0, %v24
    %v26 = vrot.slane %v21, %v25
    %v32 = vunpack.c.l.b16 %v16
    %v33 = vunpack.c.l.b16 %v17
    %v34 = vunpack.c.l.b16 %v18
    %v35 = vunpack.c.l.b16 %v19
    %v36 = vpack.c.b16 %v33, %v32
    %v37 = vpack.c.b16 %v35, %v34
    %vm38 = vcmask 64512
    %v40 = vsel %vm38, %v36, 0
    %v43 = vsel %vm38, %v37, 0
    %vm45 = vcmask 1043456
    %v47 = vsel %vm45, %v20, 0
    %49 = vmatprep.subr.bf16.mxu0 0
    %50 = vmatpush1.bf16.msra.mxu0 0
    %51 = vmatprep.subr.bf16.mxu0 0
    %52 = vmatpush1.bf16.msra.mxu0 0
    %53 = vmatprep.subr.bf16.mxu0 0
    %54 = vmatpush1.bf16.msra.mxu0 0
    %55 = vmatprep.subr.bf16.mxu0 0
    %56 = vmatpush1.bf16.msra.mxu0 0
    %57 = vmatprep.subr.bf16.mxu0 0
    %58 = vmatpush1.bf16.msra.mxu0 0
    %59 = vmatprep.subr.bf16.mxu0 0
    %60 = vmatpush1.bf16.msra.mxu0 0
    %61 = vmatprep.subr.bf16.mxu0 0
    %62 = vmatpush1.bf16.msra.mxu0 0
    %63 = vmatprep.subr.bf16.mxu0 0
    %64 = vmatpush1.bf16.msra.mxu0 %v47
    %65 = vmatprep.subr.bf16.mxu0 0
    %66 = vmatpush2.bf16.msra.mxu0 0
    %67 = vmatprep.subr.bf16.mxu0 0
    %68 = vmatpush2.bf16.msra.mxu0 0
    %69 = vmatprep.subr.bf16.mxu0 0
    %70 = vmatpush2.bf16.msra.mxu0 0
    %71 = vmatprep.subr.bf16.mxu0 0
    %72 = vmatpush2.bf16.msra.mxu0 0
    %73 = vmatprep.subr.bf16.mxu0 0
    %74 = vmatpush2.bf16.msra.mxu0 0
    %75 = vmatprep.subr.bf16.mxu0 0
    %76 = vmatpush2.bf16.msra.mxu0 0
    %77 = vmatprep.subr.bf16.mxu0 0
    %78 = vmatpush2.bf16.msra.mxu0 0
    %79 = vmatprep.subr.bf16.mxu0 0
    %80 = vmatpush2.bf16.msra.mxu0 0
    %81 = vmatprep.mubr.bf16.mxu0 0
    %82 = vmatmul.mubr.bf16.gmra.mxu0 %v40
    %v83 = vpop.f32.mrf.mxu0
    %v84 = vadd.f32 %v26, %v83
    %v85 = vpop.f32.mrf.mxu0
    %v86 = vpop.f32.mrf.mxu0
    %v87 = vadd.f32 %v26, %v86
    %v88 = vpop.f32.mrf.mxu0
    %89 = vmatprep.mubr.bf16.mxu0 0
    %90 = vmatmul.mubr.bf16.gmra.mxu0 %v43
    %v91 = vpop.f32.mrf.mxu0
    %v92 = vadd.f32 %v26, %v91
    %v93 = vpop.f32.mrf.mxu0
    %v94 = vpop.f32.mrf.mxu0
    %v95 = vadd.f32 %v26, %v94
    %v96 = vpop.f32.mrf.mxu0
    %97 = vdwg.mxu0
    %vm98 = vcmask 392192
    %99 = vst.msk [vmem:[#allocation2] sm:$0xff] %vm98, %v84
    %100 = vst.msk [vmem:[#allocation2 + $0x8] sm:$0xff] %vm98, %v87
    %101 = vst.msk [vmem:[#allocation2 + $0x10] sm:$0xff] %vm98, %v92
    %102 = vst.msk [vmem:[#allocation2 + $0x18] sm:$0xff] %vm98, %v95
    // Predicated region
    $region14: #{mae_forward.35} parent=1 // pred_check
      _
    $region15: #{mae_forward.35} parent=1 // pred_check_branch
      %104 = sbr.rel (0) target = $region17
    $region16: #{mae_forward.35} parent=1 // pred_region
      %s106 = ssub.s32 512, 512
      %107 = vsyncadd [#allocation3], %s106
      %s108 = sshll.u32 [#allocation2], 4
      %s109 = int_to_ptr.vmem [resolvable:$true] %s108
      %114 = dma.vmem_to_hbm [thread:$0]  %s109, 512, %s3, [#allocation3], 128, 128, 8
    $region17: #{mae_forward.35} parent=1 // pred_fallthru
      _
    // Predicated region
    $region18: #{mae_forward.35} parent=1 // pred_check
      _
    $region19: #{mae_forward.35} parent=1 // pred_check_branch
      %116 = sbr.rel (0) target = $region21
    $region20: #{mae_forward.35} parent=1 // pred_region
      %117 = dma.done [#allocation3], 512
    $region21: #{mae_forward.35} parent=1 // pred_fallthru
      _
    %118 = vsyncpa [#allocation3], 1

// kernel: mae_forward.33
$region0: #{mae_forward.33}
  #allocation0 [shape = 'u32[]', space=smem, size = 0x4, offset = 0x4, fixed_abs, tag = 'smem constant byte address 0x4 - core index']
  #allocation1 [shape = 'u32[144,128]{1,0:T(1,128)}', space=vmem, size = 0x12000, scoped, tag = 'internal scratch']
  #allocation2 [shape = 'bf16[32,8]{1,0:T(8,128)(2,1)}', space=vmem, size = 0x2000, scoped, tag = 'scratch operand']
  %s0 = inlined_call_operand.vmem [shape: bf16[32,8], index: 0, kind: input, shape index: {}]
  %s1 = inlined_call_operand.vmem [shape: bf16[8,32], index: 1, kind: input, shape index: {}]
  %s2 = inlined_call_operand.vmem [shape: f32[1,32], index: 2, kind: input, shape index: {}]
  %s3 = inlined_call_operand.vmem [shape: f32[1,8], index: 3, kind: input, shape index: {}]
  %s4 = inlined_call_operand.vmem [shape: f32[1,8], index: 4, kind: input, shape index: {}]
  %s5 = inlined_call_operand.vmem [shape: bf16[32,32], index: 5, kind: output, shape index: {}]
  %s6 = sld [smem:[#allocation0]]
  $region34: #{mae_forward.33} parent=0
    _
  %s8 = ssub.s32 1, %s6
  %s9 = scalar_select 0, %s8, %s6
  // Predicated region
  $region2: #{mae_forward.33} parent=0 // pred_check
    _
  $region3: #{mae_forward.33} parent=0 // pred_check_branch
    %11 = sbr.rel (0) target = $region5
  $region4: #{mae_forward.33} parent=0 // pred_region
    _
  $region5: #{mae_forward.33} parent=0 // pred_fallthru
    _
  // Predicated region
  $region6: #{mae_forward.33} parent=0 // pred_check
    _
  $region7: #{mae_forward.33} parent=0 // pred_check_branch
    %13 = sbr.rel (0) target = $region9
  $region8: #{mae_forward.33} parent=0 // pred_region
    _
  $region9: #{mae_forward.33} parent=0 // pred_fallthru
    _
  // Predicated region
  $region10: #{mae_forward.33} parent=0 // pred_check
    _
  $region11: #{mae_forward.33} parent=0 // pred_check_branch
    %15 = sbr.rel (0) target = $region13
  $region12: #{mae_forward.33} parent=0 // pred_region
    _
  $region13: #{mae_forward.33} parent=0 // pred_fallthru
    _
  // Predicated region
  $region14: #{mae_forward.33} parent=0 // pred_check
    _
  $region15: #{mae_forward.33} parent=0 // pred_check_branch
    %17 = sbr.rel (0) target = $region17
  $region16: #{mae_forward.33} parent=0 // pred_region
    _
  $region17: #{mae_forward.33} parent=0 // pred_fallthru
    _
  // Predicated region
  $region18: #{mae_forward.33} parent=0 // pred_check
    _
  $region19: #{mae_forward.33} parent=0 // pred_check_branch
    %19 = sbr.rel (0) target = $region21
  $region20: #{mae_forward.33} parent=0 // pred_region
    _
  $region21: #{mae_forward.33} parent=0 // pred_fallthru
    _
  %p21 = scmp.eq.s32.totalorder 0, 0
  // Predicated region
  $region22: #{mae_forward.33} parent=0 // pred_check
    %p22 = pneg %p21
  $region23: #{mae_forward.33} parent=0 // pred_check_branch
    %24 = sbr.rel (%p22) target = $region25
  $region24: #{mae_forward.33} parent=0 // pred_region
    %v25 = vld [vmem:[%s0] sm:$0xf]
    %v26 = vld [vmem:[%s0 + $0x4] sm:$0xf]
    %v27 = vld [vmem:[%s0 + $0x8] sm:$0xf]
    %v28 = vld [vmem:[%s0 + $0xc] sm:$0xf]
    %v29 = vunpack.c.l.bf16 %v25
    %v30 = vunpack.c.l.bf16 %v26
    %v31 = vunpack.c.l.bf16 %v27
    %v32 = vunpack.c.l.bf16 %v28
    %vm33 = vcmask 64512
    %v34 = vsel %vm33, %v29, 0.0
    %35 = vadd.xlane.f32.xlu0 %v34
    %v36 = vpop.xlane.xlu0 %35
    %v37 = vsel %vm33, %v30, 0.0
    %38 = vadd.xlane.f32.xlu0 %v37
    %v39 = vpop.xlane.xlu0 %38
    %v40 = vsel %vm33, %v31, 0.0
    %41 = vadd.xlane.f32.xlu0 %v40
    %v42 = vpop.xlane.xlu0 %41
    %v43 = vsel %vm33, %v32, 0.0
    %44 = vadd.xlane.f32.xlu0 %v43
    %v45 = vpop.xlane.xlu0 %44
    %v46 = vrcp.pop 8.0
    %v47 = vmul.f32 %v36, %v46
    %v48 = vmul.f32 %v39, %v46
    %v49 = vmul.f32 %v42, %v46
    %v50 = vmul.f32 %v45, %v46
    %v51 = vsub.f32 %v29, %v47
    %v52 = vsub.f32 %v30, %v48
    %v53 = vsub.f32 %v31, %v49
    %v54 = vsub.f32 %v32, %v50
    %v55 = vmul.f32 %v51, %v51
    %v56 = vmul.f32 %v52, %v52
    %v57 = vmul.f32 %v53, %v53
    %v58 = vmul.f32 %v54, %v54
    %v59 = vsel %vm33, %v55, 0.0
    %60 = vadd.xlane.f32.xlu0 %v59
    %v61 = vpop.xlane.xlu0 %60
    %v62 = vsel %vm33, %v56, 0.0
    %63 = vadd.xlane.f32.xlu0 %v62
    %v64 = vpop.xlane.xlu0 %63
    %v65 = vsel %vm33, %v57, 0.0
    %66 = vadd.xlane.f32.xlu0 %v65
    %v67 = vpop.xlane.xlu0 %66
    %v68 = vsel %vm33, %v58, 0.0
    %69 = vadd.xlane.f32.xlu0 %v68
    %v70 = vpop.xlane.xlu0 %69
    %v71 = vmul.f32 %v61, %v46
    %v72 = vmul.f32 %v64, %v46
    %v73 = vmul.f32 %v67, %v46
    %v74 = vmul.f32 %v70, %v46
    %v75 = vadd.f32 %v71, 1e-06
    %v76 = vadd.f32 %v72, 1e-06
    %v77 = vadd.f32 %v73, 1e-06
    %v78 = vadd.f32 %v74, 1e-06
    %v79 = vrsqrt.pop %v75
    %v80 = vrsqrt.pop %v76
    %v81 = vrsqrt.pop %v77
    %v82 = vrsqrt.pop %v78
    %v83 = vmul.f32 %v51, %v79
    %v84 = vmul.f32 %v52, %v80
    %v85 = vmul.f32 %v53, %v81
    %v86 = vmul.f32 %v54, %v82
    %v87 = vld [vmem:[%s3] sm:$0x1]
    %v89 = vlaneseq
    %v90 = vshrl.u32 %v89, 7
    %v91 = vsub.s32 0, %v90
    %v92 = vrot.slane %v87, %v91
    %v94 = vmul.f32 %v83, %v92
    %v95 = vmul.f32 %v84, %v92
    %v96 = vmul.f32 %v85, %v92
    %v97 = vmul.f32 %v86, %v92
    %v98 = vld [vmem:[%s4] sm:$0x1]
    %v100 = vlaneseq
    %v101 = vshrl.u32 %v100, 7
    %v102 = vsub.s32 0, %v101
    %v103 = vrot.slane %v98, %v102
    %v105 = vadd.f32 %v94, %v103
    %v106 = vadd.f32 %v95, %v103
    %v107 = vadd.f32 %v96, %v103
    %v108 = vadd.f32 %v97, %v103
    %v109 = vpack.c.bf16 %v106, %v105
    %v110 = vpack.c.bf16 %v108, %v107
    %v113 = vunpack.c.l.b16 %v109
    %v114 = vunpack.c.h.b16 %v109
    %v115 = vunpack.c.l.b16 %v110
    %v116 = vunpack.c.h.b16 %v110
    %v117 = vpack.c.b16 %v113, %v113
    %v118 = vpack.c.b16 %v114, %v114
    %v119 = vpack.c.b16 %v115, %v115
    %v120 = vpack.c.b16 %v116, %v116
    %vm125 = vcmask 60416
    %126 = vst.msk [vmem:[#allocation2] sm:$0xf] %vm125, %v117
    %127 = vst.msk [vmem:[#allocation2 + $0x4] sm:$0xf] %vm125, %v118
    %128 = vst.msk [vmem:[#allocation2 + $0x8] sm:$0xf] %vm125, %v119
    %129 = vst.msk [vmem:[#allocation2 + $0xc] sm:$0xf] %vm125, %v120
  $region25: #{mae_forward.33} parent=0 // pred_fallthru
    _
  %v130 = vld [vmem:[#allocation2] sm:$0xf]
  %v131 = vld [vmem:[#allocation2 + $0x4] sm:$0xf]
  %v132 = vld [vmem:[#allocation2 + $0x8] sm:$0xf]
  %v133 = vld [vmem:[#allocation2 + $0xc] sm:$0xf]
  %v134 = vld [vmem:[%s1] sm:$0xf]
  %v135 = vld [vmem:[%s2] sm:$0x1]
  %v137 = vlaneseq
  %v138 = vshrl.u32 %v137, 7
  %v139 = vsub.s32 0, %v138
  %v140 = vrot.slane %v135, %v139
  %v146 = vunpack.c.l.b16 %v130
  %v147 = vunpack.c.l.b16 %v131
  %v148 = vunpack.c.l.b16 %v132
  %v149 = vunpack.c.l.b16 %v133
  %v150 = vpack.c.b16 %v147, %v146
  %v151 = vpack.c.b16 %v149, %v148
  %vm152 = vcmask 64512
  %v154 = vsel %vm152, %v150, 0
  %v157 = vsel %vm152, %v151, 0
  %vm159 = vcmask 1043456
  %v161 = vsel %vm159, %v134, 0
  %163 = vmatprep.subr.bf16.mxu0 0
  %164 = vmatpush1.bf16.msra.mxu0 0
  %165 = vmatprep.subr.bf16.mxu0 0
  %166 = vmatpush1.bf16.msra.mxu0 0
  %167 = vmatprep.subr.bf16.mxu0 0
  %168 = vmatpush1.bf16.msra.mxu0 0
  %169 = vmatprep.subr.bf16.mxu0 0
  %170 = vmatpush1.bf16.msra.mxu0 0
  %171 = vmatprep.subr.bf16.mxu0 0
  %172 = vmatpush1.bf16.msra.mxu0 0
  %173 = vmatprep.subr.bf16.mxu0 0
  %174 = vmatpush1.bf16.msra.mxu0 0
  %175 = vmatprep.subr.bf16.mxu0 0
  %176 = vmatpush1.bf16.msra.mxu0 0
  %177 = vmatprep.subr.bf16.mxu0 0
  %178 = vmatpush1.bf16.msra.mxu0 %v161
  %179 = vmatprep.subr.bf16.mxu0 0
  %180 = vmatpush2.bf16.msra.mxu0 0
  %181 = vmatprep.subr.bf16.mxu0 0
  %182 = vmatpush2.bf16.msra.mxu0 0
  %183 = vmatprep.subr.bf16.mxu0 0
  %184 = vmatpush2.bf16.msra.mxu0 0
  %185 = vmatprep.subr.bf16.mxu0 0
  %186 = vmatpush2.bf16.msra.mxu0 0
  %187 = vmatprep.subr.bf16.mxu0 0
  %188 = vmatpush2.bf16.msra.mxu0 0
  %189 = vmatprep.subr.bf16.mxu0 0
  %190 = vmatpush2.bf16.msra.mxu0 0
  %191 = vmatprep.subr.bf16.mxu0 0
  %192 = vmatpush2.bf16.msra.mxu0 0
  %193 = vmatprep.subr.bf16.mxu0 0
  %194 = vmatpush2.bf16.msra.mxu0 0
  %195 = vmatprep.mubr.bf16.mxu0 0
  %196 = vmatmul.mubr.bf16.gmra.mxu0 %v154
  %v197 = vpop.f32.mrf.mxu0
  %v198 = vadd.f32 %v140, %v197
  %v199 = vpop.f32.mrf.mxu0
  %v200 = vpop.f32.mrf.mxu0
  %v201 = vadd.f32 %v140, %v200
  %v202 = vpop.f32.mrf.mxu0
  %203 = vmatprep.mubr.bf16.mxu0 0
  %204 = vmatmul.mubr.bf16.gmra.mxu0 %v157
  %v205 = vpop.f32.mrf.mxu0
  %v206 = vadd.f32 %v140, %v205
  %v207 = vpop.f32.mrf.mxu0
  %v208 = vpop.f32.mrf.mxu0
  %v209 = vadd.f32 %v140, %v208
  %v210 = vpop.f32.mrf.mxu0
  %211 = vdwg.mxu0
  %v212 = vmul.f32 %v198, 0.70710677
  %v213 = vmul.f32 %v201, 0.70710677
  %v214 = vmul.f32 %v206, 0.70710677
  %v215 = vmul.f32 %v209, 0.70710677
  %v216 = vand.u32 2147483647, %v212
  %v217 = vand.u32 2147483647, %v213
  %v218 = vand.u32 2147483647, %v214
  %v219 = vand.u32 2147483647, %v215
  %v220 = vmul.f32 %v216, 0.3275911
  %v221 = vmul.f32 %v217, 0.3275911
  %v222 = vmul.f32 %v218, 0.3275911
  %v223 = vmul.f32 %v219, 0.3275911
  %v224 = vadd.f32 %v220, 1.0
  %v225 = vadd.f32 %v221, 1.0
  %v226 = vadd.f32 %v222, 1.0
  %v227 = vadd.f32 %v223, 1.0
  %v228 = vrcp.pop %v224
  %v229 = vmul.f32 1.0, %v228
  %v230 = vrcp.pop %v225
  %v231 = vmul.f32 1.0, %v230
  %v232 = vrcp.pop %v226
  %v233 = vmul.f32 1.0, %v232
  %v234 = vrcp.pop %v227
  %v235 = vmul.f32 1.0, %v234
  %v236 = vmul.f32 %v229, 1.0614054
  %v237 = vmul.f32 %v231, 1.0614054
  %v238 = vmul.f32 %v233, 1.0614054
  %v239 = vmul.f32 %v235, 1.0614054
  %v240 = vsub.f32 %v236, 1.4531521
  %v241 = vsub.f32 %v237, 1.4531521
  %v242 = vsub.f32 %v238, 1.4531521
  %v243 = vsub.f32 %v239, 1.4531521
  %v244 = vmul.f32 %v240, %v229
  %v245 = vmul.f32 %v241, %v231
  %v246 = vmul.f32 %v242, %v233
  %v247 = vmul.f32 %v243, %v235
  %v248 = vadd.f32 %v244, 1.4214138
  %v249 = vadd.f32 %v245, 1.4214138
  %v250 = vadd.f32 %v246, 1.4214138
  %v251 = vadd.f32 %v247, 1.4214138
  %v252 = vmul.f32 %v248, %v229
  %v253 = vmul.f32 %v249, %v231
  %v254 = vmul.f32 %v250, %v233
  %v255 = vmul.f32 %v251, %v235
  %v256 = vsub.f32 %v252, 0.28449672
  %v257 = vsub.f32 %v253, 0.28449672
  %v258 = vsub.f32 %v254, 0.28449672
  %v259 = vsub.f32 %v255, 0.28449672
  %v260 = vmul.f32 %v256, %v229
  %v261 = vmul.f32 %v257, %v231
  %v262 = vmul.f32 %v258, %v233
  %v263 = vmul.f32 %v259, %v235
  %v264 = vadd.f32 %v260, 0.2548296
  %v265 = vadd.f32 %v261, 0.2548296
  %v266 = vadd.f32 %v262, 0.2548296
  %v267 = vadd.f32 %v263, 0.2548296
  %v268 = vmul.f32 %v264, %v229
  %v269 = vmul.f32 %v265, %v231
  %v270 = vmul.f32 %v266, %v233
  %v271 = vmul.f32 %v267, %v235
  %v272 = vsub.f32 0.0, %v216
  %v273 = vsub.f32 0.0, %v217
  %v274 = vsub.f32 0.0, %v218
  %v275 = vsub.f32 0.0, %v219
  %v276 = vmul.f32 %v272, %v216
  %v277 = vmul.f32 %v273, %v217
  %v278 = vmul.f32 %v274, %v218
  %v279 = vmul.f32 %v275, %v219
  %v280 = vmul.f32 %v276, 1.442695
  %v281 = vpow.pop %v280
  %v282 = vmul.f32 %v277, 1.442695
  %v283 = vpow.pop %v282
  %v284 = vmul.f32 %v278, 1.442695
  %v285 = vpow.pop %v284
  %v286 = vmul.f32 %v279, 1.442695
  %v287 = vpow.pop %v286
  %v288 = vmul.f32 %v268, %v281
  %v289 = vmul.f32 %v269, %v283
  %v290 = vmul.f32 %v270, %v285
  %v291 = vmul.f32 %v271, %v287
  %v292 = vsub.f32 1.0, %v288
  %v293 = vsub.f32 1.0, %v289
  %v294 = vsub.f32 1.0, %v290
  %v295 = vsub.f32 1.0, %v291
  %vm296 = vcmp.ge.f32.partialorder %v212, 0.0
  %vm297 = vcmp.ge.f32.partialorder %v213, 0.0
  %vm298 = vcmp.ge.f32.partialorder %v214, 0.0
  %vm299 = vcmp.ge.f32.partialorder %v215, 0.0
  %v300 = vsub.f32 0.0, %v292
  %v301 = vsub.f32 0.0, %v293
  %v302 = vsub.f32 0.0, %v294
  %v303 = vsub.f32 0.0, %v295
  %v304 = vsel %vm296, %v292, %v300
  %v305 = vsel %vm297, %v293, %v301
  %v306 = vsel %vm298, %v294, %v302
  %v307 = vsel %vm299, %v295, %v303
  %v308 = vmul.f32 %v198, 0.5
  %v309 = vmul.f32 %v201, 0.5
  %v310 = vmul.f32 %v206, 0.5
  %v311 = vmul.f32 %v209, 0.5
  %v312 = vadd.f32 %v304, 1.0
  %v313 = vadd.f32 %v305, 1.0
  %v314 = vadd.f32 %v306, 1.0
  %v315 = vadd.f32 %v307, 1.0
  %v316 = vmul.f32 %v308, %v312
  %v317 = vmul.f32 %v309, %v313
  %v318 = vmul.f32 %v310, %v314
  %v319 = vmul.f32 %v311, %v315
  %v320 = vpack.c.bf16 %v317, %v316
  %v321 = vpack.c.bf16 %v319, %v318
  %v324 = vunpack.c.l.b16 %v320
  %v325 = vunpack.c.h.b16 %v320
  %v326 = vunpack.c.l.b16 %v321
  %v327 = vunpack.c.h.b16 %v321
  %v328 = vpack.c.b16 %v324, %v324
  %v329 = vpack.c.b16 %v325, %v325
  %v330 = vpack.c.b16 %v326, %v326
  %v331 = vpack.c.b16 %v327, %v327
  %vm336 = vcmask 257024
  %337 = vst.msk [vmem:[%s5] sm:$0xf] %vm336, %v328
  %338 = vst.msk [vmem:[%s5 + $0x4] sm:$0xf] %vm336, %v329
  %339 = vst.msk [vmem:[%s5 + $0x8] sm:$0xf] %vm336, %v330
  %340 = vst.msk [vmem:[%s5 + $0xc] sm:$0xf] %vm336, %v331
  // Predicated region
  $region26: #{mae_forward.33} parent=0 // pred_check
    _
  $region27: #{mae_forward.33} parent=0 // pred_check_branch
    %342 = sbr.rel (0) target = $region29
  $region28: #{mae_forward.33} parent=0 // pred_region
    _
  $region29: #{mae_forward.33} parent=0 // pred_fallthru
    _
  // Predicated region
  $region30: #{mae_forward.33} parent=0 // pred_check
    _
  $region31: #{mae_forward.33} parent=0 // pred_check_branch
    %344 = sbr.rel (0) target = $region33
  $region32: #{mae_forward.33} parent=0 // pred_region
    _
  $region33: #{mae_forward.33} parent=0 // pred_fallthru
    _

</llo_original>
